<compile_context>
chip_gen: v7x
topology: tpu7x:2x2x1
jax: 0.10.0
libtpu: 0.0.40
codegen_flags: <defaults>
</compile_context>

<pallas_src>
import math
import functools

import jax
import jax.numpy as jnp
from jax import lax
from jax.experimental import pallas as pl
from jax.experimental.pallas import tpu as pltpu

# Set to jnp.bfloat16 on v6e/v7x for higher MXU throughput (f32 accumulation kept);
# default f32 to match the PyTorch reference numerics exactly.
MXU_INPUT_DTYPE = jnp.float32

_VMEM_LIMIT = 32 * 1024 * 1024  # safe on v5e/v6e/v7x, ample for these tile sizes


# ------------------------------ small helpers -------------------------------

def _rup(x, m):
    return (x + m - 1) // m * m


def _pick_tile(dim, cands):
    for c in cands:
        if dim % c == 0:
            return c
    return dim


def _pad1(x, n):
    return jnp.pad(x, (0, n - x.shape[0])) if n > x.shape[0] else x


def _pad2(x, r, c):
    pr, pc = r - x.shape[0], c - x.shape[1]
    return jnp.pad(x, ((0, pr), (0, pc))) if (pr or pc) else x


# ------------------------------- Pallas kernels ------------------------------

def _matmul_kernel(x_ref, w_ref, b_ref, *rest,
                   activation, fuse_ln, d_true, n_pad):
    """Tiled y = x @ w + b with optional fused GELU or fused (residual + LayerNorm)."""
    if fuse_ln:
        res_ref, g_ref, beta_ref, o_ref, acc_ref = rest
    else:
        o_ref, acc_ref = rest

    @pl.when(pl.program_id(2) == 0)
    def _():
        # Fold the bias into the accumulator init (epilogue only has act/LN left).
        acc_ref[...] = jnp.broadcast_to(b_ref[...], acc_ref.shape).astype(jnp.float32)

    acc_ref[...] += jnp.dot(
        x_ref[...].astype(MXU_INPUT_DTYPE),
        w_ref[...].astype(MXU_INPUT_DTYPE),
        preferred_element_type=jnp.float32)

    @pl.when(pl.program_id(2) == pl.num_programs(2) - 1)
    def _():
        y = acc_ref[...]
        if activation == "gelu":
            # exact (erf) GELU, matching torch.nn.functional.gelu default
            y = 0.5 * y * (1.0 + lax.erf(y * (1.0 / math.sqrt(2.0))))
        if fuse_ln:
            y = y + res_ref[...]
            # Padded columns of y are exactly 0, so sums over the padded width equal
            # sums over the true d_model; correct the (x-mu)^2 sum for the pad.
            inv_d = 1.0 / d_true
            mu = jnp.sum(y, axis=-1, keepdims=True) * inv_d
            c = y - mu
            var = (jnp.sum(c * c, axis=-1, keepdims=True)
                   - float(n_pad) * mu * mu) * inv_d
            y = c * lax.rsqrt(var + 1e-5) * g_ref[...] + beta_ref[...]
        o_ref[...] = y


def _layernorm_kernel(x_ref, g_ref, b_ref, o_ref, *, d_true, n_pad):
    x = x_ref[...]
    inv_d = 1.0 / d_true
    mu = jnp.sum(x, axis=-1, keepdims=True) * inv_d
    c = x - mu
    var = (jnp.sum(c * c, axis=-1, keepdims=True) - float(n_pad) * mu * mu) * inv_d
    o_ref[...] = c * lax.rsqrt(var + 1e-5) * g_ref[...] + b_ref[...]


def _attn_kernel(q_ref, k_ref, v_ref, o_ref, *, scale):
    """Scaled-dot-product attention for a block of heads; softmax via EUP reciprocal."""
    q = q_ref[...]          # (hb, Lq, Dh_p)
    k = k_ref[...]          # (hb, Lk, Dh_p)
    v = v_ref[...]          # (hb, Lk, Dh_p)
    s = jnp.einsum("hqd,hkd->hqk", q, k,
                   preferred_element_type=jnp.float32) * scale
    s = s - jnp.max(s, axis=-1, keepdims=True)
    p = jnp.exp(s)
    l = jnp.sum(p, axis=-1, keepdims=True)
    o = jnp.einsum("hqk,hkd->hqd", p, v, preferred_element_type=jnp.float32)
    o_ref[...] = o * pl.reciprocal(l, approx=True)


# ------------------------------ kernel wrappers ------------------------------

def matmul_pallas(x, w, b, *, activation=None, residual=None,
                  ln_g=None, ln_b=None, d_true=None):
    """x: (M, K), w: (K, N) in compute layout (pre-transposed, 128-padded K and N)."""
    M, K = x.shape
    Kw, N = w.shape
    assert K == Kw, (K, Kw)
    fuse_ln = ln_g is not None

    # rows: pad to 8 (small) or 128 (large) and tile
    if M > 128:
        Mp = _rup(M, 128)
        tm = 256 if Mp % 256 == 0 else 128
    else:
        Mp = _rup(M, 8)
        tm = Mp
    if Mp > M:
        x = jnp.pad(x, ((0, Mp - M), (0, 0)))
        if residual is not None:
            residual = jnp.pad(residual, ((0, Mp - M), (0, 0)))

    tn = N if fuse_ln else _pick_tile(N, (512, 256, 128))   # LN needs the whole row
    tk = _pick_tile(K, (512, 256, 128))

    kernel = functools.partial(
        _matmul_kernel, activation=activation, fuse_ln=fuse_ln,
        d_true=(d_true if d_true is not None else 1),
        n_pad=(N - d_true if fuse_ln else 0))

    in_specs = [
        pl.BlockSpec((tm, tk), lambda i, j, k: (i, k)),
        pl.BlockSpec((tk, tn), lambda i, j, k: (k, j)),
        pl.BlockSpec((1, tn), lambda i, j, k: (0, j)),
    ]
    args = [x, w, b.reshape(1, N)]
    if fuse_ln:
        in_specs += [
            pl.BlockSpec((tm, N), lambda i, j, k: (i, 0)),
            pl.BlockSpec((1, N), lambda i, j, k: (0, 0)),
            pl.BlockSpec((1, N), lambda i, j, k: (0, 0)),
        ]
        args += [residual, ln_g.reshape(1, N), ln_b.reshape(1, N)]

    out = pl.pallas_call(
        kernel,
        out_shape=jax.ShapeDtypeStruct((Mp, N), jnp.float32),
        grid=(Mp // tm, N // tn, K // tk),
        in_specs=in_specs,
        out_specs=pl.BlockSpec((tm, tn), lambda i, j, k: (i, j)),
        scratch_shapes=[pltpu.VMEM((tm, tn), jnp.float32)],
        compiler_params=pltpu.CompilerParams(
            dimension_semantics=("parallel", "parallel", "arbitrary"),
            vmem_limit_bytes=_VMEM_LIMIT),
    )(*args)
    return out[:M]


def layernorm_pallas(x2d, g, b, d_true):
    M, D_p = x2d.shape
    Mp = _rup(M, 8)
    if Mp > M:
        x2d = jnp.pad(x2d, ((0, Mp - M), (0, 0)))
    tm = _pick_tile(Mp, (256, 128, 64, 32, 16, 8))
    kernel = functools.partial(_layernorm_kernel, d_true=d_true, n_pad=D_p - d_true)
    out = pl.pallas_call(
        kernel,
        out_shape=jax.ShapeDtypeStruct((Mp, D_p), jnp.float32),
        grid=(Mp // tm,),
        in_specs=[
            pl.BlockSpec((tm, D_p), lambda i: (i, 0)),
            pl.BlockSpec((1, D_p), lambda i: (0, 0)),
            pl.BlockSpec((1, D_p), lambda i: (0, 0)),
        ],
        out_specs=pl.BlockSpec((tm, D_p), lambda i: (i, 0)),
        compiler_params=pltpu.CompilerParams(
            dimension_semantics=("parallel",),
            vmem_limit_bytes=_VMEM_LIMIT),
    )(x2d, g.reshape(1, D_p), b.reshape(1, D_p))
    return out[:M]


def attention_pallas(q, k, v, scale):
    """q: (BH, Lq, Dh_p), k/v: (BH, Lk, Dh_p) -> (BH, Lq, Dh_p). Heads batched per step."""
    BH, Lq, Dh_p = q.shape
    Lk = k.shape[1]
    hb = _pick_tile(BH, (8, 4, 2, 1))
    kernel = functools.partial(_attn_kernel, scale=scale)
    return pl.pallas_call(
        kernel,
        out_shape=jax.ShapeDtypeStruct((BH, Lq, Dh_p), jnp.float32),
        grid=(BH // hb,),
        in_specs=[
            pl.BlockSpec((hb, Lq, Dh_p), lambda i: (i, 0, 0)),
            pl.BlockSpec((hb, Lk, Dh_p), lambda i: (i, 0, 0)),
            pl.BlockSpec((hb, Lk, Dh_p), lambda i: (i, 0, 0)),
        ],
        out_specs=pl.BlockSpec((hb, Lq, Dh_p), lambda i: (i, 0, 0)),
        compiler_params=pltpu.CompilerParams(
            dimension_semantics=("parallel",),
            vmem_limit_bytes=_VMEM_LIMIT),
    )(q, k, v)


# --------------------------- parameter preparation ---------------------------

def init_params(key, src_vocab, tgt_vocab, d_model, nhead, n_enc, n_dec, dff):
    """Raw parameters in PyTorch layouts ((out, in) Linear weights, in_proj_weight)."""
    keys = iter(jax.random.split(key, 512))

    def w(shape):
        return 0.02 * jax.random.normal(next(keys), shape, dtype=jnp.float32)

    zeros = lambda s: jnp.zeros(s, jnp.float32)
    ones = lambda s: jnp.ones(s, jnp.float32)

    def mha_params():
        return dict(in_w=w((3 * d_model, d_model)), in_b=zeros((3 * d_model,)),
                    out_w=w((d_model, d_model)), out_b=zeros((d_model,)))

    def ln():
        return dict(g=ones((d_model,)), b=zeros((d_model,)))

    enc_layers = [dict(sa=mha_params(),
                       l1_w=w((dff, d_model)), l1_b=zeros((dff,)),
                       l2_w=w((d_model, dff)), l2_b=zeros((d_model,)),
                       n1=ln(), n2=ln()) for _ in range(n_enc)]
    dec_layers = [dict(sa=mha_params(), ca=mha_params(),
                       l1_w=w((dff, d_model)), l1_b=zeros((dff,)),
                       l2_w=w((d_model, dff)), l2_b=zeros((d_model,)),
                       n1=ln(), n2=ln(), n3=ln()) for _ in range(n_dec)]
    return dict(src_emb=w((src_vocab, d_model)), tgt_emb=w((tgt_vocab, d_model)),
                enc=enc_layers, dec=dec_layers, enc_norm=ln(), dec_norm=ln(),
                out_w=w((tgt_vocab, d_model)), out_b=zeros((tgt_vocab,)))


def make_cfg(d_model, nhead, dff, tgt_vocab):
    dh = d_model // nhead
    return dict(d_model=d_model, nhead=nhead, dh=dh,
                d_p=_rup(d_model, 128), dh_p=_rup(dh, 128),
                f_p=_rup(dff, 128), v_p=_rup(tgt_vocab, 128),
                tgt_vocab=tgt_vocab, scale=1.0 / math.sqrt(dh))


def prepare_params(params, cfg, *, nhead, dff):
    """One-time conversion: transpose to (in,out), zero-pad to lane-dense (x128) shapes,
    rearrange per-head QKV/out-proj blocks to the padded-head layout, fuse QKV weights."""
    d_model, dh = cfg["d_model"], cfg["dh"]
    D_p, Dh_p, F_p, V_p = cfg["d_p"], cfg["dh_p"], cfg["f_p"], cfg["v_p"]

    def prep_linear(w_pt, b, k_p, n_p):
        return _pad2(jnp.transpose(w_pt), k_p, n_p), _pad1(b, n_p)

    def prep_ln(ln):
        return dict(g=_pad1(ln["g"], D_p), b=_pad1(ln["b"], D_p))

    def prep_mha(p, cross):
        D = d_model

        def part(w_part, b_part):
            wp = w_part.reshape(nhead, dh, D)
            wp = jnp.pad(wp, ((0, 0), (0, Dh_p - dh), (0, D_p - D)))
            wp = jnp.transpose(wp, (2, 0, 1)).reshape(D_p, nhead * Dh_p)
            bp = jnp.pad(b_part.reshape(nhead, dh),
                         ((0, 0), (0, Dh_p - dh))).reshape(nhead * Dh_p)
            return wp, bp

        wq, bq = part(p["in_w"][:D], p["in_b"][:D])
        wk, bk = part(p["in_w"][D:2 * D], p["in_b"][D:2 * D])
        wv, bv = part(p["in_w"][2 * D:], p["in_b"][2 * D:])

        wo = p["out_w"].reshape(D, nhead, dh)
        wo = jnp.pad(wo, ((0, 0), (0, 0), (0, Dh_p - dh))).reshape(D, nhead * Dh_p)
        wo = jnp.pad(jnp.transpose(wo), ((0, 0), (0, D_p - D)))   # (H*Dh_p, D_p)
        bo = _pad1(p["out_b"], D_p)

        out = dict(w_out=wo, b_out=bo)
        if cross:
            out.update(w_q=wq, b_q=bq,
                       w_kv=jnp.concatenate([wk, wv], axis=1),
                       b_kv=jnp.concatenate([bk, bv], axis=0))
        else:
            out.update(w_qkv=jnp.concatenate([wq, wk, wv], axis=1),
                       b_qkv=jnp.concatenate([bq, bk, bv], axis=0))
        return out

    enc = []
    for lp in params["enc"]:
        w1, b1 = prep_linear(lp["l1_w"], lp["l1_b"], D_p, F_p)
        w2, b2 = prep_linear(lp["l2_w"], lp["l2_b"], F_p, D_p)
        enc.append(dict(sa=prep_mha(lp["sa"], False), w1=w1, b1=b1, w2=w2, b2=b2,
                        n1=prep_ln(lp["n1"]), n2=prep_ln(lp["n2"])))
    dec = []
    for lp in params["dec"]:
        w1, b1 = prep_linear(lp["l1_w"], lp["l1_b"], D_p, F_p)
        w2, b2 = prep_linear(lp["l2_w"], lp["l2_b"], F_p, D_p)
        dec.append(dict(sa=prep_mha(lp["sa"], False), ca=prep_mha(lp["ca"], True),
                        w1=w1, b1=b1, w2=w2, b2=b2,
                        n1=prep_ln(lp["n1"]), n2=prep_ln(lp["n2"]), n3=prep_ln(lp["n3"])))

    out_w, out_b = prep_linear(params["out_w"], params["out_b"], D_p, V_p)
    return dict(
        src_emb=jnp.pad(params["src_emb"], ((0, 0), (0, D_p - d_model))),
        tgt_emb=jnp.pad(params["tgt_emb"], ((0, 0), (0, D_p - d_model))),
        enc=enc, dec=dec,
        enc_norm=prep_ln(params["enc_norm"]), dec_norm=prep_ln(params["dec_norm"]),
        out_w=out_w, out_b=out_b)


def make_pe(max_len, d_model, d_p):
    position = jnp.arange(max_len, dtype=jnp.float32)[:, None]
    div_term = jnp.exp(jnp.arange(0, d_model, 2, dtype=jnp.float32)
                       * (-math.log(10000.0) / d_model))
    ang = position * div_term
    pe = jnp.zeros((max_len, 1, d_model), jnp.float32)
    pe = pe.at[:, 0, 0::2].set(jnp.sin(ang))
    pe = pe.at[:, 0, 1::2].set(jnp.cos(ang))
    return jnp.pad(pe, ((0, 0), (0, 0), (0, d_p - d_model)))


# ------------------------------- model blocks --------------------------------

def _split_heads(x, B, L, H, Dh_p):
    return x.reshape(B, L, H, Dh_p).transpose(0, 2, 1, 3).reshape(B * H, L, Dh_p)


def _merge_heads(a, B, L, H, Dh_p):
    return a.reshape(B, H, L, Dh_p).transpose(0, 2, 1, 3).reshape(B * L, H * Dh_p)


def _self_attention_block(x, mp, ln, cfg):
    B, L, D_p = x.shape
    H, Dh_p = cfg["nhead"], cfg["dh_p"]
    x2 = x.reshape(B * L, D_p)
    qkv = matmul_pallas(x2, mp["w_qkv"], mp["b_qkv"])            # fused QKV
    qkv = qkv.reshape(B, L, 3, H, Dh_p)
    q = qkv[:, :, 0].transpose(0, 2, 1, 3).reshape(B * H, L, Dh_p)
    k = qkv[:, :, 1].transpose(0, 2, 1, 3).reshape(B * H, L, Dh_p)
    v = qkv[:, :, 2].transpose(0, 2, 1, 3).reshape(B * H, L, Dh_p)
    a = attention_pallas(q, k, v, cfg["scale"])
    a = _merge_heads(a, B, L, H, Dh_p)
    out = matmul_pallas(a, mp["w_out"], mp["b_out"],             # out-proj + residual + LN
                        residual=x2, ln_g=ln["g"], ln_b=ln["b"], d_true=cfg["d_model"])
    return out.reshape(B, L, D_p)


def _cross_attention_block(y, memory, mp, ln, cfg):
    B, Lq, D_p = y.shape
    Lk = memory.shape[1]
    H, Dh_p = cfg["nhead"], cfg["dh_p"]
    y2 = y.reshape(B * Lq, D_p)
    m2 = memory.reshape(B * Lk, D_p)
    q = matmul_pallas(y2, mp["w_q"], mp["b_q"])
    kv = matmul_pallas(m2, mp["w_kv"], mp["b_kv"])               # fused KV
    q = _split_heads(q, B, Lq, H, Dh_p)
    kv = kv.reshape(B, Lk, 2, H, Dh_p)
    k = kv[:, :, 0].transpose(0, 2, 1, 3).reshape(B * H, Lk, Dh_p)
    v = kv[:, :, 1].transpose(0, 2, 1, 3).reshape(B * H, Lk, Dh_p)
    a = attention_pallas(q, k, v, cfg["scale"])
    a = _merge_heads(a, B, Lq, H, Dh_p)
    out = matmul_pallas(a, mp["w_out"], mp["b_out"],
                        residual=y2, ln_g=ln["g"], ln_b=ln["b"], d_true=cfg["d_model"])
    return out.reshape(B, Lq, D_p)


def _ffn_block(x, lp, ln, cfg):
    B, L, D_p = x.shape
    x2 = x.reshape(B * L, D_p)
    h = matmul_pallas(x2, lp["w1"], lp["b1"], activation="gelu")     # bias+GELU fused
    out = matmul_pallas(h, lp["w2"], lp["b2"],                       # bias+residual+LN fused
                        residual=x2, ln_g=ln["g"], ln_b=ln["b"], d_true=cfg["d_model"])
    return out.reshape(B, L, D_p)


def translation_transformer_forward(pp, src_ids, tgt_ids, *, cfg, pe):
    D_p = cfg["d_p"]
    emb_scale = math.sqrt(cfg["d_model"])
    src = jnp.take(pp["src_emb"], src_ids, axis=0) * emb_scale   # (B, Ls, D_p)
    tgt = jnp.take(pp["tgt_emb"], tgt_ids, axis=0) * emb_scale   # (B, Lt, D_p)

    # PositionalEncoding: x + pe[:x.size(0)] (size(0) == batch with batch_first,
    # faithfully reproducing the reference code); dropout is identity at inference.
    src = src + pe[: src.shape[0]]
    tgt = tgt + pe[: tgt.shape[0]]
    tgt_input = tgt[:, :-1]

    # ---- encoder (post-norm, GELU FFN) + final norm ----
    x = src
    for lp in pp["enc"]:
        x = _self_attention_block(x, lp["sa"], lp["n1"], cfg)
        x = _ffn_block(x, lp, lp["n2"], cfg)
    B, Ls, _ = x.shape
    memory = layernorm_pallas(x.reshape(B * Ls, D_p), pp["enc_norm"]["g"],
                              pp["enc_norm"]["b"], cfg["d_model"]).reshape(B, Ls, D_p)

    # ---- decoder (no masks, as in the reference forward) + final norm ----
    y = tgt_input
    for lp in pp["dec"]:
        y = _self_attention_block(y, lp["sa"], lp["n1"], cfg)
        y = _cross_attention_block(y, memory, lp["ca"], lp["n2"], cfg)
        y = _ffn_block(y, lp, lp["n3"], cfg)
    B, Lt1, _ = y.shape
    outs = layernorm_pallas(y.reshape(B * Lt1, D_p), pp["dec_norm"]["g"],
                            pp["dec_norm"]["b"], cfg["d_model"])

    logits = matmul_pallas(outs, pp["out_w"], pp["out_b"])        # (B*Lt1, V_p), tiled over N
    logits = logits[:, : cfg["tgt_vocab"]]
    return logits.reshape(B, Lt1, cfg["tgt_vocab"])


# ----------------------------------- main ------------------------------------

if __name__ == "__main__":
    src_vocab, tgt_vocab = 50, 60
    d_model, n_head, n_enc, n_dec, dff = 32, 2, 2, 2, 64
    B, Ls, Lt = 2, 8, 8

    key = jax.random.PRNGKey(0)
    kp, ksrc, ktgt = jax.random.split(key, 3)
    raw_params = init_params(kp, src_vocab, tgt_vocab, d_model, n_head, n_enc, n_dec, dff)
    src_ids = jax.random.randint(ksrc, (B, Ls), 0, src_vocab, dtype=jnp.int32)
    tgt_ids = jax.random.randint(ktgt, (B, Lt), 0, tgt_vocab, dtype=jnp.int32)

    cfg = make_cfg(d_model, n_head, dff, tgt_vocab)
    params = prepare_params(raw_params, cfg, nhead=n_head, dff=dff)   # one-time prep
    pe = make_pe(5000, d_model, cfg["d_p"])

    fwd = jax.jit(functools.partial(translation_transformer_forward, cfg=cfg, pe=pe))
    logits = fwd(params, src_ids, tgt_ids)
    jax.block_until_ready(logits)
    assert logits.shape == (B, Lt - 1, tgt_vocab), logits.shape
    assert logits.dtype == jnp.float32
    print("KERNEL_OK")
</pallas_src>

<mosaic_0001>
module attributes {stable_mosaic.version = 11 : i64} {
  func.func @_matmul_kernel(%arg0: i32, %arg1: i32, %arg2: i32, %arg3: memref<16x128xf32, #tpu.memory_space<vmem>>, %arg4: memref<128x256xf32, #tpu.memory_space<vmem>>, %arg5: memref<1x256xf32, #tpu.memory_space<vmem>>, %arg6: memref<16x256xf32, #tpu.memory_space<vmem>>, %arg7: memref<16x256xf32, #tpu.memory_space<vmem>>) attributes {dimension_semantics = [#tpu.dimension_semantics<parallel>, #tpu.dimension_semantics<parallel>, #tpu.dimension_semantics<arbitrary>], iteration_bounds = array<i64: 1, 3, 1>, scalar_prefetch = 0 : i64, scratch_operands = 1 : i64, tpu.core_type = #tpu.core_type<tc>, window_params = [{transform_indices = @transform_0, window_bounds = array<i64: 16, 128>}, {transform_indices = @transform_1, window_bounds = array<i64: 128, 256>}, {transform_indices = @transform_2, window_bounds = array<i64: 1, 256>}, {transform_indices = @transform_3, window_bounds = array<i64: 16, 256>}]} {
    %c0_i32 = arith.constant 0 : i32
    %0 = arith.cmpi eq, %arg2, %c0_i32 : i32
    %1 = arith.extui %0 : i1 to i32
    %c0_i32_0 = arith.constant 0 : i32
    %2 = arith.cmpi ne, %1, %c0_i32_0 : i32
    scf.if %2 {
      %c0_10 = arith.constant 0 : index
      %c0_11 = arith.constant 0 : index
      %12 = vector.load %arg5[%c0_10, %c0_11] : memref<1x256xf32, #tpu.memory_space<vmem>>, vector<1x256xf32>
      %13 = vector.shape_cast %12 : vector<1x256xf32> to vector<1x256xf32>
      %14 = vector.broadcast %13 : vector<1x256xf32> to vector<16x256xf32>
      %c0_12 = arith.constant 0 : index
      %c0_13 = arith.constant 0 : index
      %15 = vector.load %arg7[%c0_12, %c0_13] : memref<16x256xf32, #tpu.memory_space<vmem>>, vector<16x256xf32>
      tpu.vector_store %arg7[%c0_12, %c0_13], %14 {strides = array<i32>} : memref<16x256xf32, #tpu.memory_space<vmem>>, vector<16x256xf32>,
    } else {
    }
    %c0 = arith.constant 0 : index
    %c0_1 = arith.constant 0 : index
    %3 = vector.load %arg7[%c0, %c0_1] : memref<16x256xf32, #tpu.memory_space<vmem>>, vector<16x256xf32>
    %c0_2 = arith.constant 0 : index
    %c0_3 = arith.constant 0 : index
    %4 = vector.load %arg3[%c0_2, %c0_3] : memref<16x128xf32, #tpu.memory_space<vmem>>, vector<16x128xf32>
    %c0_4 = arith.constant 0 : index
    %c0_5 = arith.constant 0 : index
    %5 = vector.load %arg4[%c0_4, %c0_5] : memref<128x256xf32, #tpu.memory_space<vmem>>, vector<128x256xf32>
    %cst = arith.constant dense<0.000000e+00> : vector<16x256xf32>
    %6 = tpu.matmul %4, %5, %cst {dimension_numbers = #tpu.dot_dimension_numbers<[1], [0], [0], [1], [0, 0, 1, 1], [], []>} : vector<16x128xf32>, vector<128x256xf32>, vector<16x256xf32> -> vector<16x256xf32>
    %7 = arith.addf %3, %6 : vector<16x256xf32>
    %c0_6 = arith.constant 0 : index
    %c0_7 = arith.constant 0 : index
    %8 = vector.load %arg7[%c0_6, %c0_7] : memref<16x256xf32, #tpu.memory_space<vmem>>, vector<16x256xf32>
    tpu.vector_store %arg7[%c0_6, %c0_7], %7 {strides = array<i32>} : memref<16x256xf32, #tpu.memory_space<vmem>>, vector<16x256xf32>,
    %c0_i32_8 = arith.constant 0 : i32
    %9 = arith.cmpi eq, %arg2, %c0_i32_8 : i32
    %10 = arith.extui %9 : i1 to i32
    %c0_i32_9 = arith.constant 0 : i32
    %11 = arith.cmpi ne, %10, %c0_i32_9 : i32
    scf.if %11 {
      %c0_10 = arith.constant 0 : index
      %c0_11 = arith.constant 0 : index
      %12 = vector.load %arg7[%c0_10, %c0_11] : memref<16x256xf32, #tpu.memory_space<vmem>>, vector<16x256xf32>
      %c0_12 = arith.constant 0 : index
      %c0_13 = arith.constant 0 : index
      %13 = vector.load %arg6[%c0_12, %c0_13] : memref<16x256xf32, #tpu.memory_space<vmem>>, vector<16x256xf32>
      tpu.vector_store %arg6[%c0_12, %c0_13], %12 {strides = array<i32>} : memref<16x256xf32, #tpu.memory_space<vmem>>, vector<16x256xf32>,
    } else {
    }
    return
  }
  func.func @transform_0(%arg0: i32, %arg1: i32, %arg2: i32) -> (i32, i32) {
    %c0_i32 = arith.constant 0 : i32
    return %arg0, %arg2 : i32, i32
  }
  func.func @transform_1(%arg0: i32, %arg1: i32, %arg2: i32) -> (i32, i32) {
    %c0_i32 = arith.constant 0 : i32
    return %arg2, %arg1 : i32, i32
  }
  func.func @transform_2(%arg0: i32, %arg1: i32, %arg2: i32) -> (i32, i32) {
    %c0_i32 = arith.constant 0 : i32
    %c0_i32_0 = arith.constant 0 : i32
    return %c0_i32, %arg1 : i32, i32
  }
  func.func @transform_3(%arg0: i32, %arg1: i32, %arg2: i32) -> (i32, i32) {
    %c0_i32 = arith.constant 0 : i32
    return %arg0, %arg1 : i32, i32
  }
}

module attributes {stable_mosaic.version = 11 : i64} {
  func.func @_matmul_kernel(%arg0: i32, %arg1: i32, %arg2: i32, %arg3: memref<16x256xf32, #tpu.memory_space<vmem>>, %arg4: memref<256x128xf32, #tpu.memory_space<vmem>>, %arg5: memref<1x128xf32, #tpu.memory_space<vmem>>, %arg6: memref<16x128xf32, #tpu.memory_space<vmem>>, %arg7: memref<1x128xf32, #tpu.memory_space<vmem>>, %arg8: memref<1x128xf32, #tpu.memory_space<vmem>>, %arg9: memref<16x128xf32, #tpu.memory_space<vmem>>, %arg10: memref<16x128xf32, #tpu.memory_space<vmem>>) attributes {dimension_semantics = [#tpu.dimension_semantics<parallel>, #tpu.dimension_semantics<parallel>, #tpu.dimension_semantics<arbitrary>], iteration_bounds = array<i64: 1, 1, 1>, scalar_prefetch = 0 : i64, scratch_operands = 1 : i64, tpu.core_type = #tpu.core_type<tc>, window_params = [{transform_indices = @transform_0, window_bounds = array<i64: 16, 256>}, {transform_indices = @transform_1, window_bounds = array<i64: 256, 128>}, {transform_indices = @transform_2, window_bounds = array<i64: 1, 128>}, {transform_indices = @transform_3, window_bounds = array<i64: 16, 128>}, {pipeline_mode = #tpu.pipeline_mode<synchronous>, transform_indices = @transform_4, window_bounds = array<i64: 1, 128>}, {pipeline_mode = #tpu.pipeline_mode<synchronous>, transform_indices = @transform_5, window_bounds = array<i64: 1, 128>}, {transform_indices = @transform_6, window_bounds = array<i64: 16, 128>}]} {
    %c0_i32 = arith.constant 0 : i32
    %0 = arith.cmpi eq, %arg2, %c0_i32 : i32
    %1 = arith.extui %0 : i1 to i32
    %c0_i32_0 = arith.constant 0 : i32
    %2 = arith.cmpi ne, %1, %c0_i32_0 : i32
    scf.if %2 {
      %c0_10 = arith.constant 0 : index
      %c0_11 = arith.constant 0 : index
      %12 = vector.load %arg5[%c0_10, %c0_11] : memref<1x128xf32, #tpu.memory_space<vmem>>, vector<1x128xf32>
      %13 = vector.shape_cast %12 : vector<1x128xf32> to vector<1x128xf32>
      %14 = vector.broadcast %13 : vector<1x128xf32> to vector<16x128xf32>
      %c0_12 = arith.constant 0 : index
      %c0_13 = arith.constant 0 : index
      %15 = vector.load %arg10[%c0_12, %c0_13] : memref<16x128xf32, #tpu.memory_space<vmem>>, vector<16x128xf32>
      tpu.vector_store %arg10[%c0_12, %c0_13], %14 {strides = array<i32>} : memref<16x128xf32, #tpu.memory_space<vmem>>, vector<16x128xf32>,
    } else {
    }
    %c0 = arith.constant 0 : index
    %c0_1 = arith.constant 0 : index
    %3 = vector.load %arg10[%c0, %c0_1] : memref<16x128xf32, #tpu.memory_space<vmem>>, vector<16x128xf32>
    %c0_2 = arith.constant 0 : index
    %c0_3 = arith.constant 0 : index
    %4 = vector.load %arg3[%c0_2, %c0_3] : memref<16x256xf32, #tpu.memory_space<vmem>>, vector<16x256xf32>
    %c0_4 = arith.constant 0 : index
    %c0_5 = arith.constant 0 : index
    %5 = vector.load %arg4[%c0_4, %c0_5] : memref<256x128xf32, #tpu.memory_space<vmem>>, vector<256x128xf32>
    %cst = arith.constant dense<0.000000e+00> : vector<16x128xf32>
    %6 = tpu.matmul %4, %5, %cst {dimension_numbers = #tpu.dot_dimension_numbers<[1], [0], [0], [1], [0, 0, 1, 1], [], []>} : vector<16x256xf32>, vector<256x128xf32>, vector<16x128xf32> -> vector<16x128xf32>
    %7 = arith.addf %3, %6 : vector<16x128xf32>
    %c0_6 = arith.constant 0 : index
    %c0_7 = arith.constant 0 : index
    %8 = vector.load %arg10[%c0_6, %c0_7] : memref<16x128xf32, #tpu.memory_space<vmem>>, vector<16x128xf32>
    tpu.vector_store %arg10[%c0_6, %c0_7], %7 {strides = array<i32>} : memref<16x128xf32, #tpu.memory_space<vmem>>, vector<16x128xf32>,
    %c0_i32_8 = arith.constant 0 : i32
    %9 = arith.cmpi eq, %arg2, %c0_i32_8 : i32
    %10 = arith.extui %9 : i1 to i32
    %c0_i32_9 = arith.constant 0 : i32
    %11 = arith.cmpi ne, %10, %c0_i32_9 : i32
    scf.if %11 {
      %c0_10 = arith.constant 0 : index
      %c0_11 = arith.constant 0 : index
      %12 = vector.load %arg10[%c0_10, %c0_11] : memref<16x128xf32, #tpu.memory_space<vmem>>, vector<16x128xf32>
      %c0_12 = arith.constant 0 : index
      %c0_13 = arith.constant 0 : index
      %13 = vector.load %arg6[%c0_12, %c0_13] : memref<16x128xf32, #tpu.memory_space<vmem>>, vector<16x128xf32>
      %14 = arith.addf %12, %13 : vector<16x128xf32>
      %cst_14 = arith.constant dense<0.000000e+00> : vector<16xf32>
      %15 = vector.multi_reduction <add>, %14, %cst_14 [1] : vector<16x128xf32> to vector<16xf32>
      %16 = vector.shape_cast %15 : vector<16xf32> to vector<16x1xf32>
      %cst_15 = arith.constant 3.125000e-02 : f32
      %17 = vector.broadcast %cst_15 : f32 to vector<16x1xf32>
      %18 = arith.mulf %16, %17 : vector<16x1xf32>
      %19 = vector.broadcast %18 : vector<16x1xf32> to vector<16x128xf32>
      %20 = arith.subf %14, %19 : vector<16x128xf32>
      %21 = arith.mulf %20, %20 : vector<16x128xf32>
      %cst_16 = arith.constant dense<0.000000e+00> : vector<16xf32>
      %22 = vector.multi_reduction <add>, %21, %cst_16 [1] : vector<16x128xf32> to vector<16xf32>
      %23 = vector.shape_cast %22 : vector<16xf32> to vector<16x1xf32>
      %cst_17 = arith.constant 9.600000e+01 : f32
      %24 = vector.broadcast %cst_17 : f32 to vector<16x1xf32>
      %25 = arith.mulf %24, %18 : vector<16x1xf32>
      %26 = arith.mulf %25, %18 : vector<16x1xf32>
      %27 = arith.subf %23, %26 : vector<16x1xf32>
      %cst_18 = arith.constant 3.125000e-02 : f32
      %28 = vector.broadcast %cst_18 : f32 to vector<16x1xf32>
      %29 = arith.mulf %27, %28 : vector<16x1xf32>
      %cst_19 = arith.constant 9.99999974E-6 : f32
      %30 = vector.broadcast %cst_19 : f32 to vector<16x1xf32>
      %31 = arith.addf %29, %30 : vector<16x1xf32>
      %32 = math.rsqrt %31 : vector<16x1xf32>
      %33 = vector.broadcast %32 : vector<16x1xf32> to vector<16x128xf32>
      %34 = arith.mulf %20, %33 : vector<16x128xf32>
      %c0_20 = arith.constant 0 : index
      %c0_21 = arith.constant 0 : index
      %35 = vector.load %arg7[%c0_20, %c0_21] : memref<1x128xf32, #tpu.memory_space<vmem>>, vector<1x128xf32>
      %36 = vector.broadcast %35 : vector<1x128xf32> to vector<16x128xf32>
      %37 = arith.mulf %34, %36 : vector<16x128xf32>
      %c0_22 = arith.constant 0 : index
      %c0_23 = arith.constant 0 : index
      %38 = vector.load %arg8[%c0_22, %c0_23] : memref<1x128xf32, #tpu.memory_space<vmem>>, vector<1x128xf32>
      %39 = vector.broadcast %38 : vector<1x128xf32> to vector<16x128xf32>
      %40 = arith.addf %37, %39 : vector<16x128xf32>
      %c0_24 = arith.constant 0 : index
      %c0_25 = arith.constant 0 : index
      %41 = vector.load %arg9[%c0_24, %c0_25] : memref<16x128xf32, #tpu.memory_space<vmem>>, vector<16x128xf32>
      tpu.vector_store %arg9[%c0_24, %c0_25], %40 {strides = array<i32>} : memref<16x128xf32, #tpu.memory_space<vmem>>, vector<16x128xf32>,
    } else {
    }
    return
  }
  func.func @transform_0(%arg0: i32, %arg1: i32, %arg2: i32) -> (i32, i32) {
    %c0_i32 = arith.constant 0 : i32
    return %arg0, %arg2 : i32, i32
  }
  func.func @transform_1(%arg0: i32, %arg1: i32, %arg2: i32) -> (i32, i32) {
    %c0_i32 = arith.constant 0 : i32
    return %arg2, %arg1 : i32, i32
  }
  func.func @transform_2(%arg0: i32, %arg1: i32, %arg2: i32) -> (i32, i32) {
    %c0_i32 = arith.constant 0 : i32
    %c0_i32_0 = arith.constant 0 : i32
    return %c0_i32, %arg1 : i32, i32
  }
  func.func @transform_3(%arg0: i32, %arg1: i32, %arg2: i32) -> (i32, i32) {
    %c0_i32 = arith.constant 0 : i32
    %c0_i32_0 = arith.constant 0 : i32
    return %arg0, %c0_i32 : i32, i32
  }
  func.func @transform_4(%arg0: i32, %arg1: i32, %arg2: i32) -> (i32, i32) {
    %c0_i32 = arith.constant 0 : i32
    %c0_i32_0 = arith.constant 0 : i32
    %c0_i32_1 = arith.constant 0 : i32
    return %c0_i32, %c0_i32_0 : i32, i32
  }
  func.func @transform_5(%arg0: i32, %arg1: i32, %arg2: i32) -> (i32, i32) {
    %c0_i32 = arith.constant 0 : i32
    %c0_i32_0 = arith.constant 0 : i32
    %c0_i32_1 = arith.constant 0 : i32
    return %c0_i32, %c0_i32_0 : i32, i32
  }
  func.func @transform_6(%arg0: i32, %arg1: i32, %arg2: i32) -> (i32, i32) {
    %c0_i32 = arith.constant 0 : i32
    return %arg0, %arg1 : i32, i32
  }
}

module attributes {stable_mosaic.version = 11 : i64} {
  func.func @_attn_kernel(%arg0: i32, %arg1: memref<4x7x128xf32, #tpu.memory_space<vmem>>, %arg2: memref<4x7x128xf32, #tpu.memory_space<vmem>>, %arg3: memref<4x7x128xf32, #tpu.memory_space<vmem>>, %arg4: memref<4x7x128xf32, #tpu.memory_space<vmem>>) attributes {dimension_semantics = [#tpu.dimension_semantics<parallel>], iteration_bounds = array<i64: 1>, scalar_prefetch = 0 : i64, scratch_operands = 0 : i64, tpu.core_type = #tpu.core_type<tc>, window_params = [{transform_indices = @transform_0, window_bounds = array<i64: 4, 7, 128>}, {transform_indices = @transform_1, window_bounds = array<i64: 4, 7, 128>}, {transform_indices = @transform_2, window_bounds = array<i64: 4, 7, 128>}, {transform_indices = @transform_3, window_bounds = array<i64: 4, 7, 128>}]} {
    %c0 = arith.constant 0 : index
    %c0_0 = arith.constant 0 : index
    %c0_1 = arith.constant 0 : index
    %0 = vector.load %arg1[%c0, %c0_0, %c0_1] : memref<4x7x128xf32, #tpu.memory_space<vmem>>, vector<4x7x128xf32>
    %c0_2 = arith.constant 0 : index
    %c0_3 = arith.constant 0 : index
    %c0_4 = arith.constant 0 : index
    %1 = vector.load %arg2[%c0_2, %c0_3, %c0_4] : memref<4x7x128xf32, #tpu.memory_space<vmem>>, vector<4x7x128xf32>
    %c0_5 = arith.constant 0 : index
    %c0_6 = arith.constant 0 : index
    %c0_7 = arith.constant 0 : index
    %2 = vector.load %arg3[%c0_5, %c0_6, %c0_7] : memref<4x7x128xf32, #tpu.memory_space<vmem>>, vector<4x7x128xf32>
    "tpu.trace_start"() <{level = 10 : i32, message = "hqd,hkd->hqk"}> : () -> ()
    %cst = arith.constant dense<0.000000e+00> : vector<4x7x7xf32>
    %3 = tpu.matmul %0, %1, %cst {dimension_numbers = #tpu.dot_dimension_numbers<[2], [2], [1], [1], [0, 0, 0, 1, 1, 1], [0], [0]>} : vector<4x7x128xf32>, vector<4x7x128xf32>, vector<4x7x7xf32> -> vector<4x7x7xf32>
    "tpu.trace_stop"() : () -> ()
    %cst_8 = arith.constant 2.500000e-01 : f32
    %4 = vector.broadcast %cst_8 : f32 to vector<4x7x7xf32>
    %5 = arith.mulf %3, %4 : vector<4x7x7xf32>
    %cst_9 = arith.constant dense<0xFF800000> : vector<4x7xf32>
    %6 = vector.multi_reduction <maximumf>, %5, %cst_9 [2] : vector<4x7x7xf32> to vector<4x7xf32>
    %7 = vector.shape_cast %6 : vector<4x7xf32> to vector<4x7x1xf32>
    %8 = vector.broadcast %7 : vector<4x7x1xf32> to vector<4x7x7xf32>
    %9 = arith.subf %5, %8 : vector<4x7x7xf32>
    %10 = math.exp %9 : vector<4x7x7xf32>
    %cst_10 = arith.constant dense<0.000000e+00> : vector<4x7xf32>
    %11 = vector.multi_reduction <add>, %10, %cst_10 [2] : vector<4x7x7xf32> to vector<4x7xf32>
    %12 = vector.shape_cast %11 : vector<4x7xf32> to vector<4x7x1xf32>
    "tpu.trace_start"() <{level = 10 : i32, message = "hqk,hkd->hqd"}> : () -> ()
    %cst_11 = arith.constant dense<0.000000e+00> : vector<4x7x128xf32>
    %13 = tpu.matmul %10, %2, %cst_11 {dimension_numbers = #tpu.dot_dimension_numbers<[2], [1], [1], [2], [0, 0, 0, 1, 1, 2], [0], [0]>} : vector<4x7x7xf32>, vector<4x7x128xf32>, vector<4x7x128xf32> -> vector<4x7x128xf32>
    "tpu.trace_stop"() : () -> ()
    %14 = tpu.reciprocal %12 {approx = true} : vector<4x7x1xf32> -> vector<4x7x1xf32>
    %15 = vector.broadcast %14 : vector<4x7x1xf32> to vector<4x7x128xf32>
    %16 = arith.mulf %13, %15 : vector<4x7x128xf32>
    %c0_12 = arith.constant 0 : index
    %c0_13 = arith.constant 0 : index
    %c0_14 = arith.constant 0 : index
    %17 = vector.load %arg4[%c0_12, %c0_13, %c0_14] : memref<4x7x128xf32, #tpu.memory_space<vmem>>, vector<4x7x128xf32>
    tpu.vector_store %arg4[%c0_12, %c0_13, %c0_14], %16 {strides = array<i32>} : memref<4x7x128xf32, #tpu.memory_space<vmem>>, vector<4x7x128xf32>,
    return
  }
  func.func @transform_0(%arg0: i32) -> (i32, i32, i32) {
    %c0_i32 = arith.constant 0 : i32
    %c0_i32_0 = arith.constant 0 : i32
    %c0_i32_1 = arith.constant 0 : i32
    return %arg0, %c0_i32, %c0_i32_0 : i32, i32, i32
  }
  func.func @transform_1(%arg0: i32) -> (i32, i32, i32) {
    %c0_i32 = arith.constant 0 : i32
    %c0_i32_0 = arith.constant 0 : i32
    %c0_i32_1 = arith.constant 0 : i32
    return %arg0, %c0_i32, %c0_i32_0 : i32, i32, i32
  }
  func.func @transform_2(%arg0: i32) -> (i32, i32, i32) {
    %c0_i32 = arith.constant 0 : i32
    %c0_i32_0 = arith.constant 0 : i32
    %c0_i32_1 = arith.constant 0 : i32
    return %arg0, %c0_i32, %c0_i32_0 : i32, i32, i32
  }
  func.func @transform_3(%arg0: i32) -> (i32, i32, i32) {
    %c0_i32 = arith.constant 0 : i32
    %c0_i32_0 = arith.constant 0 : i32
    %c0_i32_1 = arith.constant 0 : i32
    return %arg0, %c0_i32, %c0_i32_0 : i32, i32, i32
  }
}

module attributes {stable_mosaic.version = 11 : i64} {
  func.func @_matmul_kernel(%arg0: i32, %arg1: i32, %arg2: i32, %arg3: memref<16x128xf32, #tpu.memory_space<vmem>>, %arg4: memref<128x256xf32, #tpu.memory_space<vmem>>, %arg5: memref<1x256xf32, #tpu.memory_space<vmem>>, %arg6: memref<16x256xf32, #tpu.memory_space<vmem>>, %arg7: memref<16x256xf32, #tpu.memory_space<vmem>>) attributes {dimension_semantics = [#tpu.dimension_semantics<parallel>, #tpu.dimension_semantics<parallel>, #tpu.dimension_semantics<arbitrary>], iteration_bounds = array<i64: 1, 1, 1>, scalar_prefetch = 0 : i64, scratch_operands = 1 : i64, tpu.core_type = #tpu.core_type<tc>, window_params = [{transform_indices = @transform_0, window_bounds = array<i64: 16, 128>}, {transform_indices = @transform_1, window_bounds = array<i64: 128, 256>}, {transform_indices = @transform_2, window_bounds = array<i64: 1, 256>}, {transform_indices = @transform_3, window_bounds = array<i64: 16, 256>}]} {
    %c0_i32 = arith.constant 0 : i32
    %0 = arith.cmpi eq, %arg2, %c0_i32 : i32
    %1 = arith.extui %0 : i1 to i32
    %c0_i32_0 = arith.constant 0 : i32
    %2 = arith.cmpi ne, %1, %c0_i32_0 : i32
    scf.if %2 {
      %c0_10 = arith.constant 0 : index
      %c0_11 = arith.constant 0 : index
      %12 = vector.load %arg5[%c0_10, %c0_11] : memref<1x256xf32, #tpu.memory_space<vmem>>, vector<1x256xf32>
      %13 = vector.shape_cast %12 : vector<1x256xf32> to vector<1x256xf32>
      %14 = vector.broadcast %13 : vector<1x256xf32> to vector<16x256xf32>
      %c0_12 = arith.constant 0 : index
      %c0_13 = arith.constant 0 : index
      %15 = vector.load %arg7[%c0_12, %c0_13] : memref<16x256xf32, #tpu.memory_space<vmem>>, vector<16x256xf32>
      tpu.vector_store %arg7[%c0_12, %c0_13], %14 {strides = array<i32>} : memref<16x256xf32, #tpu.memory_space<vmem>>, vector<16x256xf32>,
    } else {
    }
    %c0 = arith.constant 0 : index
    %c0_1 = arith.constant 0 : index
    %3 = vector.load %arg7[%c0, %c0_1] : memref<16x256xf32, #tpu.memory_space<vmem>>, vector<16x256xf32>
    %c0_2 = arith.constant 0 : index
    %c0_3 = arith.constant 0 : index
    %4 = vector.load %arg3[%c0_2, %c0_3] : memref<16x128xf32, #tpu.memory_space<vmem>>, vector<16x128xf32>
    %c0_4 = arith.constant 0 : index
    %c0_5 = arith.constant 0 : index
    %5 = vector.load %arg4[%c0_4, %c0_5] : memref<128x256xf32, #tpu.memory_space<vmem>>, vector<128x256xf32>
    %cst = arith.constant dense<0.000000e+00> : vector<16x256xf32>
    %6 = tpu.matmul %4, %5, %cst {dimension_numbers = #tpu.dot_dimension_numbers<[1], [0], [0], [1], [0, 0, 1, 1], [], []>} : vector<16x128xf32>, vector<128x256xf32>, vector<16x256xf32> -> vector<16x256xf32>
    %7 = arith.addf %3, %6 : vector<16x256xf32>
    %c0_6 = arith.constant 0 : index
    %c0_7 = arith.constant 0 : index
    %8 = vector.load %arg7[%c0_6, %c0_7] : memref<16x256xf32, #tpu.memory_space<vmem>>, vector<16x256xf32>
    tpu.vector_store %arg7[%c0_6, %c0_7], %7 {strides = array<i32>} : memref<16x256xf32, #tpu.memory_space<vmem>>, vector<16x256xf32>,
    %c0_i32_8 = arith.constant 0 : i32
    %9 = arith.cmpi eq, %arg2, %c0_i32_8 : i32
    %10 = arith.extui %9 : i1 to i32
    %c0_i32_9 = arith.constant 0 : i32
    %11 = arith.cmpi ne, %10, %c0_i32_9 : i32
    scf.if %11 {
      %c0_10 = arith.constant 0 : index
      %c0_11 = arith.constant 0 : index
      %12 = vector.load %arg7[%c0_10, %c0_11] : memref<16x256xf32, #tpu.memory_space<vmem>>, vector<16x256xf32>
      %c0_12 = arith.constant 0 : index
      %c0_13 = arith.constant 0 : index
      %13 = vector.load %arg6[%c0_12, %c0_13] : memref<16x256xf32, #tpu.memory_space<vmem>>, vector<16x256xf32>
      tpu.vector_store %arg6[%c0_12, %c0_13], %12 {strides = array<i32>} : memref<16x256xf32, #tpu.memory_space<vmem>>, vector<16x256xf32>,
    } else {
    }
    return
  }
  func.func @transform_0(%arg0: i32, %arg1: i32, %arg2: i32) -> (i32, i32) {
    %c0_i32 = arith.constant 0 : i32
    return %arg0, %arg2 : i32, i32
  }
  func.func @transform_1(%arg0: i32, %arg1: i32, %arg2: i32) -> (i32, i32) {
    %c0_i32 = arith.constant 0 : i32
    return %arg2, %arg1 : i32, i32
  }
  func.func @transform_2(%arg0: i32, %arg1: i32, %arg2: i32) -> (i32, i32) {
    %c0_i32 = arith.constant 0 : i32
    %c0_i32_0 = arith.constant 0 : i32
    return %c0_i32, %arg1 : i32, i32
  }
  func.func @transform_3(%arg0: i32, %arg1: i32, %arg2: i32) -> (i32, i32) {
    %c0_i32 = arith.constant 0 : i32
    return %arg0, %arg1 : i32, i32
  }
}

module attributes {stable_mosaic.version = 11 : i64} {
  func.func @_matmul_kernel(%arg0: i32, %arg1: i32, %arg2: i32, %arg3: memref<16x128xf32, #tpu.memory_space<vmem>>, %arg4: memref<128x256xf32, #tpu.memory_space<vmem>>, %arg5: memref<1x256xf32, #tpu.memory_space<vmem>>, %arg6: memref<16x256xf32, #tpu.memory_space<vmem>>, %arg7: memref<16x256xf32, #tpu.memory_space<vmem>>) attributes {dimension_semantics = [#tpu.dimension_semantics<parallel>, #tpu.dimension_semantics<parallel>, #tpu.dimension_semantics<arbitrary>], iteration_bounds = array<i64: 1, 3, 1>, scalar_prefetch = 0 : i64, scratch_operands = 1 : i64, tpu.core_type = #tpu.core_type<tc>, window_params = [{transform_indices = @transform_0, window_bounds = array<i64: 16, 128>}, {transform_indices = @transform_1, window_bounds = array<i64: 128, 256>}, {transform_indices = @transform_2, window_bounds = array<i64: 1, 256>}, {transform_indices = @transform_3, window_bounds = array<i64: 16, 256>}]} {
    %c0_i32 = arith.constant 0 : i32
    %0 = arith.cmpi eq, %arg2, %c0_i32 : i32
    %1 = arith.extui %0 : i1 to i32
    %c0_i32_0 = arith.constant 0 : i32
    %2 = arith.cmpi ne, %1, %c0_i32_0 : i32
    scf.if %2 {
      %c0_10 = arith.constant 0 : index
      %c0_11 = arith.constant 0 : index
      %12 = vector.load %arg5[%c0_10, %c0_11] : memref<1x256xf32, #tpu.memory_space<vmem>>, vector<1x256xf32>
      %13 = vector.shape_cast %12 : vector<1x256xf32> to vector<1x256xf32>
      %14 = vector.broadcast %13 : vector<1x256xf32> to vector<16x256xf32>
      %c0_12 = arith.constant 0 : index
      %c0_13 = arith.constant 0 : index
      %15 = vector.load %arg7[%c0_12, %c0_13] : memref<16x256xf32, #tpu.memory_space<vmem>>, vector<16x256xf32>
      tpu.vector_store %arg7[%c0_12, %c0_13], %14 {strides = array<i32>} : memref<16x256xf32, #tpu.memory_space<vmem>>, vector<16x256xf32>,
    } else {
    }
    %c0 = arith.constant 0 : index
    %c0_1 = arith.constant 0 : index
    %3 = vector.load %arg7[%c0, %c0_1] : memref<16x256xf32, #tpu.memory_space<vmem>>, vector<16x256xf32>
    %c0_2 = arith.constant 0 : index
    %c0_3 = arith.constant 0 : index
    %4 = vector.load %arg3[%c0_2, %c0_3] : memref<16x128xf32, #tpu.memory_space<vmem>>, vector<16x128xf32>
    %c0_4 = arith.constant 0 : index
    %c0_5 = arith.constant 0 : index
    %5 = vector.load %arg4[%c0_4, %c0_5] : memref<128x256xf32, #tpu.memory_space<vmem>>, vector<128x256xf32>
    %cst = arith.constant dense<0.000000e+00> : vector<16x256xf32>
    %6 = tpu.matmul %4, %5, %cst {dimension_numbers = #tpu.dot_dimension_numbers<[1], [0], [0], [1], [0, 0, 1, 1], [], []>} : vector<16x128xf32>, vector<128x256xf32>, vector<16x256xf32> -> vector<16x256xf32>
    %7 = arith.addf %3, %6 : vector<16x256xf32>
    %c0_6 = arith.constant 0 : index
    %c0_7 = arith.constant 0 : index
    %8 = vector.load %arg7[%c0_6, %c0_7] : memref<16x256xf32, #tpu.memory_space<vmem>>, vector<16x256xf32>
    tpu.vector_store %arg7[%c0_6, %c0_7], %7 {strides = array<i32>} : memref<16x256xf32, #tpu.memory_space<vmem>>, vector<16x256xf32>,
    %c0_i32_8 = arith.constant 0 : i32
    %9 = arith.cmpi eq, %arg2, %c0_i32_8 : i32
    %10 = arith.extui %9 : i1 to i32
    %c0_i32_9 = arith.constant 0 : i32
    %11 = arith.cmpi ne, %10, %c0_i32_9 : i32
    scf.if %11 {
      %c0_10 = arith.constant 0 : index
      %c0_11 = arith.constant 0 : index
      %12 = vector.load %arg7[%c0_10, %c0_11] : memref<16x256xf32, #tpu.memory_space<vmem>>, vector<16x256xf32>
      %c0_12 = arith.constant 0 : index
      %c0_13 = arith.constant 0 : index
      %13 = vector.load %arg6[%c0_12, %c0_13] : memref<16x256xf32, #tpu.memory_space<vmem>>, vector<16x256xf32>
      tpu.vector_store %arg6[%c0_12, %c0_13], %12 {strides = array<i32>} : memref<16x256xf32, #tpu.memory_space<vmem>>, vector<16x256xf32>,
    } else {
    }
    return
  }
  func.func @transform_0(%arg0: i32, %arg1: i32, %arg2: i32) -> (i32, i32) {
    %c0_i32 = arith.constant 0 : i32
    return %arg0, %arg2 : i32, i32
  }
  func.func @transform_1(%arg0: i32, %arg1: i32, %arg2: i32) -> (i32, i32) {
    %c0_i32 = arith.constant 0 : i32
    return %arg2, %arg1 : i32, i32
  }
  func.func @transform_2(%arg0: i32, %arg1: i32, %arg2: i32) -> (i32, i32) {
    %c0_i32 = arith.constant 0 : i32
    %c0_i32_0 = arith.constant 0 : i32
    return %c0_i32, %arg1 : i32, i32
  }
  func.func @transform_3(%arg0: i32, %arg1: i32, %arg2: i32) -> (i32, i32) {
    %c0_i32 = arith.constant 0 : i32
    return %arg0, %arg1 : i32, i32
  }
}

module attributes {stable_mosaic.version = 11 : i64} {
  func.func @_matmul_kernel(%arg0: i32, %arg1: i32, %arg2: i32, %arg3: memref<16x128xf32, #tpu.memory_space<vmem>>, %arg4: memref<128x128xf32, #tpu.memory_space<vmem>>, %arg5: memref<1x128xf32, #tpu.memory_space<vmem>>, %arg6: memref<16x128xf32, #tpu.memory_space<vmem>>, %arg7: memref<16x128xf32, #tpu.memory_space<vmem>>) attributes {dimension_semantics = [#tpu.dimension_semantics<parallel>, #tpu.dimension_semantics<parallel>, #tpu.dimension_semantics<arbitrary>], iteration_bounds = array<i64: 1, 1, 1>, scalar_prefetch = 0 : i64, scratch_operands = 1 : i64, tpu.core_type = #tpu.core_type<tc>, window_params = [{transform_indices = @transform_0, window_bounds = array<i64: 16, 128>}, {transform_indices = @transform_1, window_bounds = array<i64: 128, 128>}, {transform_indices = @transform_2, window_bounds = array<i64: 1, 128>}, {transform_indices = @transform_3, window_bounds = array<i64: 16, 128>}]} {
    %c0_i32 = arith.constant 0 : i32
    %0 = arith.cmpi eq, %arg2, %c0_i32 : i32
    %1 = arith.extui %0 : i1 to i32
    %c0_i32_0 = arith.constant 0 : i32
    %2 = arith.cmpi ne, %1, %c0_i32_0 : i32
    scf.if %2 {
      %c0_10 = arith.constant 0 : index
      %c0_11 = arith.constant 0 : index
      %12 = vector.load %arg5[%c0_10, %c0_11] : memref<1x128xf32, #tpu.memory_space<vmem>>, vector<1x128xf32>
      %13 = vector.shape_cast %12 : vector<1x128xf32> to vector<1x128xf32>
      %14 = vector.broadcast %13 : vector<1x128xf32> to vector<16x128xf32>
      %c0_12 = arith.constant 0 : index
      %c0_13 = arith.constant 0 : index
      %15 = vector.load %arg7[%c0_12, %c0_13] : memref<16x128xf32, #tpu.memory_space<vmem>>, vector<16x128xf32>
      tpu.vector_store %arg7[%c0_12, %c0_13], %14 {strides = array<i32>} : memref<16x128xf32, #tpu.memory_space<vmem>>, vector<16x128xf32>,
    } else {
    }
    %c0 = arith.constant 0 : index
    %c0_1 = arith.constant 0 : index
    %3 = vector.load %arg7[%c0, %c0_1] : memref<16x128xf32, #tpu.memory_space<vmem>>, vector<16x128xf32>
    %c0_2 = arith.constant 0 : index
    %c0_3 = arith.constant 0 : index
    %4 = vector.load %arg3[%c0_2, %c0_3] : memref<16x128xf32, #tpu.memory_space<vmem>>, vector<16x128xf32>
    %c0_4 = arith.constant 0 : index
    %c0_5 = arith.constant 0 : index
    %5 = vector.load %arg4[%c0_4, %c0_5] : memref<128x128xf32, #tpu.memory_space<vmem>>, vector<128x128xf32>
    %cst = arith.constant dense<0.000000e+00> : vector<16x128xf32>
    %6 = tpu.matmul %4, %5, %cst {dimension_numbers = #tpu.dot_dimension_numbers<[1], [0], [0], [1], [0, 0, 1, 1], [], []>} : vector<16x128xf32>, vector<128x128xf32>, vector<16x128xf32> -> vector<16x128xf32>
    %7 = arith.addf %3, %6 : vector<16x128xf32>
    %c0_6 = arith.constant 0 : index
    %c0_7 = arith.constant 0 : index
    %8 = vector.load %arg7[%c0_6, %c0_7] : memref<16x128xf32, #tpu.memory_space<vmem>>, vector<16x128xf32>
    tpu.vector_store %arg7[%c0_6, %c0_7], %7 {strides = array<i32>} : memref<16x128xf32, #tpu.memory_space<vmem>>, vector<16x128xf32>,
    %c0_i32_8 = arith.constant 0 : i32
    %9 = arith.cmpi eq, %arg2, %c0_i32_8 : i32
    %10 = arith.extui %9 : i1 to i32
    %c0_i32_9 = arith.constant 0 : i32
    %11 = arith.cmpi ne, %10, %c0_i32_9 : i32
    scf.if %11 {
      %c0_10 = arith.constant 0 : index
      %c0_11 = arith.constant 0 : index
      %12 = vector.load %arg7[%c0_10, %c0_11] : memref<16x128xf32, #tpu.memory_space<vmem>>, vector<16x128xf32>
      %cst_12 = arith.constant 5.000000e-01 : f32
      %13 = vector.broadcast %cst_12 : f32 to vector<16x128xf32>
      %14 = arith.mulf %13, %12 : vector<16x128xf32>
      %cst_13 = arith.constant 0.707106769 : f32
      %15 = vector.broadcast %cst_13 : f32 to vector<16x128xf32>
      %16 = arith.mulf %12, %15 : vector<16x128xf32>
      %17 = math.erf %16 : vector<16x128xf32>
      %cst_14 = arith.constant 1.000000e+00 : f32
      %18 = vector.broadcast %cst_14 : f32 to vector<16x128xf32>
      %19 = arith.addf %18, %17 : vector<16x128xf32>
      %20 = arith.mulf %14, %19 : vector<16x128xf32>
      %c0_15 = arith.constant 0 : index
      %c0_16 = arith.constant 0 : index
      %21 = vector.load %arg6[%c0_15, %c0_16] : memref<16x128xf32, #tpu.memory_space<vmem>>, vector<16x128xf32>
      tpu.vector_store %arg6[%c0_15, %c0_16], %20 {strides = array<i32>} : memref<16x128xf32, #tpu.memory_space<vmem>>, vector<16x128xf32>,
    } else {
    }
    return
  }
  func.func @transform_0(%arg0: i32, %arg1: i32, %arg2: i32) -> (i32, i32) {
    %c0_i32 = arith.constant 0 : i32
    return %arg0, %arg2 : i32, i32
  }
  func.func @transform_1(%arg0: i32, %arg1: i32, %arg2: i32) -> (i32, i32) {
    %c0_i32 = arith.constant 0 : i32
    return %arg2, %arg1 : i32, i32
  }
  func.func @transform_2(%arg0: i32, %arg1: i32, %arg2: i32) -> (i32, i32) {
    %c0_i32 = arith.constant 0 : i32
    %c0_i32_0 = arith.constant 0 : i32
    return %c0_i32, %arg1 : i32, i32
  }
  func.func @transform_3(%arg0: i32, %arg1: i32, %arg2: i32) -> (i32, i32) {
    %c0_i32 = arith.constant 0 : i32
    return %arg0, %arg1 : i32, i32
  }
}

module attributes {stable_mosaic.version = 11 : i64} {
  func.func @_matmul_kernel(%arg0: i32, %arg1: i32, %arg2: i32, %arg3: memref<16x128xf32, #tpu.memory_space<vmem>>, %arg4: memref<128x128xf32, #tpu.memory_space<vmem>>, %arg5: memref<1x128xf32, #tpu.memory_space<vmem>>, %arg6: memref<16x128xf32, #tpu.memory_space<vmem>>, %arg7: memref<1x128xf32, #tpu.memory_space<vmem>>, %arg8: memref<1x128xf32, #tpu.memory_space<vmem>>, %arg9: memref<16x128xf32, #tpu.memory_space<vmem>>, %arg10: memref<16x128xf32, #tpu.memory_space<vmem>>) attributes {dimension_semantics = [#tpu.dimension_semantics<parallel>, #tpu.dimension_semantics<parallel>, #tpu.dimension_semantics<arbitrary>], iteration_bounds = array<i64: 1, 1, 1>, scalar_prefetch = 0 : i64, scratch_operands = 1 : i64, tpu.core_type = #tpu.core_type<tc>, window_params = [{transform_indices = @transform_0, window_bounds = array<i64: 16, 128>}, {transform_indices = @transform_1, window_bounds = array<i64: 128, 128>}, {transform_indices = @transform_2, window_bounds = array<i64: 1, 128>}, {transform_indices = @transform_3, window_bounds = array<i64: 16, 128>}, {pipeline_mode = #tpu.pipeline_mode<synchronous>, transform_indices = @transform_4, window_bounds = array<i64: 1, 128>}, {pipeline_mode = #tpu.pipeline_mode<synchronous>, transform_indices = @transform_5, window_bounds = array<i64: 1, 128>}, {transform_indices = @transform_6, window_bounds = array<i64: 16, 128>}]} {
    %c0_i32 = arith.constant 0 : i32
    %0 = arith.cmpi eq, %arg2, %c0_i32 : i32
    %1 = arith.extui %0 : i1 to i32
    %c0_i32_0 = arith.constant 0 : i32
    %2 = arith.cmpi ne, %1, %c0_i32_0 : i32
    scf.if %2 {
      %c0_10 = arith.constant 0 : index
      %c0_11 = arith.constant 0 : index
      %12 = vector.load %arg5[%c0_10, %c0_11] : memref<1x128xf32, #tpu.memory_space<vmem>>, vector<1x128xf32>
      %13 = vector.shape_cast %12 : vector<1x128xf32> to vector<1x128xf32>
      %14 = vector.broadcast %13 : vector<1x128xf32> to vector<16x128xf32>
      %c0_12 = arith.constant 0 : index
      %c0_13 = arith.constant 0 : index
      %15 = vector.load %arg10[%c0_12, %c0_13] : memref<16x128xf32, #tpu.memory_space<vmem>>, vector<16x128xf32>
      tpu.vector_store %arg10[%c0_12, %c0_13], %14 {strides = array<i32>} : memref<16x128xf32, #tpu.memory_space<vmem>>, vector<16x128xf32>,
    } else {
    }
    %c0 = arith.constant 0 : index
    %c0_1 = arith.constant 0 : index
    %3 = vector.load %arg10[%c0, %c0_1] : memref<16x128xf32, #tpu.memory_space<vmem>>, vector<16x128xf32>
    %c0_2 = arith.constant 0 : index
    %c0_3 = arith.constant 0 : index
    %4 = vector.load %arg3[%c0_2, %c0_3] : memref<16x128xf32, #tpu.memory_space<vmem>>, vector<16x128xf32>
    %c0_4 = arith.constant 0 : index
    %c0_5 = arith.constant 0 : index
    %5 = vector.load %arg4[%c0_4, %c0_5] : memref<128x128xf32, #tpu.memory_space<vmem>>, vector<128x128xf32>
    %cst = arith.constant dense<0.000000e+00> : vector<16x128xf32>
    %6 = tpu.matmul %4, %5, %cst {dimension_numbers = #tpu.dot_dimension_numbers<[1], [0], [0], [1], [0, 0, 1, 1], [], []>} : vector<16x128xf32>, vector<128x128xf32>, vector<16x128xf32> -> vector<16x128xf32>
    %7 = arith.addf %3, %6 : vector<16x128xf32>
    %c0_6 = arith.constant 0 : index
    %c0_7 = arith.constant 0 : index
    %8 = vector.load %arg10[%c0_6, %c0_7] : memref<16x128xf32, #tpu.memory_space<vmem>>, vector<16x128xf32>
    tpu.vector_store %arg10[%c0_6, %c0_7], %7 {strides = array<i32>} : memref<16x128xf32, #tpu.memory_space<vmem>>, vector<16x128xf32>,
    %c0_i32_8 = arith.constant 0 : i32
    %9 = arith.cmpi eq, %arg2, %c0_i32_8 : i32
    %10 = arith.extui %9 : i1 to i32
    %c0_i32_9 = arith.constant 0 : i32
    %11 = arith.cmpi ne, %10, %c0_i32_9 : i32
    scf.if %11 {
      %c0_10 = arith.constant 0 : index
      %c0_11 = arith.constant 0 : index
      %12 = vector.load %arg10[%c0_10, %c0_11] : memref<16x128xf32, #tpu.memory_space<vmem>>, vector<16x128xf32>
      %c0_12 = arith.constant 0 : index
      %c0_13 = arith.constant 0 : index
      %13 = vector.load %arg6[%c0_12, %c0_13] : memref<16x128xf32, #tpu.memory_space<vmem>>, vector<16x128xf32>
      %14 = arith.addf %12, %13 : vector<16x128xf32>
      %cst_14 = arith.constant dense<0.000000e+00> : vector<16xf32>
      %15 = vector.multi_reduction <add>, %14, %cst_14 [1] : vector<16x128xf32> to vector<16xf32>
      %16 = vector.shape_cast %15 : vector<16xf32> to vector<16x1xf32>
      %cst_15 = arith.constant 3.125000e-02 : f32
      %17 = vector.broadcast %cst_15 : f32 to vector<16x1xf32>
      %18 = arith.mulf %16, %17 : vector<16x1xf32>
      %19 = vector.broadcast %18 : vector<16x1xf32> to vector<16x128xf32>
      %20 = arith.subf %14, %19 : vector<16x128xf32>
      %21 = arith.mulf %20, %20 : vector<16x128xf32>
      %cst_16 = arith.constant dense<0.000000e+00> : vector<16xf32>
      %22 = vector.multi_reduction <add>, %21, %cst_16 [1] : vector<16x128xf32> to vector<16xf32>
      %23 = vector.shape_cast %22 : vector<16xf32> to vector<16x1xf32>
      %cst_17 = arith.constant 9.600000e+01 : f32
      %24 = vector.broadcast %cst_17 : f32 to vector<16x1xf32>
      %25 = arith.mulf %24, %18 : vector<16x1xf32>
      %26 = arith.mulf %25, %18 : vector<16x1xf32>
      %27 = arith.subf %23, %26 : vector<16x1xf32>
      %cst_18 = arith.constant 3.125000e-02 : f32
      %28 = vector.broadcast %cst_18 : f32 to vector<16x1xf32>
      %29 = arith.mulf %27, %28 : vector<16x1xf32>
      %cst_19 = arith.constant 9.99999974E-6 : f32
      %30 = vector.broadcast %cst_19 : f32 to vector<16x1xf32>
      %31 = arith.addf %29, %30 : vector<16x1xf32>
      %32 = math.rsqrt %31 : vector<16x1xf32>
      %33 = vector.broadcast %32 : vector<16x1xf32> to vector<16x128xf32>
      %34 = arith.mulf %20, %33 : vector<16x128xf32>
      %c0_20 = arith.constant 0 : index
      %c0_21 = arith.constant 0 : index
      %35 = vector.load %arg7[%c0_20, %c0_21] : memref<1x128xf32, #tpu.memory_space<vmem>>, vector<1x128xf32>
      %36 = vector.broadcast %35 : vector<1x128xf32> to vector<16x128xf32>
      %37 = arith.mulf %34, %36 : vector<16x128xf32>
      %c0_22 = arith.constant 0 : index
      %c0_23 = arith.constant 0 : index
      %38 = vector.load %arg8[%c0_22, %c0_23] : memref<1x128xf32, #tpu.memory_space<vmem>>, vector<1x128xf32>
      %39 = vector.broadcast %38 : vector<1x128xf32> to vector<16x128xf32>
      %40 = arith.addf %37, %39 : vector<16x128xf32>
      %c0_24 = arith.constant 0 : index
      %c0_25 = arith.constant 0 : index
      %41 = vector.load %arg9[%c0_24, %c0_25] : memref<16x128xf32, #tpu.memory_space<vmem>>, vector<16x128xf32>
      tpu.vector_store %arg9[%c0_24, %c0_25], %40 {strides = array<i32>} : memref<16x128xf32, #tpu.memory_space<vmem>>, vector<16x128xf32>,
    } else {
    }
    return
  }
  func.func @transform_0(%arg0: i32, %arg1: i32, %arg2: i32) -> (i32, i32) {
    %c0_i32 = arith.constant 0 : i32
    return %arg0, %arg2 : i32, i32
  }
  func.func @transform_1(%arg0: i32, %arg1: i32, %arg2: i32) -> (i32, i32) {
    %c0_i32 = arith.constant 0 : i32
    return %arg2, %arg1 : i32, i32
  }
  func.func @transform_2(%arg0: i32, %arg1: i32, %arg2: i32) -> (i32, i32) {
    %c0_i32 = arith.constant 0 : i32
    %c0_i32_0 = arith.constant 0 : i32
    return %c0_i32, %arg1 : i32, i32
  }
  func.func @transform_3(%arg0: i32, %arg1: i32, %arg2: i32) -> (i32, i32) {
    %c0_i32 = arith.constant 0 : i32
    %c0_i32_0 = arith.constant 0 : i32
    return %arg0, %c0_i32 : i32, i32
  }
  func.func @transform_4(%arg0: i32, %arg1: i32, %arg2: i32) -> (i32, i32) {
    %c0_i32 = arith.constant 0 : i32
    %c0_i32_0 = arith.constant 0 : i32
    %c0_i32_1 = arith.constant 0 : i32
    return %c0_i32, %c0_i32_0 : i32, i32
  }
  func.func @transform_5(%arg0: i32, %arg1: i32, %arg2: i32) -> (i32, i32) {
    %c0_i32 = arith.constant 0 : i32
    %c0_i32_0 = arith.constant 0 : i32
    %c0_i32_1 = arith.constant 0 : i32
    return %c0_i32, %c0_i32_0 : i32, i32
  }
  func.func @transform_6(%arg0: i32, %arg1: i32, %arg2: i32) -> (i32, i32) {
    %c0_i32 = arith.constant 0 : i32
    return %arg0, %arg1 : i32, i32
  }
}

module attributes {stable_mosaic.version = 11 : i64} {
  func.func @_attn_kernel(%arg0: i32, %arg1: memref<4x8x128xf32, #tpu.memory_space<vmem>>, %arg2: memref<4x8x128xf32, #tpu.memory_space<vmem>>, %arg3: memref<4x8x128xf32, #tpu.memory_space<vmem>>, %arg4: memref<4x8x128xf32, #tpu.memory_space<vmem>>) attributes {dimension_semantics = [#tpu.dimension_semantics<parallel>], iteration_bounds = array<i64: 1>, scalar_prefetch = 0 : i64, scratch_operands = 0 : i64, tpu.core_type = #tpu.core_type<tc>, window_params = [{transform_indices = @transform_0, window_bounds = array<i64: 4, 8, 128>}, {transform_indices = @transform_1, window_bounds = array<i64: 4, 8, 128>}, {transform_indices = @transform_2, window_bounds = array<i64: 4, 8, 128>}, {transform_indices = @transform_3, window_bounds = array<i64: 4, 8, 128>}]} {
    %c0 = arith.constant 0 : index
    %c0_0 = arith.constant 0 : index
    %c0_1 = arith.constant 0 : index
    %0 = vector.load %arg1[%c0, %c0_0, %c0_1] : memref<4x8x128xf32, #tpu.memory_space<vmem>>, vector<4x8x128xf32>
    %c0_2 = arith.constant 0 : index
    %c0_3 = arith.constant 0 : index
    %c0_4 = arith.constant 0 : index
    %1 = vector.load %arg2[%c0_2, %c0_3, %c0_4] : memref<4x8x128xf32, #tpu.memory_space<vmem>>, vector<4x8x128xf32>
    %c0_5 = arith.constant 0 : index
    %c0_6 = arith.constant 0 : index
    %c0_7 = arith.constant 0 : index
    %2 = vector.load %arg3[%c0_5, %c0_6, %c0_7] : memref<4x8x128xf32, #tpu.memory_space<vmem>>, vector<4x8x128xf32>
    "tpu.trace_start"() <{level = 10 : i32, message = "hqd,hkd->hqk"}> : () -> ()
    %cst = arith.constant dense<0.000000e+00> : vector<4x8x8xf32>
    %3 = tpu.matmul %0, %1, %cst {dimension_numbers = #tpu.dot_dimension_numbers<[2], [2], [1], [1], [0, 0, 0, 1, 1, 1], [0], [0]>} : vector<4x8x128xf32>, vector<4x8x128xf32>, vector<4x8x8xf32> -> vector<4x8x8xf32>
    "tpu.trace_stop"() : () -> ()
    %cst_8 = arith.constant 2.500000e-01 : f32
    %4 = vector.broadcast %cst_8 : f32 to vector<4x8x8xf32>
    %5 = arith.mulf %3, %4 : vector<4x8x8xf32>
    %cst_9 = arith.constant dense<0xFF800000> : vector<4x8xf32>
    %6 = vector.multi_reduction <maximumf>, %5, %cst_9 [2] : vector<4x8x8xf32> to vector<4x8xf32>
    %7 = vector.shape_cast %6 : vector<4x8xf32> to vector<4x8x1xf32>
    %8 = vector.broadcast %7 : vector<4x8x1xf32> to vector<4x8x8xf32>
    %9 = arith.subf %5, %8 : vector<4x8x8xf32>
    %10 = math.exp %9 : vector<4x8x8xf32>
    %cst_10 = arith.constant dense<0.000000e+00> : vector<4x8xf32>
    %11 = vector.multi_reduction <add>, %10, %cst_10 [2] : vector<4x8x8xf32> to vector<4x8xf32>
    %12 = vector.shape_cast %11 : vector<4x8xf32> to vector<4x8x1xf32>
    "tpu.trace_start"() <{level = 10 : i32, message = "hqk,hkd->hqd"}> : () -> ()
    %cst_11 = arith.constant dense<0.000000e+00> : vector<4x8x128xf32>
    %13 = tpu.matmul %10, %2, %cst_11 {dimension_numbers = #tpu.dot_dimension_numbers<[2], [1], [1], [2], [0, 0, 0, 1, 1, 2], [0], [0]>} : vector<4x8x8xf32>, vector<4x8x128xf32>, vector<4x8x128xf32> -> vector<4x8x128xf32>
    "tpu.trace_stop"() : () -> ()
    %14 = tpu.reciprocal %12 {approx = true} : vector<4x8x1xf32> -> vector<4x8x1xf32>
    %15 = vector.broadcast %14 : vector<4x8x1xf32> to vector<4x8x128xf32>
    %16 = arith.mulf %13, %15 : vector<4x8x128xf32>
    %c0_12 = arith.constant 0 : index
    %c0_13 = arith.constant 0 : index
    %c0_14 = arith.constant 0 : index
    %17 = vector.load %arg4[%c0_12, %c0_13, %c0_14] : memref<4x8x128xf32, #tpu.memory_space<vmem>>, vector<4x8x128xf32>
    tpu.vector_store %arg4[%c0_12, %c0_13, %c0_14], %16 {strides = array<i32>} : memref<4x8x128xf32, #tpu.memory_space<vmem>>, vector<4x8x128xf32>,
    return
  }
  func.func @transform_0(%arg0: i32) -> (i32, i32, i32) {
    %c0_i32 = arith.constant 0 : i32
    %c0_i32_0 = arith.constant 0 : i32
    %c0_i32_1 = arith.constant 0 : i32
    return %arg0, %c0_i32, %c0_i32_0 : i32, i32, i32
  }
  func.func @transform_1(%arg0: i32) -> (i32, i32, i32) {
    %c0_i32 = arith.constant 0 : i32
    %c0_i32_0 = arith.constant 0 : i32
    %c0_i32_1 = arith.constant 0 : i32
    return %arg0, %c0_i32, %c0_i32_0 : i32, i32, i32
  }
  func.func @transform_2(%arg0: i32) -> (i32, i32, i32) {
    %c0_i32 = arith.constant 0 : i32
    %c0_i32_0 = arith.constant 0 : i32
    %c0_i32_1 = arith.constant 0 : i32
    return %arg0, %c0_i32, %c0_i32_0 : i32, i32, i32
  }
  func.func @transform_3(%arg0: i32) -> (i32, i32, i32) {
    %c0_i32 = arith.constant 0 : i32
    %c0_i32_0 = arith.constant 0 : i32
    %c0_i32_1 = arith.constant 0 : i32
    return %arg0, %c0_i32, %c0_i32_0 : i32, i32, i32
  }
}

module attributes {stable_mosaic.version = 11 : i64} {
  func.func @_layernorm_kernel(%arg0: i32, %arg1: memref<16x128xf32, #tpu.memory_space<vmem>>, %arg2: memref<1x128xf32, #tpu.memory_space<vmem>>, %arg3: memref<1x128xf32, #tpu.memory_space<vmem>>, %arg4: memref<16x128xf32, #tpu.memory_space<vmem>>) attributes {dimension_semantics = [#tpu.dimension_semantics<parallel>], iteration_bounds = array<i64: 1>, scalar_prefetch = 0 : i64, scratch_operands = 0 : i64, tpu.core_type = #tpu.core_type<tc>, window_params = [{transform_indices = @transform_0, window_bounds = array<i64: 16, 128>}, {pipeline_mode = #tpu.pipeline_mode<synchronous>, transform_indices = @transform_1, window_bounds = array<i64: 1, 128>}, {pipeline_mode = #tpu.pipeline_mode<synchronous>, transform_indices = @transform_2, window_bounds = array<i64: 1, 128>}, {transform_indices = @transform_3, window_bounds = array<i64: 16, 128>}]} {
    %c0 = arith.constant 0 : index
    %c0_0 = arith.constant 0 : index
    %0 = vector.load %arg1[%c0, %c0_0] : memref<16x128xf32, #tpu.memory_space<vmem>>, vector<16x128xf32>
    %cst = arith.constant dense<0.000000e+00> : vector<16xf32>
    %1 = vector.multi_reduction <add>, %0, %cst [1] : vector<16x128xf32> to vector<16xf32>
    %2 = vector.shape_cast %1 : vector<16xf32> to vector<16x1xf32>
    %cst_1 = arith.constant 3.125000e-02 : f32
    %3 = vector.broadcast %cst_1 : f32 to vector<16x1xf32>
    %4 = arith.mulf %2, %3 : vector<16x1xf32>
    %5 = vector.broadcast %4 : vector<16x1xf32> to vector<16x128xf32>
    %6 = arith.subf %0, %5 : vector<16x128xf32>
    %7 = arith.mulf %6, %6 : vector<16x128xf32>
    %cst_2 = arith.constant dense<0.000000e+00> : vector<16xf32>
    %8 = vector.multi_reduction <add>, %7, %cst_2 [1] : vector<16x128xf32> to vector<16xf32>
    %9 = vector.shape_cast %8 : vector<16xf32> to vector<16x1xf32>
    %cst_3 = arith.constant 9.600000e+01 : f32
    %10 = vector.broadcast %cst_3 : f32 to vector<16x1xf32>
    %11 = arith.mulf %10, %4 : vector<16x1xf32>
    %12 = arith.mulf %11, %4 : vector<16x1xf32>
    %13 = arith.subf %9, %12 : vector<16x1xf32>
    %cst_4 = arith.constant 3.125000e-02 : f32
    %14 = vector.broadcast %cst_4 : f32 to vector<16x1xf32>
    %15 = arith.mulf %13, %14 : vector<16x1xf32>
    %cst_5 = arith.constant 9.99999974E-6 : f32
    %16 = vector.broadcast %cst_5 : f32 to vector<16x1xf32>
    %17 = arith.addf %15, %16 : vector<16x1xf32>
    %18 = math.rsqrt %17 : vector<16x1xf32>
    %19 = vector.broadcast %18 : vector<16x1xf32> to vector<16x128xf32>
    %20 = arith.mulf %6, %19 : vector<16x128xf32>
    %c0_6 = arith.constant 0 : index
    %c0_7 = arith.constant 0 : index
    %21 = vector.load %arg2[%c0_6, %c0_7] : memref<1x128xf32, #tpu.memory_space<vmem>>, vector<1x128xf32>
    %22 = vector.broadcast %21 : vector<1x128xf32> to vector<16x128xf32>
    %23 = arith.mulf %20, %22 : vector<16x128xf32>
    %c0_8 = arith.constant 0 : index
    %c0_9 = arith.constant 0 : index
    %24 = vector.load %arg3[%c0_8, %c0_9] : memref<1x128xf32, #tpu.memory_space<vmem>>, vector<1x128xf32>
    %25 = vector.broadcast %24 : vector<1x128xf32> to vector<16x128xf32>
    %26 = arith.addf %23, %25 : vector<16x128xf32>
    %c0_10 = arith.constant 0 : index
    %c0_11 = arith.constant 0 : index
    %27 = vector.load %arg4[%c0_10, %c0_11] : memref<16x128xf32, #tpu.memory_space<vmem>>, vector<16x128xf32>
    tpu.vector_store %arg4[%c0_10, %c0_11], %26 {strides = array<i32>} : memref<16x128xf32, #tpu.memory_space<vmem>>, vector<16x128xf32>,
    return
  }
  func.func @transform_0(%arg0: i32) -> (i32, i32) {
    %c0_i32 = arith.constant 0 : i32
    %c0_i32_0 = arith.constant 0 : i32
    return %arg0, %c0_i32 : i32, i32
  }
  func.func @transform_1(%arg0: i32) -> (i32, i32) {
    %c0_i32 = arith.constant 0 : i32
    %c0_i32_0 = arith.constant 0 : i32
    %c0_i32_1 = arith.constant 0 : i32
    return %c0_i32, %c0_i32_0 : i32, i32
  }
  func.func @transform_2(%arg0: i32) -> (i32, i32) {
    %c0_i32 = arith.constant 0 : i32
    %c0_i32_0 = arith.constant 0 : i32
    %c0_i32_1 = arith.constant 0 : i32
    return %c0_i32, %c0_i32_0 : i32, i32
  }
  func.func @transform_3(%arg0: i32) -> (i32, i32) {
    %c0_i32 = arith.constant 0 : i32
    %c0_i32_0 = arith.constant 0 : i32
    return %arg0, %c0_i32 : i32, i32
  }
}

module attributes {stable_mosaic.version = 11 : i64} {
  func.func @_matmul_kernel(%arg0: i32, %arg1: i32, %arg2: i32, %arg3: memref<16x128xf32, #tpu.memory_space<vmem>>, %arg4: memref<128x512xf32, #tpu.memory_space<vmem>>, %arg5: memref<1x512xf32, #tpu.memory_space<vmem>>, %arg6: memref<16x512xf32, #tpu.memory_space<vmem>>, %arg7: memref<16x512xf32, #tpu.memory_space<vmem>>) attributes {dimension_semantics = [#tpu.dimension_semantics<parallel>, #tpu.dimension_semantics<parallel>, #tpu.dimension_semantics<arbitrary>], iteration_bounds = array<i64: 1, 1, 1>, scalar_prefetch = 0 : i64, scratch_operands = 1 : i64, tpu.core_type = #tpu.core_type<tc>, window_params = [{transform_indices = @transform_0, window_bounds = array<i64: 16, 128>}, {transform_indices = @transform_1, window_bounds = array<i64: 128, 512>}, {transform_indices = @transform_2, window_bounds = array<i64: 1, 512>}, {transform_indices = @transform_3, window_bounds = array<i64: 16, 512>}]} {
    %c0_i32 = arith.constant 0 : i32
    %0 = arith.cmpi eq, %arg2, %c0_i32 : i32
    %1 = arith.extui %0 : i1 to i32
    %c0_i32_0 = arith.constant 0 : i32
    %2 = arith.cmpi ne, %1, %c0_i32_0 : i32
    scf.if %2 {
      %c0_10 = arith.constant 0 : index
      %c0_11 = arith.constant 0 : index
      %12 = vector.load %arg5[%c0_10, %c0_11] : memref<1x512xf32, #tpu.memory_space<vmem>>, vector<1x512xf32>
      %13 = vector.shape_cast %12 : vector<1x512xf32> to vector<1x512xf32>
      %14 = vector.broadcast %13 : vector<1x512xf32> to vector<16x512xf32>
      %c0_12 = arith.constant 0 : index
      %c0_13 = arith.constant 0 : index
      %15 = vector.load %arg7[%c0_12, %c0_13] : memref<16x512xf32, #tpu.memory_space<vmem>>, vector<16x512xf32>
      tpu.vector_store %arg7[%c0_12, %c0_13], %14 {strides = array<i32>} : memref<16x512xf32, #tpu.memory_space<vmem>>, vector<16x512xf32>,
    } else {
    }
    %c0 = arith.constant 0 : index
    %c0_1 = arith.constant 0 : index
    %3 = vector.load %arg7[%c0, %c0_1] : memref<16x512xf32, #tpu.memory_space<vmem>>, vector<16x512xf32>
    %c0_2 = arith.constant 0 : index
    %c0_3 = arith.constant 0 : index
    %4 = vector.load %arg3[%c0_2, %c0_3] : memref<16x128xf32, #tpu.memory_space<vmem>>, vector<16x128xf32>
    %c0_4 = arith.constant 0 : index
    %c0_5 = arith.constant 0 : index
    %5 = vector.load %arg4[%c0_4, %c0_5] : memref<128x512xf32, #tpu.memory_space<vmem>>, vector<128x512xf32>
    %cst = arith.constant dense<0.000000e+00> : vector<16x512xf32>
    %6 = tpu.matmul %4, %5, %cst {dimension_numbers = #tpu.dot_dimension_numbers<[1], [0], [0], [1], [0, 0, 1, 1], [], []>} : vector<16x128xf32>, vector<128x512xf32>, vector<16x512xf32> -> vector<16x512xf32>
    %7 = arith.addf %3, %6 : vector<16x512xf32>
    %c0_6 = arith.constant 0 : index
    %c0_7 = arith.constant 0 : index
    %8 = vector.load %arg7[%c0_6, %c0_7] : memref<16x512xf32, #tpu.memory_space<vmem>>, vector<16x512xf32>
    tpu.vector_store %arg7[%c0_6, %c0_7], %7 {strides = array<i32>} : memref<16x512xf32, #tpu.memory_space<vmem>>, vector<16x512xf32>,
    %c0_i32_8 = arith.constant 0 : i32
    %9 = arith.cmpi eq, %arg2, %c0_i32_8 : i32
    %10 = arith.extui %9 : i1 to i32
    %c0_i32_9 = arith.constant 0 : i32
    %11 = arith.cmpi ne, %10, %c0_i32_9 : i32
    scf.if %11 {
      %c0_10 = arith.constant 0 : index
      %c0_11 = arith.constant 0 : index
      %12 = vector.load %arg7[%c0_10, %c0_11] : memref<16x512xf32, #tpu.memory_space<vmem>>, vector<16x512xf32>
      %c0_12 = arith.constant 0 : index
      %c0_13 = arith.constant 0 : index
      %13 = vector.load %arg6[%c0_12, %c0_13] : memref<16x512xf32, #tpu.memory_space<vmem>>, vector<16x512xf32>
      tpu.vector_store %arg6[%c0_12, %c0_13], %12 {strides = array<i32>} : memref<16x512xf32, #tpu.memory_space<vmem>>, vector<16x512xf32>,
    } else {
    }
    return
  }
  func.func @transform_0(%arg0: i32, %arg1: i32, %arg2: i32) -> (i32, i32) {
    %c0_i32 = arith.constant 0 : i32
    return %arg0, %arg2 : i32, i32
  }
  func.func @transform_1(%arg0: i32, %arg1: i32, %arg2: i32) -> (i32, i32) {
    %c0_i32 = arith.constant 0 : i32
    return %arg2, %arg1 : i32, i32
  }
  func.func @transform_2(%arg0: i32, %arg1: i32, %arg2: i32) -> (i32, i32) {
    %c0_i32 = arith.constant 0 : i32
    %c0_i32_0 = arith.constant 0 : i32
    return %c0_i32, %arg1 : i32, i32
  }
  func.func @transform_3(%arg0: i32, %arg1: i32, %arg2: i32) -> (i32, i32) {
    %c0_i32 = arith.constant 0 : i32
    return %arg0, %arg1 : i32, i32
  }
}

module attributes {stable_mosaic.version = 11 : i64} {
  func.func @_attn_kernel(%arg0: i32, %arg1: memref<4x7x128xf32, #tpu.memory_space<vmem>>, %arg2: memref<4x8x128xf32, #tpu.memory_space<vmem>>, %arg3: memref<4x8x128xf32, #tpu.memory_space<vmem>>, %arg4: memref<4x7x128xf32, #tpu.memory_space<vmem>>) attributes {dimension_semantics = [#tpu.dimension_semantics<parallel>], iteration_bounds = array<i64: 1>, scalar_prefetch = 0 : i64, scratch_operands = 0 : i64, tpu.core_type = #tpu.core_type<tc>, window_params = [{transform_indices = @transform_0, window_bounds = array<i64: 4, 7, 128>}, {transform_indices = @transform_1, window_bounds = array<i64: 4, 8, 128>}, {transform_indices = @transform_2, window_bounds = array<i64: 4, 8, 128>}, {transform_indices = @transform_3, window_bounds = array<i64: 4, 7, 128>}]} {
    %c0 = arith.constant 0 : index
    %c0_0 = arith.constant 0 : index
    %c0_1 = arith.constant 0 : index
    %0 = vector.load %arg1[%c0, %c0_0, %c0_1] : memref<4x7x128xf32, #tpu.memory_space<vmem>>, vector<4x7x128xf32>
    %c0_2 = arith.constant 0 : index
    %c0_3 = arith.constant 0 : index
    %c0_4 = arith.constant 0 : index
    %1 = vector.load %arg2[%c0_2, %c0_3, %c0_4] : memref<4x8x128xf32, #tpu.memory_space<vmem>>, vector<4x8x128xf32>
    %c0_5 = arith.constant 0 : index
    %c0_6 = arith.constant 0 : index
    %c0_7 = arith.constant 0 : index
    %2 = vector.load %arg3[%c0_5, %c0_6, %c0_7] : memref<4x8x128xf32, #tpu.memory_space<vmem>>, vector<4x8x128xf32>
    "tpu.trace_start"() <{level = 10 : i32, message = "hqd,hkd->hqk"}> : () -> ()
    %cst = arith.constant dense<0.000000e+00> : vector<4x7x8xf32>
    %3 = tpu.matmul %0, %1, %cst {dimension_numbers = #tpu.dot_dimension_numbers<[2], [2], [1], [1], [0, 0, 0, 1, 1, 1], [0], [0]>} : vector<4x7x128xf32>, vector<4x8x128xf32>, vector<4x7x8xf32> -> vector<4x7x8xf32>
    "tpu.trace_stop"() : () -> ()
    %cst_8 = arith.constant 2.500000e-01 : f32
    %4 = vector.broadcast %cst_8 : f32 to vector<4x7x8xf32>
    %5 = arith.mulf %3, %4 : vector<4x7x8xf32>
    %cst_9 = arith.constant dense<0xFF800000> : vector<4x7xf32>
    %6 = vector.multi_reduction <maximumf>, %5, %cst_9 [2] : vector<4x7x8xf32> to vector<4x7xf32>
    %7 = vector.shape_cast %6 : vector<4x7xf32> to vector<4x7x1xf32>
    %8 = vector.broadcast %7 : vector<4x7x1xf32> to vector<4x7x8xf32>
    %9 = arith.subf %5, %8 : vector<4x7x8xf32>
    %10 = math.exp %9 : vector<4x7x8xf32>
    %cst_10 = arith.constant dense<0.000000e+00> : vector<4x7xf32>
    %11 = vector.multi_reduction <add>, %10, %cst_10 [2] : vector<4x7x8xf32> to vector<4x7xf32>
    %12 = vector.shape_cast %11 : vector<4x7xf32> to vector<4x7x1xf32>
    "tpu.trace_start"() <{level = 10 : i32, message = "hqk,hkd->hqd"}> : () -> ()
    %cst_11 = arith.constant dense<0.000000e+00> : vector<4x7x128xf32>
    %13 = tpu.matmul %10, %2, %cst_11 {dimension_numbers = #tpu.dot_dimension_numbers<[2], [1], [1], [2], [0, 0, 0, 1, 1, 2], [0], [0]>} : vector<4x7x8xf32>, vector<4x8x128xf32>, vector<4x7x128xf32> -> vector<4x7x128xf32>
    "tpu.trace_stop"() : () -> ()
    %14 = tpu.reciprocal %12 {approx = true} : vector<4x7x1xf32> -> vector<4x7x1xf32>
    %15 = vector.broadcast %14 : vector<4x7x1xf32> to vector<4x7x128xf32>
    %16 = arith.mulf %13, %15 : vector<4x7x128xf32>
    %c0_12 = arith.constant 0 : index
    %c0_13 = arith.constant 0 : index
    %c0_14 = arith.constant 0 : index
    %17 = vector.load %arg4[%c0_12, %c0_13, %c0_14] : memref<4x7x128xf32, #tpu.memory_space<vmem>>, vector<4x7x128xf32>
    tpu.vector_store %arg4[%c0_12, %c0_13, %c0_14], %16 {strides = array<i32>} : memref<4x7x128xf32, #tpu.memory_space<vmem>>, vector<4x7x128xf32>,
    return
  }
  func.func @transform_0(%arg0: i32) -> (i32, i32, i32) {
    %c0_i32 = arith.constant 0 : i32
    %c0_i32_0 = arith.constant 0 : i32
    %c0_i32_1 = arith.constant 0 : i32
    return %arg0, %c0_i32, %c0_i32_0 : i32, i32, i32
  }
  func.func @transform_1(%arg0: i32) -> (i32, i32, i32) {
    %c0_i32 = arith.constant 0 : i32
    %c0_i32_0 = arith.constant 0 : i32
    %c0_i32_1 = arith.constant 0 : i32
    return %arg0, %c0_i32, %c0_i32_0 : i32, i32, i32
  }
  func.func @transform_2(%arg0: i32) -> (i32, i32, i32) {
    %c0_i32 = arith.constant 0 : i32
    %c0_i32_0 = arith.constant 0 : i32
    %c0_i32_1 = arith.constant 0 : i32
    return %arg0, %c0_i32, %c0_i32_0 : i32, i32, i32
  }
  func.func @transform_3(%arg0: i32) -> (i32, i32, i32) {
    %c0_i32 = arith.constant 0 : i32
    %c0_i32_0 = arith.constant 0 : i32
    %c0_i32_1 = arith.constant 0 : i32
    return %arg0, %c0_i32, %c0_i32_0 : i32, i32, i32
  }
}

module attributes {stable_mosaic.version = 11 : i64} {
  func.func @_matmul_kernel(%arg0: i32, %arg1: i32, %arg2: i32, %arg3: memref<16x128xf32, #tpu.memory_space<vmem>>, %arg4: memref<128x128xf32, #tpu.memory_space<vmem>>, %arg5: memref<1x128xf32, #tpu.memory_space<vmem>>, %arg6: memref<16x128xf32, #tpu.memory_space<vmem>>, %arg7: memref<16x128xf32, #tpu.memory_space<vmem>>) attributes {dimension_semantics = [#tpu.dimension_semantics<parallel>, #tpu.dimension_semantics<parallel>, #tpu.dimension_semantics<arbitrary>], iteration_bounds = array<i64: 1, 1, 1>, scalar_prefetch = 0 : i64, scratch_operands = 1 : i64, tpu.core_type = #tpu.core_type<tc>, window_params = [{transform_indices = @transform_0, window_bounds = array<i64: 16, 128>}, {transform_indices = @transform_1, window_bounds = array<i64: 128, 128>}, {transform_indices = @transform_2, window_bounds = array<i64: 1, 128>}, {transform_indices = @transform_3, window_bounds = array<i64: 16, 128>}]} {
    %c0_i32 = arith.constant 0 : i32
    %0 = arith.cmpi eq, %arg2, %c0_i32 : i32
    %1 = arith.extui %0 : i1 to i32
    %c0_i32_0 = arith.constant 0 : i32
    %2 = arith.cmpi ne, %1, %c0_i32_0 : i32
    scf.if %2 {
      %c0_10 = arith.constant 0 : index
      %c0_11 = arith.constant 0 : index
      %12 = vector.load %arg5[%c0_10, %c0_11] : memref<1x128xf32, #tpu.memory_space<vmem>>, vector<1x128xf32>
      %13 = vector.shape_cast %12 : vector<1x128xf32> to vector<1x128xf32>
      %14 = vector.broadcast %13 : vector<1x128xf32> to vector<16x128xf32>
      %c0_12 = arith.constant 0 : index
      %c0_13 = arith.constant 0 : index
      %15 = vector.load %arg7[%c0_12, %c0_13] : memref<16x128xf32, #tpu.memory_space<vmem>>, vector<16x128xf32>
      tpu.vector_store %arg7[%c0_12, %c0_13], %14 {strides = array<i32>} : memref<16x128xf32, #tpu.memory_space<vmem>>, vector<16x128xf32>,
    } else {
    }
    %c0 = arith.constant 0 : index
    %c0_1 = arith.constant 0 : index
    %3 = vector.load %arg7[%c0, %c0_1] : memref<16x128xf32, #tpu.memory_space<vmem>>, vector<16x128xf32>
    %c0_2 = arith.constant 0 : index
    %c0_3 = arith.constant 0 : index
    %4 = vector.load %arg3[%c0_2, %c0_3] : memref<16x128xf32, #tpu.memory_space<vmem>>, vector<16x128xf32>
    %c0_4 = arith.constant 0 : index
    %c0_5 = arith.constant 0 : index
    %5 = vector.load %arg4[%c0_4, %c0_5] : memref<128x128xf32, #tpu.memory_space<vmem>>, vector<128x128xf32>
    %cst = arith.constant dense<0.000000e+00> : vector<16x128xf32>
    %6 = tpu.matmul %4, %5, %cst {dimension_numbers = #tpu.dot_dimension_numbers<[1], [0], [0], [1], [0, 0, 1, 1], [], []>} : vector<16x128xf32>, vector<128x128xf32>, vector<16x128xf32> -> vector<16x128xf32>
    %7 = arith.addf %3, %6 : vector<16x128xf32>
    %c0_6 = arith.constant 0 : index
    %c0_7 = arith.constant 0 : index
    %8 = vector.load %arg7[%c0_6, %c0_7] : memref<16x128xf32, #tpu.memory_space<vmem>>, vector<16x128xf32>
    tpu.vector_store %arg7[%c0_6, %c0_7], %7 {strides = array<i32>} : memref<16x128xf32, #tpu.memory_space<vmem>>, vector<16x128xf32>,
    %c0_i32_8 = arith.constant 0 : i32
    %9 = arith.cmpi eq, %arg2, %c0_i32_8 : i32
    %10 = arith.extui %9 : i1 to i32
    %c0_i32_9 = arith.constant 0 : i32
    %11 = arith.cmpi ne, %10, %c0_i32_9 : i32
    scf.if %11 {
      %c0_10 = arith.constant 0 : index
      %c0_11 = arith.constant 0 : index
      %12 = vector.load %arg7[%c0_10, %c0_11] : memref<16x128xf32, #tpu.memory_space<vmem>>, vector<16x128xf32>
      %c0_12 = arith.constant 0 : index
      %c0_13 = arith.constant 0 : index
      %13 = vector.load %arg6[%c0_12, %c0_13] : memref<16x128xf32, #tpu.memory_space<vmem>>, vector<16x128xf32>
      tpu.vector_store %arg6[%c0_12, %c0_13], %12 {strides = array<i32>} : memref<16x128xf32, #tpu.memory_space<vmem>>, vector<16x128xf32>,
    } else {
    }
    return
  }
  func.func @transform_0(%arg0: i32, %arg1: i32, %arg2: i32) -> (i32, i32) {
    %c0_i32 = arith.constant 0 : i32
    return %arg0, %arg2 : i32, i32
  }
  func.func @transform_1(%arg0: i32, %arg1: i32, %arg2: i32) -> (i32, i32) {
    %c0_i32 = arith.constant 0 : i32
    return %arg2, %arg1 : i32, i32
  }
  func.func @transform_2(%arg0: i32, %arg1: i32, %arg2: i32) -> (i32, i32) {
    %c0_i32 = arith.constant 0 : i32
    %c0_i32_0 = arith.constant 0 : i32
    return %c0_i32, %arg1 : i32, i32
  }
  func.func @transform_3(%arg0: i32, %arg1: i32, %arg2: i32) -> (i32, i32) {
    %c0_i32 = arith.constant 0 : i32
    return %arg0, %arg1 : i32, i32
  }
}

</mosaic_0001>

<llo_original>
// kernel: translation_transformer_forward.44
$region0: #{translation_transformer_forward.44}
  #allocation0 [shape = 'u32[]', space=smem, size = 0x4, offset = 0x4, fixed_abs, tag = 'smem constant byte address 0x4 - core index']
  #allocation1 [shape = 'u32[144,128]{1,0:T(1,128)}', space=vmem, size = 0x12000, scoped, tag = 'internal scratch']
  #allocation2 [shape = 'f32[16,128]{1,0:T(8,128)}', space=vmem, size = 0x2000, scoped, tag = 'scratch operand']
  %s0 = inlined_call_operand.vmem [shape: f32[16,256], index: 0, kind: input, shape index: {}]
  %s1 = inlined_call_operand.vmem [shape: f32[256,128], index: 1, kind: input, shape index: {}]
  %s2 = inlined_call_operand.vmem [shape: f32[1,128], index: 2, kind: input, shape index: {}]
  %s3 = inlined_call_operand.vmem [shape: f32[16,128], index: 3, kind: input, shape index: {}]
  %s4 = inlined_call_operand.vmem [shape: f32[1,128], index: 4, kind: input, shape index: {}]
  %s5 = inlined_call_operand.vmem [shape: f32[1,128], index: 5, kind: input, shape index: {}]
  %s6 = inlined_call_operand.vmem [shape: f32[16,128], index: 6, kind: output, shape index: {}]
  %s7 = sld [smem:[#allocation0]]
  $region42: #{translation_transformer_forward.44} parent=0
    _
  %s9 = ssub.s32 1, %s7
  %s10 = scalar_select 0, %s9, %s7
  // Predicated region
  $region2: #{translation_transformer_forward.44} parent=0 // pred_check
    _
  $region3: #{translation_transformer_forward.44} parent=0 // pred_check_branch
    %12 = sbr.rel (0) target = $region5
  $region4: #{translation_transformer_forward.44} parent=0 // pred_region
    _
  $region5: #{translation_transformer_forward.44} parent=0 // pred_fallthru
    _
  // Predicated region
  $region6: #{translation_transformer_forward.44} parent=0 // pred_check
    _
  $region7: #{translation_transformer_forward.44} parent=0 // pred_check_branch
    %14 = sbr.rel (0) target = $region9
  $region8: #{translation_transformer_forward.44} parent=0 // pred_region
    _
  $region9: #{translation_transformer_forward.44} parent=0 // pred_fallthru
    _
  // Predicated region
  $region10: #{translation_transformer_forward.44} parent=0 // pred_check
    _
  $region11: #{translation_transformer_forward.44} parent=0 // pred_check_branch
    %16 = sbr.rel (0) target = $region13
  $region12: #{translation_transformer_forward.44} parent=0 // pred_region
    _
  $region13: #{translation_transformer_forward.44} parent=0 // pred_fallthru
    _
  // Predicated region
  $region14: #{translation_transformer_forward.44} parent=0 // pred_check
    _
  $region15: #{translation_transformer_forward.44} parent=0 // pred_check_branch
    %18 = sbr.rel (0) target = $region17
  $region16: #{translation_transformer_forward.44} parent=0 // pred_region
    _
  $region17: #{translation_transformer_forward.44} parent=0 // pred_fallthru
    _
  // Predicated region
  $region18: #{translation_transformer_forward.44} parent=0 // pred_check
    _
  $region19: #{translation_transformer_forward.44} parent=0 // pred_check_branch
    %20 = sbr.rel (0) target = $region21
  $region20: #{translation_transformer_forward.44} parent=0 // pred_region
    _
  $region21: #{translation_transformer_forward.44} parent=0 // pred_fallthru
    _
  // Predicated region
  $region22: #{translation_transformer_forward.44} parent=0 // pred_check
    _
  $region23: #{translation_transformer_forward.44} parent=0 // pred_check_branch
    %22 = sbr.rel (0) target = $region25
  $region24: #{translation_transformer_forward.44} parent=0 // pred_region
    _
  $region25: #{translation_transformer_forward.44} parent=0 // pred_fallthru
    _
  %p23 = scmp.eq.s32.totalorder 0, 0
  // Predicated region
  $region26: #{translation_transformer_forward.44} parent=0 // pred_check
    %p24 = pneg %p23
  $region27: #{translation_transformer_forward.44} parent=0 // pred_check_branch
    %26 = sbr.rel (%p24) target = $region29
  $region28: #{translation_transformer_forward.44} parent=0 // pred_region
    %v27 = vld [vmem:[%s2] sm:$0x1]
    %v29 = vlaneseq
    %v30 = vshrl.u32 %v29, 7
    %v31 = vsub.s32 0, %v30
    %v32 = vrot.slane %v27, %v31
    %34 = vst [vmem:[#allocation2] sm:$0xff] %v32
    %35 = vst [vmem:[#allocation2 + $0x8] sm:$0xff] %v32
  $region29: #{translation_transformer_forward.44} parent=0 // pred_fallthru
    _
  %v36 = vld [vmem:[#allocation2] sm:$0xff]
  %v37 = vld [vmem:[#allocation2 + $0x8] sm:$0xff]
  %v38 = vld [vmem:[%s0] sm:$0xff]
  %v39 = vld [vmem:[%s0 + $0x8] sm:$0xff]
  %v40 = vld [vmem:[%s0 + $0x10] sm:$0xff]
  %v41 = vld [vmem:[%s0 + $0x18] sm:$0xff]
  %v42 = vld [vmem:[%s1] sm:$0xff]
  %v43 = vld [vmem:[%s1 + $0x8] sm:$0xff]
  %v44 = vld [vmem:[%s1 + $0x10] sm:$0xff]
  %v45 = vld [vmem:[%s1 + $0x18] sm:$0xff]
  %v46 = vld [vmem:[%s1 + $0x20] sm:$0xff]
  %v47 = vld [vmem:[%s1 + $0x28] sm:$0xff]
  %v48 = vld [vmem:[%s1 + $0x30] sm:$0xff]
  %v49 = vld [vmem:[%s1 + $0x38] sm:$0xff]
  %v50 = vld [vmem:[%s1 + $0x40] sm:$0xff]
  %v51 = vld [vmem:[%s1 + $0x48] sm:$0xff]
  %v52 = vld [vmem:[%s1 + $0x50] sm:$0xff]
  %v53 = vld [vmem:[%s1 + $0x58] sm:$0xff]
  %v54 = vld [vmem:[%s1 + $0x60] sm:$0xff]
  %v55 = vld [vmem:[%s1 + $0x68] sm:$0xff]
  %v56 = vld [vmem:[%s1 + $0x70] sm:$0xff]
  %v57 = vld [vmem:[%s1 + $0x78] sm:$0xff]
  %v58 = vld [vmem:[%s1 + $0x80] sm:$0xff]
  %v59 = vld [vmem:[%s1 + $0x88] sm:$0xff]
  %v60 = vld [vmem:[%s1 + $0x90] sm:$0xff]
  %v61 = vld [vmem:[%s1 + $0x98] sm:$0xff]
  %v62 = vld [vmem:[%s1 + $0xa0] sm:$0xff]
  %v63 = vld [vmem:[%s1 + $0xa8] sm:$0xff]
  %v64 = vld [vmem:[%s1 + $0xb0] sm:$0xff]
  %v65 = vld [vmem:[%s1 + $0xb8] sm:$0xff]
  %v66 = vld [vmem:[%s1 + $0xc0] sm:$0xff]
  %v67 = vld [vmem:[%s1 + $0xc8] sm:$0xff]
  %v68 = vld [vmem:[%s1 + $0xd0] sm:$0xff]
  %v69 = vld [vmem:[%s1 + $0xd8] sm:$0xff]
  %v70 = vld [vmem:[%s1 + $0xe0] sm:$0xff]
  %v71 = vld [vmem:[%s1 + $0xe8] sm:$0xff]
  %v72 = vld [vmem:[%s1 + $0xf0] sm:$0xff]
  %v73 = vld [vmem:[%s1 + $0xf8] sm:$0xff]
  %74 = vmatprep.subr.mxu0 0.0
  %75 = vmatpush1.msra.mxu0 %v42
  %76 = vmatprep.subr.mxu0 0.0
  %77 = vmatpush1.msra.mxu0 %v43
  %78 = vmatprep.subr.mxu0 0.0
  %79 = vmatpush1.msra.mxu0 %v44
  %80 = vmatprep.subr.mxu0 0.0
  %81 = vmatpush1.msra.mxu0 %v45
  %82 = vmatprep.subr.mxu0 0.0
  %83 = vmatpush1.msra.mxu0 %v46
  %84 = vmatprep.subr.mxu0 0.0
  %85 = vmatpush1.msra.mxu0 %v47
  %86 = vmatprep.subr.mxu0 0.0
  %87 = vmatpush1.msra.mxu0 %v48
  %88 = vmatprep.subr.mxu0 0.0
  %89 = vmatpush1.msra.mxu0 %v49
  %90 = vmatprep.subr.mxu0 0.0
  %91 = vmatpush1.msra.mxu0 %v50
  %92 = vmatprep.subr.mxu0 0.0
  %93 = vmatpush1.msra.mxu0 %v51
  %94 = vmatprep.subr.mxu0 0.0
  %95 = vmatpush1.msra.mxu0 %v52
  %96 = vmatprep.subr.mxu0 0.0
  %97 = vmatpush1.msra.mxu0 %v53
  %98 = vmatprep.subr.mxu0 0.0
  %99 = vmatpush1.msra.mxu0 %v54
  %100 = vmatprep.subr.mxu0 0.0
  %101 = vmatpush1.msra.mxu0 %v55
  %102 = vmatprep.subr.mxu0 0.0
  %103 = vmatpush1.msra.mxu0 %v56
  %104 = vmatprep.subr.mxu0 0.0
  %105 = vmatpush1.msra.mxu0 %v57
  %106 = vmatprep.subr.mxu0 0.0
  %107 = vmatpush1.msra.mxu0 %v58
  %108 = vmatprep.subr.mxu0 0.0
  %109 = vmatpush1.msra.mxu0 %v59
  %110 = vmatprep.subr.mxu0 0.0
  %111 = vmatpush1.msra.mxu0 %v60
  %112 = vmatprep.subr.mxu0 0.0
  %113 = vmatpush1.msra.mxu0 %v61
  %114 = vmatprep.subr.mxu0 0.0
  %115 = vmatpush1.msra.mxu0 %v62
  %116 = vmatprep.subr.mxu0 0.0
  %117 = vmatpush1.msra.mxu0 %v63
  %118 = vmatprep.subr.mxu0 0.0
  %119 = vmatpush1.msra.mxu0 %v64
  %120 = vmatprep.subr.mxu0 0.0
  %121 = vmatpush1.msra.mxu0 %v65
  %122 = vmatprep.subr.mxu0 0.0
  %123 = vmatpush1.msra.mxu0 %v66
  %124 = vmatprep.subr.mxu0 0.0
  %125 = vmatpush1.msra.mxu0 %v67
  %126 = vmatprep.subr.mxu0 0.0
  %127 = vmatpush1.msra.mxu0 %v68
  %128 = vmatprep.subr.mxu0 0.0
  %129 = vmatpush1.msra.mxu0 %v69
  %130 = vmatprep.subr.mxu0 0.0
  %131 = vmatpush1.msra.mxu0 %v70
  %132 = vmatprep.subr.mxu0 0.0
  %133 = vmatpush1.msra.mxu0 %v71
  %134 = vmatprep.subr.mxu0 0.0
  %135 = vmatpush1.msra.mxu0 %v72
  %136 = vmatprep.subr.mxu0 0.0
  %137 = vmatpush1.msra.mxu0 %v73
  %138 = vmatprep.mubr.f32.mxu0 %v39
  %139 = vmatmul.mubr.f32.gmra.mrb[0].mxu0 %v38
  %v140 = vpop.f32.mrb[0].mxu0
  %v141 = vadd.f32 0.0, %v140
  %v142 = vpop.f32.mrb[0].mxu0
  %143 = vmatprep.mubr.f32.mxu0 %v41
  %144 = vmatmul.mubr.f32.gmra.mrb[0].mxu0 %v40
  %v145 = vpop.f32.mrb[0].mxu0
  %v146 = vadd.f32 0.0, %v145
  %v147 = vpop.f32.mrb[0].mxu0
  %148 = vdwg.mxu0
  %v149 = vadd.f32 %v36, %v141
  %v150 = vadd.f32 %v37, %v146
  %151 = vst [vmem:[#allocation2] sm:$0xff] %v149
  %152 = vst [vmem:[#allocation2 + $0x8] sm:$0xff] %v150
  // Predicated region
  $region30: #{translation_transformer_forward.44} parent=0 // pred_check
    %p153 = pneg %p23
  $region31: #{translation_transformer_forward.44} parent=0 // pred_check_branch
    %155 = sbr.rel (%p153) target = $region33
  $region32: #{translation_transformer_forward.44} parent=0 // pred_region
    %v156 = vld [vmem:[#allocation2] sm:$0xff]
    %v157 = vld [vmem:[#allocation2 + $0x8] sm:$0xff]
    %v158 = vld [vmem:[%s3] sm:$0xff]
    %v159 = vld [vmem:[%s3 + $0x8] sm:$0xff]
    %v160 = vadd.f32 %v156, %v158
    %v161 = vadd.f32 %v157, %v159
    %162 = vadd.xlane.f32.xlu0 %v160
    %v163 = vpop.xlane.xlu0 %162
    %164 = vadd.xlane.f32.xlu0 %v161
    %v165 = vpop.xlane.xlu0 %164
    %v166 = vmul.f32 %v163, 0.03125
    %v167 = vmul.f32 %v165, 0.03125
    %v168 = vsub.f32 %v160, %v166
    %v169 = vsub.f32 %v161, %v167
    %v170 = vmul.f32 %v168, %v168
    %v171 = vmul.f32 %v169, %v169
    %172 = vadd.xlane.f32.xlu0 %v170
    %v173 = vpop.xlane.xlu0 %172
    %174 = vadd.xlane.f32.xlu0 %v171
    %v175 = vpop.xlane.xlu0 %174
    %v176 = vmul.f32 %v166, 96.0
    %v177 = vmul.f32 %v167, 96.0
    %v178 = vmul.f32 %v176, %v166
    %v179 = vmul.f32 %v177, %v167
    %v180 = vsub.f32 %v173, %v178
    %v181 = vsub.f32 %v175, %v179
    %v182 = vmul.f32 %v180, 0.03125
    %v183 = vmul.f32 %v181, 0.03125
    %v184 = vadd.f32 %v182, 1e-05
    %v185 = vadd.f32 %v183, 1e-05
    %v186 = vrsqrt.pop %v184
    %v187 = vrsqrt.pop %v185
    %v188 = vmul.f32 %v168, %v186
    %v189 = vmul.f32 %v169, %v187
    %v190 = vld [vmem:[%s4] sm:$0x1]
    %v192 = vlaneseq
    %v193 = vshrl.u32 %v192, 7
    %v194 = vsub.s32 0, %v193
    %v195 = vrot.slane %v190, %v194
    %v197 = vmul.f32 %v188, %v195
    %v198 = vmul.f32 %v189, %v195
    %v199 = vld [vmem:[%s5] sm:$0x1]
    %v201 = vlaneseq
    %v202 = vshrl.u32 %v201, 7
    %v203 = vsub.s32 0, %v202
    %v204 = vrot.slane %v199, %v203
    %v206 = vadd.f32 %v197, %v204
    %v207 = vadd.f32 %v198, %v204
    %208 = vst [vmem:[%s6] sm:$0xff] %v206
    %209 = vst [vmem:[%s6 + $0x8] sm:$0xff] %v207
  $region33: #{translation_transformer_forward.44} parent=0 // pred_fallthru
    _
  // Predicated region
  $region34: #{translation_transformer_forward.44} parent=0 // pred_check
    _
  $region35: #{translation_transformer_forward.44} parent=0 // pred_check_branch
    %211 = sbr.rel (0) target = $region37
  $region36: #{translation_transformer_forward.44} parent=0 // pred_region
    _
  $region37: #{translation_transformer_forward.44} parent=0 // pred_fallthru
    _
  // Predicated region
  $region38: #{translation_transformer_forward.44} parent=0 // pred_check
    _
  $region39: #{translation_transformer_forward.44} parent=0 // pred_check_branch
    %213 = sbr.rel (0) target = $region41
  $region40: #{translation_transformer_forward.44} parent=0 // pred_region
    _
  $region41: #{translation_transformer_forward.44} parent=0 // pred_fallthru
    _

// kernel: translation_transformer_forward.42
$region0: #{translation_transformer_forward.42}
  #allocation0 [shape = 'u32[]', space=smem, size = 0x4, offset = 0x4, fixed_abs, tag = 'smem constant byte address 0x4 - core index']
  #allocation1 [shape = 'u32[144,128]{1,0:T(1,128)}', space=vmem, size = 0x12000, scoped, tag = 'internal scratch']
  #allocation2 [shape = 'f32[16,256]{1,0:T(8,128)}', space=vmem, size = 0x4000, scoped, tag = 'scratch operand']
  %s0 = inlined_call_operand.vmem [shape: f32[16,128], index: 0, kind: input, shape index: {}]
  %s1 = inlined_call_operand.hbm [shape: f32[128,768], index: 1, kind: input, shape index: {}]
  %s2 = inlined_call_operand.vmem [shape: f32[1,768], index: 2, kind: input, shape index: {}]
  %s3 = inlined_call_operand.vmem [shape: f32[16,768], index: 3, kind: output, shape index: {}]
  %s4 = sld [smem:[#allocation0]]
  $region76: #{translation_transformer_forward.42} parent=0
    _
  %s6 = ssub.s32 1, %s4
  %s7 = scalar_select 0, %s6, %s4
  $region1: #{translation_transformer_forward.42} parent=0
    #allocation3 [shape = 'u8[262144]{0}', space=vmem, size = 0x40000, scoped, tag = 'input window, operand 1']
    #allocation4 [shape = 's32[2]{0}', space=sflag, size = 0x8, scoped, tag = 'scoped memory for translation_transformer_forward.42']
    #allocation5 [shape = 'u8[32768]{0}', space=vmem, size = 0x8000, scoped, tag = 'output window, operand 0']
    %8 = vsyncpa [#allocation4], 0
    %s9 = scalar_lea.sflag [#allocation4], 1
    %10 = vsyncpa %s9, 0
    loop: start=0, step=1, limit=5
    $region2: #{translation_transformer_forward.42} parent=1 // loop_pre_header
      _
    $region3: #{translation_transformer_forward.42} parent=1 // loop_header
      %s12 = sphi 0, %s16
      %p13 = scmp.ge.s32.totalorder %s12, 5
      %s19 = sphi 0, %s38
      %s20 = sphi 0, %s34
      %s21 = sphi 0, %s30
      %s22 = sphi 0, %s19
      %s23 = sphi 0, %s20
      %s24 = sphi 0, %s21
      %s25 = sphi 0, %s22
      %s26 = sphi 0, %s23
      %s27 = sphi 0, %s24
      %s43 = sphi 0, %s45
      %s46 = sphi 0, %s43
      %s47 = sphi 0, %s46
      %s63 = sphi 0, %s47
      %s71 = sphi 0, %s73
      %s74 = sphi 0, %s71
      %s75 = sphi 0, %s74
      %s91 = sphi 0, %s75
      %s97 = sphi 0, %s99
      %s100 = sphi 0, %s97
      %s101 = sphi 0, %s100
      %s117 = sphi 0, %s101
      %s125 = sphi 0, %s127
      %s128 = sphi 0, %s125
      %s129 = sphi 0, %s128
      %s145 = sphi 0, %s129
    $region4: #{translation_transformer_forward.42} parent=1 // loop_header_branch
      %15 = sbr.rel (%p13) target = $region8
    $region5: #{translation_transformer_forward.42} parent=1 // loop_body
      %s17 = ssub.s32 %s12, 1
      %s18 = ssub.s32 %s12, 2
      %s28 = sadd.s32 1, %s21
      %p29 = scmp.ge.s32.totalorder %s28, 1
      %s30 = scalar_select %p29, 0, %s28
      %s31 = sadd.s32 1, %s20
      %s32 = scalar_select %p29, %s31, %s20
      %p33 = scmp.ge.s32.totalorder %s32, 3
      %s34 = scalar_select %p33, 0, %s32
      %s35 = sadd.s32 1, %s19
      %s36 = scalar_select %p33, %s35, %s19
      %p37 = scmp.ge.s32.totalorder %s36, 1
      %s38 = scalar_select %p37, 0, %s36
      %s39 = ssub.s32 %s19, %s38
      %s40 = ssub.s32 %s21, %s30
      %s41 = sor.u32 %s39, %s40
      %p42 = scmp.eq.s32.totalorder %s41, 0
      %s44 = sadd.s32 %s43, 1
      %s45 = scalar_select %p42, %s43, %s44
      %p48 = pneg %p42
      %p49 = scmp.eq.s32.totalorder %s12, 2
      %p50 = por %p48, %p49
      %p51 = scmp.ne.s32.totalorder %s43, %s46
      %p52 = scmp.eq.s32.totalorder %s12, 0
      %p53 = por %p51, %p52
      %p54 = scmp.ne.s32.totalorder %s43, %s46
      %p55 = scmp.eq.s32.totalorder %s17, 2
      %p56 = por %p54, %p55
      %p57 = scmp.ne.s32.totalorder %s46, %s47
      %p58 = scmp.eq.s32.totalorder %s17, 0
      %p59 = por %p57, %p58
      %p60 = scmp.ne.s32.totalorder %s46, %s47
      %p61 = scmp.eq.s32.totalorder %s18, 2
      %p62 = por %p60, %p61
      %p64 = scmp.ne.s32.totalorder %s47, %s63
      %p65 = scmp.eq.s32.totalorder %s18, 0
      %p66 = por %p64, %p65
      %s67 = ssub.s32 %s21, %s30
      %s68 = ssub.s32 %s20, %s34
      %s69 = sor.u32 %s67, %s68
      %p70 = scmp.eq.s32.totalorder %s69, 0
      %s72 = sadd.s32 %s71, 1
      %s73 = scalar_select %p70, %s71, %s72
      %p76 = pneg %p70
      %p77 = scmp.eq.s32.totalorder %s12, 2
      %p78 = por %p76, %p77
      %p79 = scmp.ne.s32.totalorder %s71, %s74
      %p80 = scmp.eq.s32.totalorder %s12, 0
      %p81 = por %p79, %p80
      %p82 = scmp.ne.s32.totalorder %s71, %s74
      %p83 = scmp.eq.s32.totalorder %s17, 2
      %p84 = por %p82, %p83
      %p85 = scmp.ne.s32.totalorder %s74, %s75
      %p86 = scmp.eq.s32.totalorder %s17, 0
      %p87 = por %p85, %p86
      %p88 = scmp.ne.s32.totalorder %s74, %s75
      %p89 = scmp.eq.s32.totalorder %s18, 2
      %p90 = por %p88, %p89
      %p92 = scmp.ne.s32.totalorder %s75, %s91
      %p93 = scmp.eq.s32.totalorder %s18, 0
      %p94 = por %p92, %p93
      %s95 = ssub.s32 %s20, %s34
      %p96 = scmp.eq.s32.totalorder %s95, 0
      %s98 = sadd.s32 %s97, 1
      %s99 = scalar_select %p96, %s97, %s98
      %p102 = pneg %p96
      %p103 = scmp.eq.s32.totalorder %s12, 2
      %p104 = por %p102, %p103
      %p105 = scmp.ne.s32.totalorder %s97, %s100
      %p106 = scmp.eq.s32.totalorder %s12, 0
      %p107 = por %p105, %p106
      %p108 = scmp.ne.s32.totalorder %s97, %s100
      %p109 = scmp.eq.s32.totalorder %s17, 2
      %p110 = por %p108, %p109
      %p111 = scmp.ne.s32.totalorder %s100, %s101
      %p112 = scmp.eq.s32.totalorder %s17, 0
      %p113 = por %p111, %p112
      %p114 = scmp.ne.s32.totalorder %s100, %s101
      %p115 = scmp.eq.s32.totalorder %s18, 2
      %p116 = por %p114, %p115
      %p118 = scmp.ne.s32.totalorder %s101, %s117
      %p119 = scmp.eq.s32.totalorder %s18, 0
      %p120 = por %p118, %p119
      %s121 = ssub.s32 %s19, %s38
      %s122 = ssub.s32 %s20, %s34
      %s123 = sor.u32 %s121, %s122
      %p124 = scmp.eq.s32.totalorder %s123, 0
      %s126 = sadd.s32 %s125, 1
      %s127 = scalar_select %p124, %s125, %s126
      %p130 = pneg %p124
      %p131 = scmp.eq.s32.totalorder %s12, 2
      %p132 = por %p130, %p131
      %p133 = scmp.ne.s32.totalorder %s125, %s128
      %p134 = scmp.eq.s32.totalorder %s12, 0
      %p135 = por %p133, %p134
      %p136 = scmp.ne.s32.totalorder %s125, %s128
      %p137 = scmp.eq.s32.totalorder %s17, 2
      %p138 = por %p136, %p137
      %p139 = scmp.ne.s32.totalorder %s128, %s129
      %p140 = scmp.eq.s32.totalorder %s17, 0
      %p141 = por %p139, %p140
      %p142 = scmp.ne.s32.totalorder %s128, %s129
      %p143 = scmp.eq.s32.totalorder %s18, 2
      %p144 = por %p142, %p143
      %p146 = scmp.ne.s32.totalorder %s129, %s145
      %p147 = scmp.eq.s32.totalorder %s18, 0
      %p148 = por %p146, %p147
      %p149 = scmp.le.s32.totalorder 1, %s12
      %p150 = scmp.lt.s32.totalorder %s12, 4
      %p151 = pnand %p149, %p150
      %p152 = pneg %p151
      // Predicated region
      $region9: #{translation_transformer_forward.42} parent=5 // pred_check
        _
      $region10: #{translation_transformer_forward.42} parent=5 // pred_check_branch
        %154 = sbr.rel (%p151) target = $region12
      $region11: #{translation_transformer_forward.42} parent=5 // pred_region
        %s155 = ssub.s32 %s12, 1
        // Predicated region
        $region13: #{translation_transformer_forward.42} parent=11 // pred_check
          %p156 = pneg %p59
        $region14: #{translation_transformer_forward.42} parent=11 // pred_check_branch
          %158 = sbr.rel (%p156) target = $region16
        $region15: #{translation_transformer_forward.42} parent=11 // pred_region
          %s159 = smul.u32 2, %s22
          %p160 = scmp.lt.s32.totalorder %s159, 1
          %s161 = scalar_select %p160, %s159, 1
          %p162 = scmp.lt.s32.totalorder %s24, 0
          %s163 = scalar_select %p162, %s24, 0
          %s164 = sadd.s32 %s163, %s161
          %s165 = smul.addr %s164, 8
          %s166 = scalar_lea.vmem %s0, %s165
          %s167 = smul.u32 2, %s22
        $region16: #{translation_transformer_forward.42} parent=11 // pred_fallthru
          _
      $region12: #{translation_transformer_forward.42} parent=5 // pred_fallthru
        _
      %p168 = scmp.lt.s32.totalorder %s12, 3
      // Predicated region
      $region17: #{translation_transformer_forward.42} parent=5 // pred_check
        %p169 = pneg %p168
      $region18: #{translation_transformer_forward.42} parent=5 // pred_check_branch
        %171 = sbr.rel (%p169) target = $region20
      $region19: #{translation_transformer_forward.42} parent=5 // pred_region
        // Predicated region
        $region21: #{translation_transformer_forward.42} parent=19 // pred_check
          %p172 = pneg %p81
        $region22: #{translation_transformer_forward.42} parent=19 // pred_check_branch
          %174 = sbr.rel (%p172) target = $region24
        $region23: #{translation_transformer_forward.42} parent=19 // pred_region
          %s175 = sand.u32 %s71, 1
          %s176 = scalar_lea.sflag [#allocation4], %s175
          %s177 = sand.u32 %s71, 1
          %s178 = smul.addr %s177, 256
          %s179 = scalar_lea.vmem [#allocation3], %s178
          %s180 = smul.u32 16, %s21
          %s181 = smul.u32 2, %s20
          %s183 = ssub.s32 4096, 4096
          %184 = vsyncadd %s176, %s183
          %s185 = smul.addr %s180, 6
          %s186 = sadd.s32 %s181, %s185
          %s187 = smul.addr %s186, 128
          %s188 = scalar_lea.hbm %s1, %s187
          %s189 = sshll.u32 %s179, 4
          %s190 = int_to_ptr.vmem [resolvable:$true] %s189
          %195 = dma.hbm_to_vmem [thread:$0]  %s188, 4096, %s190, %s176, 768, 256, 16
        $region24: #{translation_transformer_forward.42} parent=19 // pred_fallthru
          _
        // Predicated region
        $region25: #{translation_transformer_forward.42} parent=19 // pred_check
          %p196 = pneg %p107
        $region26: #{translation_transformer_forward.42} parent=19 // pred_check_branch
          %198 = sbr.rel (%p196) target = $region28
        $region27: #{translation_transformer_forward.42} parent=19 // pred_region
          %s199 = smul.u32 2, %s20
          %p200 = scmp.lt.s32.totalorder %s199, 5
          %s201 = scalar_select %p200, %s199, 5
          %s202 = scalar_lea.vmem %s2, %s201
          %s203 = smul.u32 2, %s20
        $region28: #{translation_transformer_forward.42} parent=19 // pred_fallthru
          _
      $region20: #{translation_transformer_forward.42} parent=5 // pred_fallthru
        _
      %p204 = scmp.le.s32.totalorder 1, %s12
      %p205 = scmp.lt.s32.totalorder %s12, 4
      %p206 = pnand %p204, %p205
      %p207 = pneg %p206
      // Predicated region
      $region29: #{translation_transformer_forward.42} parent=5 // pred_check
        _
      $region30: #{translation_transformer_forward.42} parent=5 // pred_check_branch
        %209 = sbr.rel (%p206) target = $region32
      $region31: #{translation_transformer_forward.42} parent=5 // pred_region
        %s210 = ssub.s32 %s12, 1
        %s211 = sand.u32 %s74, 1
        %s212 = scalar_lea.sflag [#allocation4], %s211
        %s213 = sand.u32 %s74, 1
        %s214 = smul.addr %s213, 256
        %s215 = scalar_lea.vmem [#allocation3], %s214
        // Predicated region
        $region33: #{translation_transformer_forward.42} parent=31 // pred_check
          %p216 = pneg %p87
        $region34: #{translation_transformer_forward.42} parent=31 // pred_check_branch
          %218 = sbr.rel (%p216) target = $region36
        $region35: #{translation_transformer_forward.42} parent=31 // pred_region
          %219 = dma.done %s212, 4096
        $region36: #{translation_transformer_forward.42} parent=31 // pred_fallthru
          _
        %s220 = smul.u32 2, %s22
        %p221 = scmp.lt.s32.totalorder %s220, 1
        %s222 = scalar_select %p221, %s220, 1
        %p223 = scmp.lt.s32.totalorder %s24, 0
        %s224 = scalar_select %p223, %s24, 0
        %s225 = sadd.s32 %s224, %s222
        %s226 = smul.addr %s225, 8
        %s227 = scalar_lea.vmem %s0, %s226
        %p228 = pneg %p59
        %p229 = pneg %p56
        %s230 = sand.u32 %s74, 1
        %s231 = scalar_lea.sflag [#allocation4], %s230
        %s232 = sand.u32 %s74, 1
        %s233 = smul.addr %s232, 256
        %s234 = scalar_lea.vmem [#allocation3], %s233
        %p235 = pneg %p87
        %p236 = pneg %p84
        %s237 = smul.u32 2, %s23
        %p238 = scmp.lt.s32.totalorder %s237, 5
        %s239 = scalar_select %p238, %s237, 5
        %s240 = scalar_lea.vmem %s2, %s239
        %p241 = pneg %p113
        %p242 = pneg %p110
        %p243 = pneg %p141
        %p244 = pneg %p138
        %s245 = sand.u32 %s128, 1
        %s246 = sand.u32 %s128, 1
        %s247 = smul.addr %s246, 32
        %s248 = scalar_lea.vmem [#allocation5], %s247
        %s249 = smul.u32 2, %s22
        %p250 = scmp.lt.s32.totalorder %s249, 1
        %s251 = scalar_select %p250, %s249, 1
        %p252 = scmp.lt.s32.totalorder %s24, 0
        %s253 = scalar_select %p252, %s24, 0
        %s254 = sadd.s32 %s253, %s251
        %s255 = smul.addr %s254, 8
        %s256 = scalar_lea.vmem %s0, %s255
        %s257 = smul.u32 2, %s22
        %s258 = smul.u32 16, %s24
        %s259 = smul.u32 2, %s23
        %s260 = smul.u32 2, %s23
        %p261 = scmp.lt.s32.totalorder %s260, 5
        %s262 = scalar_select %p261, %s260, 5
        %s263 = scalar_lea.vmem %s2, %s262
        %s264 = smul.u32 2, %s23
        %s265 = smul.u32 2, %s22
        %s266 = smul.u32 2, %s23
        %p267 = scmp.eq.s32.totalorder %s24, 0
        // Predicated region
        $region37: #{translation_transformer_forward.42} parent=31 // pred_check
          %p268 = pneg %p267
        $region38: #{translation_transformer_forward.42} parent=31 // pred_check_branch
          %270 = sbr.rel (%p268) target = $region40
        $region39: #{translation_transformer_forward.42} parent=31 // pred_region
          %v271 = vld [vmem:[%s263] sm:$0x3]
          %v273 = vlaneseq
          %v274 = vshrl.u32 %v273, 7
          %v275 = vsub.s32 0, %v274
          %v276 = vrot.slane %v271, %v275
          %v277 = vlaneseq
          %v278 = vshrl.u32 %v277, 7
          %v279 = vsub.s32 1, %v278
          %v280 = vrot.slane %v271, %v279
          %283 = vst [vmem:[#allocation2] sm:$0xff] %v276
          %284 = vst [vmem:[#allocation2 + $0x8] sm:$0xff] %v280
          %285 = vst [vmem:[#allocation2 + $0x10] sm:$0xff] %v276
          %286 = vst [vmem:[#allocation2 + $0x18] sm:$0xff] %v280
        $region40: #{translation_transformer_forward.42} parent=31 // pred_fallthru
          _
        %v287 = vld [vmem:[#allocation2] sm:$0xff]
        %v288 = vld [vmem:[#allocation2 + $0x8] sm:$0xff]
        %v289 = vld [vmem:[#allocation2 + $0x10] sm:$0xff]
        %v290 = vld [vmem:[#allocation2 + $0x18] sm:$0xff]
        %v291 = vld [vmem:[%s256] sm:$0xff]
        %v292 = vld [vmem:[%s256 + $0x8] sm:$0xff]
        %v293 = vld [vmem:[%s215] sm:$0xff]
        %v294 = vld [vmem:[%s215 + $0x8] sm:$0xff]
        %v295 = vld [vmem:[%s215 + $0x10] sm:$0xff]
        %v296 = vld [vmem:[%s215 + $0x18] sm:$0xff]
        %v297 = vld [vmem:[%s215 + $0x20] sm:$0xff]
        %v298 = vld [vmem:[%s215 + $0x28] sm:$0xff]
        %v299 = vld [vmem:[%s215 + $0x30] sm:$0xff]
        %v300 = vld [vmem:[%s215 + $0x38] sm:$0xff]
        %v301 = vld [vmem:[%s215 + $0x40] sm:$0xff]
        %v302 = vld [vmem:[%s215 + $0x48] sm:$0xff]
        %v303 = vld [vmem:[%s215 + $0x50] sm:$0xff]
        %v304 = vld [vmem:[%s215 + $0x58] sm:$0xff]
        %v305 = vld [vmem:[%s215 + $0x60] sm:$0xff]
        %v306 = vld [vmem:[%s215 + $0x68] sm:$0xff]
        %v307 = vld [vmem:[%s215 + $0x70] sm:$0xff]
        %v308 = vld [vmem:[%s215 + $0x78] sm:$0xff]
        %v309 = vld [vmem:[%s215 + $0x80] sm:$0xff]
        %v310 = vld [vmem:[%s215 + $0x88] sm:$0xff]
        %v311 = vld [vmem:[%s215 + $0x90] sm:$0xff]
        %v312 = vld [vmem:[%s215 + $0x98] sm:$0xff]
        %v313 = vld [vmem:[%s215 + $0xa0] sm:$0xff]
        %v314 = vld [vmem:[%s215 + $0xa8] sm:$0xff]
        %v315 = vld [vmem:[%s215 + $0xb0] sm:$0xff]
        %v316 = vld [vmem:[%s215 + $0xb8] sm:$0xff]
        %v317 = vld [vmem:[%s215 + $0xc0] sm:$0xff]
        %v318 = vld [vmem:[%s215 + $0xc8] sm:$0xff]
        %v319 = vld [vmem:[%s215 + $0xd0] sm:$0xff]
        %v320 = vld [vmem:[%s215 + $0xd8] sm:$0xff]
        %v321 = vld [vmem:[%s215 + $0xe0] sm:$0xff]
        %v322 = vld [vmem:[%s215 + $0xe8] sm:$0xff]
        %v323 = vld [vmem:[%s215 + $0xf0] sm:$0xff]
        %v324 = vld [vmem:[%s215 + $0xf8] sm:$0xff]
        %325 = vmatprep.subr.mxu0 %v294
        %326 = vmatpush1.msra.mxu0 %v293
        %327 = vmatprep.subr.mxu0 %v296
        %328 = vmatpush1.msra.mxu0 %v295
        %329 = vmatprep.subr.mxu0 %v298
        %330 = vmatpush1.msra.mxu0 %v297
        %331 = vmatprep.subr.mxu0 %v300
        %332 = vmatpush1.msra.mxu0 %v299
        %333 = vmatprep.subr.mxu0 %v302
        %334 = vmatpush1.msra.mxu0 %v301
        %335 = vmatprep.subr.mxu0 %v304
        %336 = vmatpush1.msra.mxu0 %v303
        %337 = vmatprep.subr.mxu0 %v306
        %338 = vmatpush1.msra.mxu0 %v305
        %339 = vmatprep.subr.mxu0 %v308
        %340 = vmatpush1.msra.mxu0 %v307
        %341 = vmatprep.subr.mxu0 %v310
        %342 = vmatpush1.msra.mxu0 %v309
        %343 = vmatprep.subr.mxu0 %v312
        %344 = vmatpush1.msra.mxu0 %v311
        %345 = vmatprep.subr.mxu0 %v314
        %346 = vmatpush1.msra.mxu0 %v313
        %347 = vmatprep.subr.mxu0 %v316
        %348 = vmatpush1.msra.mxu0 %v315
        %349 = vmatprep.subr.mxu0 %v318
        %350 = vmatpush1.msra.mxu0 %v317
        %351 = vmatprep.subr.mxu0 %v320
        %352 = vmatpush1.msra.mxu0 %v319
        %353 = vmatprep.subr.mxu0 %v322
        %354 = vmatpush1.msra.mxu0 %v321
        %355 = vmatprep.subr.mxu0 %v324
        %356 = vmatpush1.msra.mxu0 %v323
        %357 = vmatprep.subr.mxu0 0.0
        %358 = vmatpush1.msra.mxu0 0.0
        %359 = vmatprep.subr.mxu0 0.0
        %360 = vmatpush1.msra.mxu0 0.0
        %361 = vmatprep.subr.mxu0 0.0
        %362 = vmatpush1.msra.mxu0 0.0
        %363 = vmatprep.subr.mxu0 0.0
        %364 = vmatpush1.msra.mxu0 0.0
        %365 = vmatprep.subr.mxu0 0.0
        %366 = vmatpush1.msra.mxu0 0.0
        %367 = vmatprep.subr.mxu0 0.0
        %368 = vmatpush1.msra.mxu0 0.0
        %369 = vmatprep.subr.mxu0 0.0
        %370 = vmatpush1.msra.mxu0 0.0
        %371 = vmatprep.subr.mxu0 0.0
        %372 = vmatpush1.msra.mxu0 0.0
        %373 = vmatprep.subr.mxu0 0.0
        %374 = vmatpush1.msra.mxu0 0.0
        %375 = vmatprep.subr.mxu0 0.0
        %376 = vmatpush1.msra.mxu0 0.0
        %377 = vmatprep.subr.mxu0 0.0
        %378 = vmatpush1.msra.mxu0 0.0
        %379 = vmatprep.subr.mxu0 0.0
        %380 = vmatpush1.msra.mxu0 0.0
        %381 = vmatprep.subr.mxu0 0.0
        %382 = vmatpush1.msra.mxu0 0.0
        %383 = vmatprep.subr.mxu0 0.0
        %384 = vmatpush1.msra.mxu0 0.0
        %385 = vmatprep.subr.mxu0 0.0
        %386 = vmatpush1.msra.mxu0 0.0
        %387 = vmatprep.subr.mxu0 0.0
        %388 = vmatpush1.msra.mxu0 0.0
        %389 = vmatprep.mubr.f32.mxu0 0.0
        %390 = vmatmul.mubr.f32.gmra.mrb[0].mxu0 %v291
        %v391 = vpop.f32.mrb[0].mxu0
        %v392 = vadd.f32 0.0, %v391
        %v393 = vpop.f32.mrb[0].mxu0
        %v394 = vadd.f32 0.0, %v393
        %395 = vmatprep.mubr.f32.mxu0 0.0
        %396 = vmatmul.mubr.f32.gmra.mrb[0].mxu0 %v292
        %v397 = vpop.f32.mrb[0].mxu0
        %v398 = vadd.f32 0.0, %v397
        %v399 = vpop.f32.mrb[0].mxu0
        %v400 = vadd.f32 0.0, %v399
        %401 = vdwg.mxu0
        %v402 = vadd.f32 %v287, %v392
        %v403 = vadd.f32 %v288, %v394
        %v404 = vadd.f32 %v289, %v398
        %v405 = vadd.f32 %v290, %v400
        %406 = vst [vmem:[#allocation2] sm:$0xff] %v402
        %407 = vst [vmem:[#allocation2 + $0x8] sm:$0xff] %v403
        %408 = vst [vmem:[#allocation2 + $0x10] sm:$0xff] %v404
        %409 = vst [vmem:[#allocation2 + $0x18] sm:$0xff] %v405
        // Predicated region
        $region41: #{translation_transformer_forward.42} parent=31 // pred_check
          %p410 = pneg %p267
        $region42: #{translation_transformer_forward.42} parent=31 // pred_check_branch
          %412 = sbr.rel (%p410) target = $region44
        $region43: #{translation_transformer_forward.42} parent=31 // pred_region
          %v413 = vld [vmem:[#allocation2] sm:$0xff]
          %v414 = vld [vmem:[#allocation2 + $0x8] sm:$0xff]
          %v415 = vld [vmem:[#allocation2 + $0x10] sm:$0xff]
          %v416 = vld [vmem:[#allocation2 + $0x18] sm:$0xff]
          %417 = vst [vmem:[%s248] sm:$0xff] %v413
          %418 = vst [vmem:[%s248 + $0x8] sm:$0xff] %v414
          %419 = vst [vmem:[%s248 + $0x10] sm:$0xff] %v415
          %420 = vst [vmem:[%s248 + $0x18] sm:$0xff] %v416
        $region44: #{translation_transformer_forward.42} parent=31 // pred_fallthru
          _
        %s421 = sand.u32 %s128, 1
        %s422 = sand.u32 %s128, 1
        %s423 = smul.addr %s422, 32
        %s424 = scalar_lea.vmem [#allocation5], %s423
        // Predicated region
        $region45: #{translation_transformer_forward.42} parent=31 // pred_check
          %p425 = pneg %p138
        $region46: #{translation_transformer_forward.42} parent=31 // pred_check_branch
          %427 = sbr.rel (%p425) target = $region48
        $region47: #{translation_transformer_forward.42} parent=31 // pred_region
          %s428 = smul.u32 2, %s22
          %s429 = smul.u32 2, %s23
          %s430 = smul.addr %s428, 6
          %s431 = sadd.s32 %s429, %s430
          %s432 = smul.addr %s431, 8
          %s433 = scalar_lea.vmem %s3, %s432
          // Predicated region
          $region49: #{translation_transformer_forward.42} parent=47 // pred_check
            _
          $region50: #{translation_transformer_forward.42} parent=47 // pred_check_branch
            %435 = sbr.rel (0) target = $region52
          $region51: #{translation_transformer_forward.42} parent=47 // pred_region
            // Predicated region
            $region53: #{translation_transformer_forward.42} parent=51 // pred_check
              _
            $region54: #{translation_transformer_forward.42} parent=51 // pred_check_branch
              %437 = sbr.rel (0) target = $region56
            $region55: #{translation_transformer_forward.42} parent=51 // pred_region
              loop: start=0, step=1, limit=1
              $region57: #{translation_transformer_forward.42} parent=55 // loop_pre_header
                _
              $region58: #{translation_transformer_forward.42} parent=55 // loop_header
                %s439 = sphi 0, %s443
                %p440 = scmp.ge.s32.totalorder %s439, 1
                %s444 = sphi %s424, %s424
                %s445 = sphi %s433, %s433
              $region59: #{translation_transformer_forward.42} parent=55 // loop_header_branch
                %442 = sbr.rel (%p440) target = $region63
              $region60: #{translation_transformer_forward.42} parent=55 // loop_body
                %v446 = vld [vmem:[%s444] sm:$0xff]
                %447 = vst [vmem:[%s445] sm:$0xff] %v446
                %v448 = vld [vmem:[%s444 + $0x8] sm:$0xff]
                %449 = vst [vmem:[%s445 + $0x8] sm:$0xff] %v448
                %v450 = vld [vmem:[%s444 + $0x10] sm:$0xff]
                %451 = vst [vmem:[%s445 + $0x30] sm:$0xff] %v450
                %v452 = vld [vmem:[%s444 + $0x18] sm:$0xff]
                %453 = vst [vmem:[%s445 + $0x38] sm:$0xff] %v452
              $region61: #{translation_transformer_forward.42} parent=55 // loop_footer
                %s443 = sadd.s32 1, %s439
              $region62: #{translation_transformer_forward.42} parent=55 // loop_footer_branch
                %438 = sbr.rel target = $region58
              $region63: #{translation_transformer_forward.42} parent=55 // loop_exit
                _
            $region56: #{translation_transformer_forward.42} parent=51 // pred_fallthru
              _
            // Predicated region
            $region64: #{translation_transformer_forward.42} parent=51 // pred_check
              _
            $region65: #{translation_transformer_forward.42} parent=51 // pred_check_branch
              %455 = sbr.rel target = $region67
            $region66: #{translation_transformer_forward.42} parent=51 // pred_region
              _
            $region67: #{translation_transformer_forward.42} parent=51 // pred_fallthru
              _
          $region52: #{translation_transformer_forward.42} parent=47 // pred_fallthru
            _
          %456 = vnop
        $region48: #{translation_transformer_forward.42} parent=31 // pred_fallthru
          _
      $region32: #{translation_transformer_forward.42} parent=5 // pred_fallthru
        _
      %p457 = scmp.le.s32.totalorder 2, %s12
      // Predicated region
      $region68: #{translation_transformer_forward.42} parent=5 // pred_check
        %p458 = pneg %p457
      $region69: #{translation_transformer_forward.42} parent=5 // pred_check_branch
        %460 = sbr.rel (%p458) target = $region71
      $region70: #{translation_transformer_forward.42} parent=5 // pred_region
        %s461 = ssub.s32 %s12, 2
        // Predicated region
        $region72: #{translation_transformer_forward.42} parent=70 // pred_check
          %p462 = pneg %p144
        $region73: #{translation_transformer_forward.42} parent=70 // pred_check_branch
          %464 = sbr.rel (%p462) target = $region75
        $region74: #{translation_transformer_forward.42} parent=70 // pred_region
          %s465 = sand.u32 %s129, 1
          %s466 = sand.u32 %s129, 1
          %s467 = smul.addr %s466, 32
          %s468 = scalar_lea.vmem [#allocation5], %s467
        $region75: #{translation_transformer_forward.42} parent=70 // pred_fallthru
          _
      $region71: #{translation_transformer_forward.42} parent=5 // pred_fallthru
        _
    $region6: #{translation_transformer_forward.42} parent=1 // loop_footer
      %s16 = sadd.s32 1, %s12
    $region7: #{translation_transformer_forward.42} parent=1 // loop_footer_branch
      %11 = sbr.rel target = $region3
    $region8: #{translation_transformer_forward.42} parent=1 // loop_exit
      _
    %469 = vsyncpa [#allocation4], 1
    %s470 = scalar_lea.sflag [#allocation4], 1
    %471 = vsyncpa %s470, 1

// kernel: translation_transformer_forward.43
$region0: #{translation_transformer_forward.43}
  #allocation0 [shape = 'u32[]', space=smem, size = 0x4, offset = 0x4, fixed_abs, tag = 'smem constant byte address 0x4 - core index']
  #allocation1 [shape = 'u32[144,128]{1,0:T(1,128)}', space=vmem, size = 0x12000, scoped, tag = 'internal scratch']
  %s0 = inlined_call_operand.vmem [shape: f32[4,7,128], index: 0, kind: input, shape index: {}]
  %s1 = inlined_call_operand.vmem [shape: f32[4,7,128], index: 1, kind: input, shape index: {}]
  %s2 = inlined_call_operand.vmem [shape: f32[4,7,128], index: 2, kind: input, shape index: {}]
  %s3 = inlined_call_operand.vmem [shape: f32[4,7,128], index: 3, kind: output, shape index: {}]
  %s4 = sld [smem:[#allocation0]]
  $region22: #{translation_transformer_forward.43} parent=0
    _
  %s6 = ssub.s32 1, %s4
  %s7 = scalar_select 0, %s6, %s4
  // Predicated region
  $region2: #{translation_transformer_forward.43} parent=0 // pred_check
    _
  $region3: #{translation_transformer_forward.43} parent=0 // pred_check_branch
    %9 = sbr.rel (0) target = $region5
  $region4: #{translation_transformer_forward.43} parent=0 // pred_region
    _
  $region5: #{translation_transformer_forward.43} parent=0 // pred_fallthru
    _
  // Predicated region
  $region6: #{translation_transformer_forward.43} parent=0 // pred_check
    _
  $region7: #{translation_transformer_forward.43} parent=0 // pred_check_branch
    %11 = sbr.rel (0) target = $region9
  $region8: #{translation_transformer_forward.43} parent=0 // pred_region
    _
  $region9: #{translation_transformer_forward.43} parent=0 // pred_fallthru
    _
  // Predicated region
  $region10: #{translation_transformer_forward.43} parent=0 // pred_check
    _
  $region11: #{translation_transformer_forward.43} parent=0 // pred_check_branch
    %13 = sbr.rel (0) target = $region13
  $region12: #{translation_transformer_forward.43} parent=0 // pred_region
    _
  $region13: #{translation_transformer_forward.43} parent=0 // pred_fallthru
    _
  %v14 = vld [vmem:[%s0] sm:$0x7f]
  %v15 = vld [vmem:[%s0 + $0x8] sm:$0x7f]
  %v16 = vld [vmem:[%s0 + $0x10] sm:$0x7f]
  %v17 = vld [vmem:[%s0 + $0x18] sm:$0x7f]
  %v18 = vld [vmem:[%s1] sm:$0x7f]
  %v19 = vld [vmem:[%s1 + $0x8] sm:$0x7f]
  %v20 = vld [vmem:[%s1 + $0x10] sm:$0x7f]
  %v21 = vld [vmem:[%s1 + $0x18] sm:$0x7f]
  %v22 = vld [vmem:[%s2] sm:$0x7f]
  %v23 = vld [vmem:[%s2 + $0x8] sm:$0x7f]
  %v24 = vld [vmem:[%s2 + $0x10] sm:$0x7f]
  %v25 = vld [vmem:[%s2 + $0x18] sm:$0x7f]
  %26 = vmatprep.subr.mxu0 0.0
  %27 = vmatpush1.xpose.msra.mxu0 %v18
  %28 = vmatprep.subr.mxu0 0.0
  %29 = vmatpush1.xpose.msra.mxu0 0.0
  %30 = vmatprep.subr.mxu0 0.0
  %31 = vmatpush1.xpose.msra.mxu0 0.0
  %32 = vmatprep.subr.mxu0 0.0
  %33 = vmatpush1.xpose.msra.mxu0 0.0
  %34 = vmatprep.subr.mxu0 0.0
  %35 = vmatpush1.xpose.msra.mxu0 0.0
  %36 = vmatprep.subr.mxu0 0.0
  %37 = vmatpush1.xpose.msra.mxu0 0.0
  %38 = vmatprep.subr.mxu0 0.0
  %39 = vmatpush1.xpose.msra.mxu0 0.0
  %40 = vmatprep.subr.mxu0 0.0
  %41 = vmatpush1.xpose.msra.mxu0 0.0
  %42 = vmatprep.subr.mxu0 0.0
  %43 = vmatpush1.xpose.msra.mxu0 0.0
  %44 = vmatprep.subr.mxu0 0.0
  %45 = vmatpush1.xpose.msra.mxu0 0.0
  %46 = vmatprep.subr.mxu0 0.0
  %47 = vmatpush1.xpose.msra.mxu0 0.0
  %48 = vmatprep.subr.mxu0 0.0
  %49 = vmatpush1.xpose.msra.mxu0 0.0
  %50 = vmatprep.subr.mxu0 0.0
  %51 = vmatpush1.xpose.msra.mxu0 0.0
  %52 = vmatprep.subr.mxu0 0.0
  %53 = vmatpush1.xpose.msra.mxu0 0.0
  %54 = vmatprep.subr.mxu0 0.0
  %55 = vmatpush1.xpose.msra.mxu0 0.0
  %56 = vmatprep.subr.mxu0 0.0
  %57 = vmatpush1.xpose.msra.mxu0 0.0
  %58 = vmatprep.subr.mxu0 0.0
  %59 = vmatpush1.xpose.msra.mxu0 0.0
  %60 = vmatprep.subr.mxu0 0.0
  %61 = vmatpush1.xpose.msra.mxu0 0.0
  %62 = vmatprep.subr.mxu0 0.0
  %63 = vmatpush1.xpose.msra.mxu0 0.0
  %64 = vmatprep.subr.mxu0 0.0
  %65 = vmatpush1.xpose.msra.mxu0 0.0
  %66 = vmatprep.subr.mxu0 0.0
  %67 = vmatpush1.xpose.msra.mxu0 0.0
  %68 = vmatprep.subr.mxu0 0.0
  %69 = vmatpush1.xpose.msra.mxu0 0.0
  %70 = vmatprep.subr.mxu0 0.0
  %71 = vmatpush1.xpose.msra.mxu0 0.0
  %72 = vmatprep.subr.mxu0 0.0
  %73 = vmatpush1.xpose.msra.mxu0 0.0
  %74 = vmatprep.subr.mxu0 0.0
  %75 = vmatpush1.xpose.msra.mxu0 0.0
  %76 = vmatprep.subr.mxu0 0.0
  %77 = vmatpush1.xpose.msra.mxu0 0.0
  %78 = vmatprep.subr.mxu0 0.0
  %79 = vmatpush1.xpose.msra.mxu0 0.0
  %80 = vmatprep.subr.mxu0 0.0
  %81 = vmatpush1.xpose.msra.mxu0 0.0
  %82 = vmatprep.subr.mxu0 0.0
  %83 = vmatpush1.xpose.msra.mxu0 0.0
  %84 = vmatprep.subr.mxu0 0.0
  %85 = vmatpush1.xpose.msra.mxu0 0.0
  %86 = vmatprep.subr.mxu0 0.0
  %87 = vmatpush1.xpose.msra.mxu0 0.0
  %88 = vmatprep.subr.mxu0 0.0
  %89 = vmatpush1.xpose.msra.mxu0 0.0
  %90 = vmatprep.mubr.f32.mxu0 0.0
  %91 = vmatmul.mubr.f32.gmra.mrb[0].mxu0 %v14
  %v92 = vpop.f32.mrb[0].mxu0
  %v93 = vadd.f32 0.0, %v92
  %v94 = vpop.f32.mrb[0].mxu0
  %95 = vdwg.mxu0
  %96 = vmatprep.subr.mxu0 0.0
  %97 = vmatpush1.xpose.msra.mxu0 %v19
  %98 = vmatprep.subr.mxu0 0.0
  %99 = vmatpush1.xpose.msra.mxu0 0.0
  %100 = vmatprep.subr.mxu0 0.0
  %101 = vmatpush1.xpose.msra.mxu0 0.0
  %102 = vmatprep.subr.mxu0 0.0
  %103 = vmatpush1.xpose.msra.mxu0 0.0
  %104 = vmatprep.subr.mxu0 0.0
  %105 = vmatpush1.xpose.msra.mxu0 0.0
  %106 = vmatprep.subr.mxu0 0.0
  %107 = vmatpush1.xpose.msra.mxu0 0.0
  %108 = vmatprep.subr.mxu0 0.0
  %109 = vmatpush1.xpose.msra.mxu0 0.0
  %110 = vmatprep.subr.mxu0 0.0
  %111 = vmatpush1.xpose.msra.mxu0 0.0
  %112 = vmatprep.subr.mxu0 0.0
  %113 = vmatpush1.xpose.msra.mxu0 0.0
  %114 = vmatprep.subr.mxu0 0.0
  %115 = vmatpush1.xpose.msra.mxu0 0.0
  %116 = vmatprep.subr.mxu0 0.0
  %117 = vmatpush1.xpose.msra.mxu0 0.0
  %118 = vmatprep.subr.mxu0 0.0
  %119 = vmatpush1.xpose.msra.mxu0 0.0
  %120 = vmatprep.subr.mxu0 0.0
  %121 = vmatpush1.xpose.msra.mxu0 0.0
  %122 = vmatprep.subr.mxu0 0.0
  %123 = vmatpush1.xpose.msra.mxu0 0.0
  %124 = vmatprep.subr.mxu0 0.0
  %125 = vmatpush1.xpose.msra.mxu0 0.0
  %126 = vmatprep.subr.mxu0 0.0
  %127 = vmatpush1.xpose.msra.mxu0 0.0
  %128 = vmatprep.subr.mxu0 0.0
  %129 = vmatpush1.xpose.msra.mxu0 0.0
  %130 = vmatprep.subr.mxu0 0.0
  %131 = vmatpush1.xpose.msra.mxu0 0.0
  %132 = vmatprep.subr.mxu0 0.0
  %133 = vmatpush1.xpose.msra.mxu0 0.0
  %134 = vmatprep.subr.mxu0 0.0
  %135 = vmatpush1.xpose.msra.mxu0 0.0
  %136 = vmatprep.subr.mxu0 0.0
  %137 = vmatpush1.xpose.msra.mxu0 0.0
  %138 = vmatprep.subr.mxu0 0.0
  %139 = vmatpush1.xpose.msra.mxu0 0.0
  %140 = vmatprep.subr.mxu0 0.0
  %141 = vmatpush1.xpose.msra.mxu0 0.0
  %142 = vmatprep.subr.mxu0 0.0
  %143 = vmatpush1.xpose.msra.mxu0 0.0
  %144 = vmatprep.subr.mxu0 0.0
  %145 = vmatpush1.xpose.msra.mxu0 0.0
  %146 = vmatprep.subr.mxu0 0.0
  %147 = vmatpush1.xpose.msra.mxu0 0.0
  %148 = vmatprep.subr.mxu0 0.0
  %149 = vmatpush1.xpose.msra.mxu0 0.0
  %150 = vmatprep.subr.mxu0 0.0
  %151 = vmatpush1.xpose.msra.mxu0 0.0
  %152 = vmatprep.subr.mxu0 0.0
  %153 = vmatpush1.xpose.msra.mxu0 0.0
  %154 = vmatprep.subr.mxu0 0.0
  %155 = vmatpush1.xpose.msra.mxu0 0.0
  %156 = vmatprep.subr.mxu0 0.0
  %157 = vmatpush1.xpose.msra.mxu0 0.0
  %158 = vmatprep.subr.mxu0 0.0
  %159 = vmatpush1.xpose.msra.mxu0 0.0
  %160 = vmatprep.mubr.f32.mxu0 0.0
  %161 = vmatmul.mubr.f32.gmra.mrb[0].mxu0 %v15
  %v162 = vpop.f32.mrb[0].mxu0
  %v163 = vadd.f32 0.0, %v162
  %v164 = vpop.f32.mrb[0].mxu0
  %165 = vdwg.mxu0
  %166 = vmatprep.subr.mxu0 0.0
  %167 = vmatpush1.xpose.msra.mxu0 %v20
  %168 = vmatprep.subr.mxu0 0.0
  %169 = vmatpush1.xpose.msra.mxu0 0.0
  %170 = vmatprep.subr.mxu0 0.0
  %171 = vmatpush1.xpose.msra.mxu0 0.0
  %172 = vmatprep.subr.mxu0 0.0
  %173 = vmatpush1.xpose.msra.mxu0 0.0
  %174 = vmatprep.subr.mxu0 0.0
  %175 = vmatpush1.xpose.msra.mxu0 0.0
  %176 = vmatprep.subr.mxu0 0.0
  %177 = vmatpush1.xpose.msra.mxu0 0.0
  %178 = vmatprep.subr.mxu0 0.0
  %179 = vmatpush1.xpose.msra.mxu0 0.0
  %180 = vmatprep.subr.mxu0 0.0
  %181 = vmatpush1.xpose.msra.mxu0 0.0
  %182 = vmatprep.subr.mxu0 0.0
  %183 = vmatpush1.xpose.msra.mxu0 0.0
  %184 = vmatprep.subr.mxu0 0.0
  %185 = vmatpush1.xpose.msra.mxu0 0.0
  %186 = vmatprep.subr.mxu0 0.0
  %187 = vmatpush1.xpose.msra.mxu0 0.0
  %188 = vmatprep.subr.mxu0 0.0
  %189 = vmatpush1.xpose.msra.mxu0 0.0
  %190 = vmatprep.subr.mxu0 0.0
  %191 = vmatpush1.xpose.msra.mxu0 0.0
  %192 = vmatprep.subr.mxu0 0.0
  %193 = vmatpush1.xpose.msra.mxu0 0.0
  %194 = vmatprep.subr.mxu0 0.0
  %195 = vmatpush1.xpose.msra.mxu0 0.0
  %196 = vmatprep.subr.mxu0 0.0
  %197 = vmatpush1.xpose.msra.mxu0 0.0
  %198 = vmatprep.subr.mxu0 0.0
  %199 = vmatpush1.xpose.msra.mxu0 0.0
  %200 = vmatprep.subr.mxu0 0.0
  %201 = vmatpush1.xpose.msra.mxu0 0.0
  %202 = vmatprep.subr.mxu0 0.0
  %203 = vmatpush1.xpose.msra.mxu0 0.0
  %204 = vmatprep.subr.mxu0 0.0
  %205 = vmatpush1.xpose.msra.mxu0 0.0
  %206 = vmatprep.subr.mxu0 0.0
  %207 = vmatpush1.xpose.msra.mxu0 0.0
  %208 = vmatprep.subr.mxu0 0.0
  %209 = vmatpush1.xpose.msra.mxu0 0.0
  %210 = vmatprep.subr.mxu0 0.0
  %211 = vmatpush1.xpose.msra.mxu0 0.0
  %212 = vmatprep.subr.mxu0 0.0
  %213 = vmatpush1.xpose.msra.mxu0 0.0
  %214 = vmatprep.subr.mxu0 0.0
  %215 = vmatpush1.xpose.msra.mxu0 0.0
  %216 = vmatprep.subr.mxu0 0.0
  %217 = vmatpush1.xpose.msra.mxu0 0.0
  %218 = vmatprep.subr.mxu0 0.0
  %219 = vmatpush1.xpose.msra.mxu0 0.0
  %220 = vmatprep.subr.mxu0 0.0
  %221 = vmatpush1.xpose.msra.mxu0 0.0
  %222 = vmatprep.subr.mxu0 0.0
  %223 = vmatpush1.xpose.msra.mxu0 0.0
  %224 = vmatprep.subr.mxu0 0.0
  %225 = vmatpush1.xpose.msra.mxu0 0.0
  %226 = vmatprep.subr.mxu0 0.0
  %227 = vmatpush1.xpose.msra.mxu0 0.0
  %228 = vmatprep.subr.mxu0 0.0
  %229 = vmatpush1.xpose.msra.mxu0 0.0
  %230 = vmatprep.mubr.f32.mxu0 0.0
  %231 = vmatmul.mubr.f32.gmra.mrb[0].mxu0 %v16
  %v232 = vpop.f32.mrb[0].mxu0
  %v233 = vadd.f32 0.0, %v232
  %v234 = vpop.f32.mrb[0].mxu0
  %235 = vdwg.mxu0
  %236 = vmatprep.subr.mxu0 0.0
  %237 = vmatpush1.xpose.msra.mxu0 %v21
  %238 = vmatprep.subr.mxu0 0.0
  %239 = vmatpush1.xpose.msra.mxu0 0.0
  %240 = vmatprep.subr.mxu0 0.0
  %241 = vmatpush1.xpose.msra.mxu0 0.0
  %242 = vmatprep.subr.mxu0 0.0
  %243 = vmatpush1.xpose.msra.mxu0 0.0
  %244 = vmatprep.subr.mxu0 0.0
  %245 = vmatpush1.xpose.msra.mxu0 0.0
  %246 = vmatprep.subr.mxu0 0.0
  %247 = vmatpush1.xpose.msra.mxu0 0.0
  %248 = vmatprep.subr.mxu0 0.0
  %249 = vmatpush1.xpose.msra.mxu0 0.0
  %250 = vmatprep.subr.mxu0 0.0
  %251 = vmatpush1.xpose.msra.mxu0 0.0
  %252 = vmatprep.subr.mxu0 0.0
  %253 = vmatpush1.xpose.msra.mxu0 0.0
  %254 = vmatprep.subr.mxu0 0.0
  %255 = vmatpush1.xpose.msra.mxu0 0.0
  %256 = vmatprep.subr.mxu0 0.0
  %257 = vmatpush1.xpose.msra.mxu0 0.0
  %258 = vmatprep.subr.mxu0 0.0
  %259 = vmatpush1.xpose.msra.mxu0 0.0
  %260 = vmatprep.subr.mxu0 0.0
  %261 = vmatpush1.xpose.msra.mxu0 0.0
  %262 = vmatprep.subr.mxu0 0.0
  %263 = vmatpush1.xpose.msra.mxu0 0.0
  %264 = vmatprep.subr.mxu0 0.0
  %265 = vmatpush1.xpose.msra.mxu0 0.0
  %266 = vmatprep.subr.mxu0 0.0
  %267 = vmatpush1.xpose.msra.mxu0 0.0
  %268 = vmatprep.subr.mxu0 0.0
  %269 = vmatpush1.xpose.msra.mxu0 0.0
  %270 = vmatprep.subr.mxu0 0.0
  %271 = vmatpush1.xpose.msra.mxu0 0.0
  %272 = vmatprep.subr.mxu0 0.0
  %273 = vmatpush1.xpose.msra.mxu0 0.0
  %274 = vmatprep.subr.mxu0 0.0
  %275 = vmatpush1.xpose.msra.mxu0 0.0
  %276 = vmatprep.subr.mxu0 0.0
  %277 = vmatpush1.xpose.msra.mxu0 0.0
  %278 = vmatprep.subr.mxu0 0.0
  %279 = vmatpush1.xpose.msra.mxu0 0.0
  %280 = vmatprep.subr.mxu0 0.0
  %281 = vmatpush1.xpose.msra.mxu0 0.0
  %282 = vmatprep.subr.mxu0 0.0
  %283 = vmatpush1.xpose.msra.mxu0 0.0
  %284 = vmatprep.subr.mxu0 0.0
  %285 = vmatpush1.xpose.msra.mxu0 0.0
  %286 = vmatprep.subr.mxu0 0.0
  %287 = vmatpush1.xpose.msra.mxu0 0.0
  %288 = vmatprep.subr.mxu0 0.0
  %289 = vmatpush1.xpose.msra.mxu0 0.0
  %290 = vmatprep.subr.mxu0 0.0
  %291 = vmatpush1.xpose.msra.mxu0 0.0
  %292 = vmatprep.subr.mxu0 0.0
  %293 = vmatpush1.xpose.msra.mxu0 0.0
  %294 = vmatprep.subr.mxu0 0.0
  %295 = vmatpush1.xpose.msra.mxu0 0.0
  %296 = vmatprep.subr.mxu0 0.0
  %297 = vmatpush1.xpose.msra.mxu0 0.0
  %298 = vmatprep.subr.mxu0 0.0
  %299 = vmatpush1.xpose.msra.mxu0 0.0
  %300 = vmatprep.mubr.f32.mxu0 0.0
  %301 = vmatmul.mubr.f32.gmra.mrb[0].mxu0 %v17
  %v302 = vpop.f32.mrb[0].mxu0
  %v303 = vadd.f32 0.0, %v302
  %v304 = vpop.f32.mrb[0].mxu0
  %305 = vdwg.mxu0
  %v306 = vmul.f32 %v93, 0.25
  %v307 = vmul.f32 %v163, 0.25
  %v308 = vmul.f32 %v233, 0.25
  %v309 = vmul.f32 %v303, 0.25
  %vm310 = vcmask 55296
  %v311 = vsel %vm310, %v306, -inf
  %312 = vmax.xlane.f32.xlu0 %v311
  %v313 = vpop.xlane.xlu0 %312
  %v314 = vsel %vm310, %v307, -inf
  %315 = vmax.xlane.f32.xlu0 %v314
  %v316 = vpop.xlane.xlu0 %315
  %v317 = vsel %vm310, %v308, -inf
  %318 = vmax.xlane.f32.xlu0 %v317
  %v319 = vpop.xlane.xlu0 %318
  %v320 = vsel %vm310, %v309, -inf
  %321 = vmax.xlane.f32.xlu0 %v320
  %v322 = vpop.xlane.xlu0 %321
  %v323 = vsub.f32 %v306, %v313
  %v324 = vsub.f32 %v307, %v316
  %v325 = vsub.f32 %v308, %v319
  %v326 = vsub.f32 %v309, %v322
  %v327 = vmul.f32 %v323, 1.442695
  %v328 = vpow.pop %v327
  %v329 = vmul.f32 %v324, 1.442695
  %v330 = vpow.pop %v329
  %v331 = vmul.f32 %v325, 1.442695
  %v332 = vpow.pop %v331
  %v333 = vmul.f32 %v326, 1.442695
  %v334 = vpow.pop %v333
  %v335 = vsel %vm310, %v328, 0.0
  %336 = vadd.xlane.f32.xlu0 %v335
  %v337 = vpop.xlane.xlu0 %336
  %v338 = vsel %vm310, %v330, 0.0
  %339 = vadd.xlane.f32.xlu0 %v338
  %v340 = vpop.xlane.xlu0 %339
  %v341 = vsel %vm310, %v332, 0.0
  %342 = vadd.xlane.f32.xlu0 %v341
  %v343 = vpop.xlane.xlu0 %342
  %v344 = vsel %vm310, %v334, 0.0
  %345 = vadd.xlane.f32.xlu0 %v344
  %v346 = vpop.xlane.xlu0 %345
  %vm347 = vcmask 56320
  %v349 = vsel %vm347, %v328, 0
  %vm351 = vcmask 1046528
  %v353 = vsel %vm351, %v22, 0
  %355 = vmatprep.subr.mxu0 0.0
  %356 = vmatpush1.msra.mxu0 %v353
  %357 = vmatprep.subr.mxu0 0.0
  %358 = vmatpush1.msra.mxu0 0.0
  %359 = vmatprep.subr.mxu0 0.0
  %360 = vmatpush1.msra.mxu0 0.0
  %361 = vmatprep.subr.mxu0 0.0
  %362 = vmatpush1.msra.mxu0 0.0
  %363 = vmatprep.subr.mxu0 0.0
  %364 = vmatpush1.msra.mxu0 0.0
  %365 = vmatprep.subr.mxu0 0.0
  %366 = vmatpush1.msra.mxu0 0.0
  %367 = vmatprep.subr.mxu0 0.0
  %368 = vmatpush1.msra.mxu0 0.0
  %369 = vmatprep.subr.mxu0 0.0
  %370 = vmatpush1.msra.mxu0 0.0
  %371 = vmatprep.subr.mxu0 0.0
  %372 = vmatpush1.msra.mxu0 0.0
  %373 = vmatprep.subr.mxu0 0.0
  %374 = vmatpush1.msra.mxu0 0.0
  %375 = vmatprep.subr.mxu0 0.0
  %376 = vmatpush1.msra.mxu0 0.0
  %377 = vmatprep.subr.mxu0 0.0
  %378 = vmatpush1.msra.mxu0 0.0
  %379 = vmatprep.subr.mxu0 0.0
  %380 = vmatpush1.msra.mxu0 0.0
  %381 = vmatprep.subr.mxu0 0.0
  %382 = vmatpush1.msra.mxu0 0.0
  %383 = vmatprep.subr.mxu0 0.0
  %384 = vmatpush1.msra.mxu0 0.0
  %385 = vmatprep.subr.mxu0 0.0
  %386 = vmatpush1.msra.mxu0 0.0
  %387 = vmatprep.subr.mxu0 0.0
  %388 = vmatpush1.msra.mxu0 0.0
  %389 = vmatprep.subr.mxu0 0.0
  %390 = vmatpush1.msra.mxu0 0.0
  %391 = vmatprep.subr.mxu0 0.0
  %392 = vmatpush1.msra.mxu0 0.0
  %393 = vmatprep.subr.mxu0 0.0
  %394 = vmatpush1.msra.mxu0 0.0
  %395 = vmatprep.subr.mxu0 0.0
  %396 = vmatpush1.msra.mxu0 0.0
  %397 = vmatprep.subr.mxu0 0.0
  %398 = vmatpush1.msra.mxu0 0.0
  %399 = vmatprep.subr.mxu0 0.0
  %400 = vmatpush1.msra.mxu0 0.0
  %401 = vmatprep.subr.mxu0 0.0
  %402 = vmatpush1.msra.mxu0 0.0
  %403 = vmatprep.subr.mxu0 0.0
  %404 = vmatpush1.msra.mxu0 0.0
  %405 = vmatprep.subr.mxu0 0.0
  %406 = vmatpush1.msra.mxu0 0.0
  %407 = vmatprep.subr.mxu0 0.0
  %408 = vmatpush1.msra.mxu0 0.0
  %409 = vmatprep.subr.mxu0 0.0
  %410 = vmatpush1.msra.mxu0 0.0
  %411 = vmatprep.subr.mxu0 0.0
  %412 = vmatpush1.msra.mxu0 0.0
  %413 = vmatprep.subr.mxu0 0.0
  %414 = vmatpush1.msra.mxu0 0.0
  %415 = vmatprep.subr.mxu0 0.0
  %416 = vmatpush1.msra.mxu0 0.0
  %417 = vmatprep.subr.mxu0 0.0
  %418 = vmatpush1.msra.mxu0 0.0
  %419 = vmatprep.mubr.f32.mxu0 0.0
  %420 = vmatmul.mubr.f32.gmra.mrb[0].mxu0 %v349
  %v421 = vpop.f32.mrb[0].mxu0
  %v422 = vadd.f32 0.0, %v421
  %v423 = vpop.f32.mrb[0].mxu0
  %424 = vdwg.mxu0
  %v426 = vsel %vm347, %v330, 0
  %v429 = vsel %vm351, %v23, 0
  %431 = vmatprep.subr.mxu0 0.0
  %432 = vmatpush1.msra.mxu0 %v429
  %433 = vmatprep.subr.mxu0 0.0
  %434 = vmatpush1.msra.mxu0 0.0
  %435 = vmatprep.subr.mxu0 0.0
  %436 = vmatpush1.msra.mxu0 0.0
  %437 = vmatprep.subr.mxu0 0.0
  %438 = vmatpush1.msra.mxu0 0.0
  %439 = vmatprep.subr.mxu0 0.0
  %440 = vmatpush1.msra.mxu0 0.0
  %441 = vmatprep.subr.mxu0 0.0
  %442 = vmatpush1.msra.mxu0 0.0
  %443 = vmatprep.subr.mxu0 0.0
  %444 = vmatpush1.msra.mxu0 0.0
  %445 = vmatprep.subr.mxu0 0.0
  %446 = vmatpush1.msra.mxu0 0.0
  %447 = vmatprep.subr.mxu0 0.0
  %448 = vmatpush1.msra.mxu0 0.0
  %449 = vmatprep.subr.mxu0 0.0
  %450 = vmatpush1.msra.mxu0 0.0
  %451 = vmatprep.subr.mxu0 0.0
  %452 = vmatpush1.msra.mxu0 0.0
  %453 = vmatprep.subr.mxu0 0.0
  %454 = vmatpush1.msra.mxu0 0.0
  %455 = vmatprep.subr.mxu0 0.0
  %456 = vmatpush1.msra.mxu0 0.0
  %457 = vmatprep.subr.mxu0 0.0
  %458 = vmatpush1.msra.mxu0 0.0
  %459 = vmatprep.subr.mxu0 0.0
  %460 = vmatpush1.msra.mxu0 0.0
  %461 = vmatprep.subr.mxu0 0.0
  %462 = vmatpush1.msra.mxu0 0.0
  %463 = vmatprep.subr.mxu0 0.0
  %464 = vmatpush1.msra.mxu0 0.0
  %465 = vmatprep.subr.mxu0 0.0
  %466 = vmatpush1.msra.mxu0 0.0
  %467 = vmatprep.subr.mxu0 0.0
  %468 = vmatpush1.msra.mxu0 0.0
  %469 = vmatprep.subr.mxu0 0.0
  %470 = vmatpush1.msra.mxu0 0.0
  %471 = vmatprep.subr.mxu0 0.0
  %472 = vmatpush1.msra.mxu0 0.0
  %473 = vmatprep.subr.mxu0 0.0
  %474 = vmatpush1.msra.mxu0 0.0
  %475 = vmatprep.subr.mxu0 0.0
  %476 = vmatpush1.msra.mxu0 0.0
  %477 = vmatprep.subr.mxu0 0.0
  %478 = vmatpush1.msra.mxu0 0.0
  %479 = vmatprep.subr.mxu0 0.0
  %480 = vmatpush1.msra.mxu0 0.0
  %481 = vmatprep.subr.mxu0 0.0
  %482 = vmatpush1.msra.mxu0 0.0
  %483 = vmatprep.subr.mxu0 0.0
  %484 = vmatpush1.msra.mxu0 0.0
  %485 = vmatprep.subr.mxu0 0.0
  %486 = vmatpush1.msra.mxu0 0.0
  %487 = vmatprep.subr.mxu0 0.0
  %488 = vmatpush1.msra.mxu0 0.0
  %489 = vmatprep.subr.mxu0 0.0
  %490 = vmatpush1.msra.mxu0 0.0
  %491 = vmatprep.subr.mxu0 0.0
  %492 = vmatpush1.msra.mxu0 0.0
  %493 = vmatprep.subr.mxu0 0.0
  %494 = vmatpush1.msra.mxu0 0.0
  %495 = vmatprep.mubr.f32.mxu0 0.0
  %496 = vmatmul.mubr.f32.gmra.mrb[0].mxu0 %v426
  %v497 = vpop.f32.mrb[0].mxu0
  %v498 = vadd.f32 0.0, %v497
  %v499 = vpop.f32.mrb[0].mxu0
  %500 = vdwg.mxu0
  %v502 = vsel %vm347, %v332, 0
  %v505 = vsel %vm351, %v24, 0
  %507 = vmatprep.subr.mxu0 0.0
  %508 = vmatpush1.msra.mxu0 %v505
  %509 = vmatprep.subr.mxu0 0.0
  %510 = vmatpush1.msra.mxu0 0.0
  %511 = vmatprep.subr.mxu0 0.0
  %512 = vmatpush1.msra.mxu0 0.0
  %513 = vmatprep.subr.mxu0 0.0
  %514 = vmatpush1.msra.mxu0 0.0
  %515 = vmatprep.subr.mxu0 0.0
  %516 = vmatpush1.msra.mxu0 0.0
  %517 = vmatprep.subr.mxu0 0.0
  %518 = vmatpush1.msra.mxu0 0.0
  %519 = vmatprep.subr.mxu0 0.0
  %520 = vmatpush1.msra.mxu0 0.0
  %521 = vmatprep.subr.mxu0 0.0
  %522 = vmatpush1.msra.mxu0 0.0
  %523 = vmatprep.subr.mxu0 0.0
  %524 = vmatpush1.msra.mxu0 0.0
  %525 = vmatprep.subr.mxu0 0.0
  %526 = vmatpush1.msra.mxu0 0.0
  %527 = vmatprep.subr.mxu0 0.0
  %528 = vmatpush1.msra.mxu0 0.0
  %529 = vmatprep.subr.mxu0 0.0
  %530 = vmatpush1.msra.mxu0 0.0
  %531 = vmatprep.subr.mxu0 0.0
  %532 = vmatpush1.msra.mxu0 0.0
  %533 = vmatprep.subr.mxu0 0.0
  %534 = vmatpush1.msra.mxu0 0.0
  %535 = vmatprep.subr.mxu0 0.0
  %536 = vmatpush1.msra.mxu0 0.0
  %537 = vmatprep.subr.mxu0 0.0
  %538 = vmatpush1.msra.mxu0 0.0
  %539 = vmatprep.subr.mxu0 0.0
  %540 = vmatpush1.msra.mxu0 0.0
  %541 = vmatprep.subr.mxu0 0.0
  %542 = vmatpush1.msra.mxu0 0.0
  %543 = vmatprep.subr.mxu0 0.0
  %544 = vmatpush1.msra.mxu0 0.0
  %545 = vmatprep.subr.mxu0 0.0
  %546 = vmatpush1.msra.mxu0 0.0
  %547 = vmatprep.subr.mxu0 0.0
  %548 = vmatpush1.msra.mxu0 0.0
  %549 = vmatprep.subr.mxu0 0.0
  %550 = vmatpush1.msra.mxu0 0.0
  %551 = vmatprep.subr.mxu0 0.0
  %552 = vmatpush1.msra.mxu0 0.0
  %553 = vmatprep.subr.mxu0 0.0
  %554 = vmatpush1.msra.mxu0 0.0
  %555 = vmatprep.subr.mxu0 0.0
  %556 = vmatpush1.msra.mxu0 0.0
  %557 = vmatprep.subr.mxu0 0.0
  %558 = vmatpush1.msra.mxu0 0.0
  %559 = vmatprep.subr.mxu0 0.0
  %560 = vmatpush1.msra.mxu0 0.0
  %561 = vmatprep.subr.mxu0 0.0
  %562 = vmatpush1.msra.mxu0 0.0
  %563 = vmatprep.subr.mxu0 0.0
  %564 = vmatpush1.msra.mxu0 0.0
  %565 = vmatprep.subr.mxu0 0.0
  %566 = vmatpush1.msra.mxu0 0.0
  %567 = vmatprep.subr.mxu0 0.0
  %568 = vmatpush1.msra.mxu0 0.0
  %569 = vmatprep.subr.mxu0 0.0
  %570 = vmatpush1.msra.mxu0 0.0
  %571 = vmatprep.mubr.f32.mxu0 0.0
  %572 = vmatmul.mubr.f32.gmra.mrb[0].mxu0 %v502
  %v573 = vpop.f32.mrb[0].mxu0
  %v574 = vadd.f32 0.0, %v573
  %v575 = vpop.f32.mrb[0].mxu0
  %576 = vdwg.mxu0
  %v578 = vsel %vm347, %v334, 0
  %v581 = vsel %vm351, %v25, 0
  %583 = vmatprep.subr.mxu0 0.0
  %584 = vmatpush1.msra.mxu0 %v581
  %585 = vmatprep.subr.mxu0 0.0
  %586 = vmatpush1.msra.mxu0 0.0
  %587 = vmatprep.subr.mxu0 0.0
  %588 = vmatpush1.msra.mxu0 0.0
  %589 = vmatprep.subr.mxu0 0.0
  %590 = vmatpush1.msra.mxu0 0.0
  %591 = vmatprep.subr.mxu0 0.0
  %592 = vmatpush1.msra.mxu0 0.0
  %593 = vmatprep.subr.mxu0 0.0
  %594 = vmatpush1.msra.mxu0 0.0
  %595 = vmatprep.subr.mxu0 0.0
  %596 = vmatpush1.msra.mxu0 0.0
  %597 = vmatprep.subr.mxu0 0.0
  %598 = vmatpush1.msra.mxu0 0.0
  %599 = vmatprep.subr.mxu0 0.0
  %600 = vmatpush1.msra.mxu0 0.0
  %601 = vmatprep.subr.mxu0 0.0
  %602 = vmatpush1.msra.mxu0 0.0
  %603 = vmatprep.subr.mxu0 0.0
  %604 = vmatpush1.msra.mxu0 0.0
  %605 = vmatprep.subr.mxu0 0.0
  %606 = vmatpush1.msra.mxu0 0.0
  %607 = vmatprep.subr.mxu0 0.0
  %608 = vmatpush1.msra.mxu0 0.0
  %609 = vmatprep.subr.mxu0 0.0
  %610 = vmatpush1.msra.mxu0 0.0
  %611 = vmatprep.subr.mxu0 0.0
  %612 = vmatpush1.msra.mxu0 0.0
  %613 = vmatprep.subr.mxu0 0.0
  %614 = vmatpush1.msra.mxu0 0.0
  %615 = vmatprep.subr.mxu0 0.0
  %616 = vmatpush1.msra.mxu0 0.0
  %617 = vmatprep.subr.mxu0 0.0
  %618 = vmatpush1.msra.mxu0 0.0
  %619 = vmatprep.subr.mxu0 0.0
  %620 = vmatpush1.msra.mxu0 0.0
  %621 = vmatprep.subr.mxu0 0.0
  %622 = vmatpush1.msra.mxu0 0.0
  %623 = vmatprep.subr.mxu0 0.0
  %624 = vmatpush1.msra.mxu0 0.0
  %625 = vmatprep.subr.mxu0 0.0
  %626 = vmatpush1.msra.mxu0 0.0
  %627 = vmatprep.subr.mxu0 0.0
  %628 = vmatpush1.msra.mxu0 0.0
  %629 = vmatprep.subr.mxu0 0.0
  %630 = vmatpush1.msra.mxu0 0.0
  %631 = vmatprep.subr.mxu0 0.0
  %632 = vmatpush1.msra.mxu0 0.0
  %633 = vmatprep.subr.mxu0 0.0
  %634 = vmatpush1.msra.mxu0 0.0
  %635 = vmatprep.subr.mxu0 0.0
  %636 = vmatpush1.msra.mxu0 0.0
  %637 = vmatprep.subr.mxu0 0.0
  %638 = vmatpush1.msra.mxu0 0.0
  %639 = vmatprep.subr.mxu0 0.0
  %640 = vmatpush1.msra.mxu0 0.0
  %641 = vmatprep.subr.mxu0 0.0
  %642 = vmatpush1.msra.mxu0 0.0
  %643 = vmatprep.subr.mxu0 0.0
  %644 = vmatpush1.msra.mxu0 0.0
  %645 = vmatprep.subr.mxu0 0.0
  %646 = vmatpush1.msra.mxu0 0.0
  %647 = vmatprep.mubr.f32.mxu0 0.0
  %648 = vmatmul.mubr.f32.gmra.mrb[0].mxu0 %v578
  %v649 = vpop.f32.mrb[0].mxu0
  %v650 = vadd.f32 0.0, %v649
  %v651 = vpop.f32.mrb[0].mxu0
  %652 = vdwg.mxu0
  %v653 = vrcp.pop %v337
  %v654 = vrcp.pop %v340
  %v655 = vrcp.pop %v343
  %v656 = vrcp.pop %v346
  %v657 = vmul.f32 %v422, %v653
  %v658 = vmul.f32 %v498, %v654
  %v659 = vmul.f32 %v574, %v655
  %v660 = vmul.f32 %v650, %v656
  %661 = vst [vmem:[%s3] sm:$0x7f] %v657
  %662 = vst [vmem:[%s3 + $0x8] sm:$0x7f] %v658
  %663 = vst [vmem:[%s3 + $0x10] sm:$0x7f] %v659
  %664 = vst [vmem:[%s3 + $0x18] sm:$0x7f] %v660
  // Predicated region
  $region14: #{translation_transformer_forward.43} parent=0 // pred_check
    _
  $region15: #{translation_transformer_forward.43} parent=0 // pred_check_branch
    %666 = sbr.rel (0) target = $region17
  $region16: #{translation_transformer_forward.43} parent=0 // pred_region
    _
  $region17: #{translation_transformer_forward.43} parent=0 // pred_fallthru
    _
  // Predicated region
  $region18: #{translation_transformer_forward.43} parent=0 // pred_check
    _
  $region19: #{translation_transformer_forward.43} parent=0 // pred_check_branch
    %668 = sbr.rel (0) target = $region21
  $region20: #{translation_transformer_forward.43} parent=0 // pred_region
    _
  $region21: #{translation_transformer_forward.43} parent=0 // pred_fallthru
    _

// kernel: translation_transformer_forward.45
$region0: #{translation_transformer_forward.45}
  #allocation0 [shape = 'u32[]', space=smem, size = 0x4, offset = 0x4, fixed_abs, tag = 'smem constant byte address 0x4 - core index']
  #allocation1 [shape = 'u32[144,128]{1,0:T(1,128)}', space=vmem, size = 0x12000, scoped, tag = 'internal scratch']
  #allocation2 [shape = 'f32[16,256]{1,0:T(8,128)}', space=vmem, size = 0x4000, scoped, tag = 'scratch operand']
  %s0 = inlined_call_operand.vmem [shape: f32[16,128], index: 0, kind: input, shape index: {}]
  %s1 = inlined_call_operand.vmem [shape: f32[128,256], index: 1, kind: input, shape index: {}]
  %s2 = inlined_call_operand.vmem [shape: f32[1,256], index: 2, kind: input, shape index: {}]
  %s3 = inlined_call_operand.vmem [shape: f32[16,256], index: 3, kind: output, shape index: {}]
  %s4 = sld [smem:[#allocation0]]
  $region30: #{translation_transformer_forward.45} parent=0
    _
  %s6 = ssub.s32 1, %s4
  %s7 = scalar_select 0, %s6, %s4
  // Predicated region
  $region2: #{translation_transformer_forward.45} parent=0 // pred_check
    _
  $region3: #{translation_transformer_forward.45} parent=0 // pred_check_branch
    %9 = sbr.rel (0) target = $region5
  $region4: #{translation_transformer_forward.45} parent=0 // pred_region
    _
  $region5: #{translation_transformer_forward.45} parent=0 // pred_fallthru
    _
  // Predicated region
  $region6: #{translation_transformer_forward.45} parent=0 // pred_check
    _
  $region7: #{translation_transformer_forward.45} parent=0 // pred_check_branch
    %11 = sbr.rel (0) target = $region9
  $region8: #{translation_transformer_forward.45} parent=0 // pred_region
    _
  $region9: #{translation_transformer_forward.45} parent=0 // pred_fallthru
    _
  // Predicated region
  $region10: #{translation_transformer_forward.45} parent=0 // pred_check
    _
  $region11: #{translation_transformer_forward.45} parent=0 // pred_check_branch
    %13 = sbr.rel (0) target = $region13
  $region12: #{translation_transformer_forward.45} parent=0 // pred_region
    _
  $region13: #{translation_transformer_forward.45} parent=0 // pred_fallthru
    _
  %p14 = scmp.eq.s32.totalorder 0, 0
  // Predicated region
  $region14: #{translation_transformer_forward.45} parent=0 // pred_check
    %p15 = pneg %p14
  $region15: #{translation_transformer_forward.45} parent=0 // pred_check_branch
    %17 = sbr.rel (%p15) target = $region17
  $region16: #{translation_transformer_forward.45} parent=0 // pred_region
    %v18 = vld [vmem:[%s2] sm:$0x3]
    %v20 = vlaneseq
    %v21 = vshrl.u32 %v20, 7
    %v22 = vsub.s32 0, %v21
    %v23 = vrot.slane %v18, %v22
    %v24 = vlaneseq
    %v25 = vshrl.u32 %v24, 7
    %v26 = vsub.s32 1, %v25
    %v27 = vrot.slane %v18, %v26
    %30 = vst [vmem:[#allocation2] sm:$0xff] %v23
    %31 = vst [vmem:[#allocation2 + $0x8] sm:$0xff] %v27
    %32 = vst [vmem:[#allocation2 + $0x10] sm:$0xff] %v23
    %33 = vst [vmem:[#allocation2 + $0x18] sm:$0xff] %v27
  $region17: #{translation_transformer_forward.45} parent=0 // pred_fallthru
    _
  %v34 = vld [vmem:[#allocation2] sm:$0xff]
  %v35 = vld [vmem:[#allocation2 + $0x8] sm:$0xff]
  %v36 = vld [vmem:[#allocation2 + $0x10] sm:$0xff]
  %v37 = vld [vmem:[#allocation2 + $0x18] sm:$0xff]
  %v38 = vld [vmem:[%s0] sm:$0xff]
  %v39 = vld [vmem:[%s0 + $0x8] sm:$0xff]
  %v40 = vld [vmem:[%s1] sm:$0xff]
  %v41 = vld [vmem:[%s1 + $0x8] sm:$0xff]
  %v42 = vld [vmem:[%s1 + $0x10] sm:$0xff]
  %v43 = vld [vmem:[%s1 + $0x18] sm:$0xff]
  %v44 = vld [vmem:[%s1 + $0x20] sm:$0xff]
  %v45 = vld [vmem:[%s1 + $0x28] sm:$0xff]
  %v46 = vld [vmem:[%s1 + $0x30] sm:$0xff]
  %v47 = vld [vmem:[%s1 + $0x38] sm:$0xff]
  %v48 = vld [vmem:[%s1 + $0x40] sm:$0xff]
  %v49 = vld [vmem:[%s1 + $0x48] sm:$0xff]
  %v50 = vld [vmem:[%s1 + $0x50] sm:$0xff]
  %v51 = vld [vmem:[%s1 + $0x58] sm:$0xff]
  %v52 = vld [vmem:[%s1 + $0x60] sm:$0xff]
  %v53 = vld [vmem:[%s1 + $0x68] sm:$0xff]
  %v54 = vld [vmem:[%s1 + $0x70] sm:$0xff]
  %v55 = vld [vmem:[%s1 + $0x78] sm:$0xff]
  %v56 = vld [vmem:[%s1 + $0x80] sm:$0xff]
  %v57 = vld [vmem:[%s1 + $0x88] sm:$0xff]
  %v58 = vld [vmem:[%s1 + $0x90] sm:$0xff]
  %v59 = vld [vmem:[%s1 + $0x98] sm:$0xff]
  %v60 = vld [vmem:[%s1 + $0xa0] sm:$0xff]
  %v61 = vld [vmem:[%s1 + $0xa8] sm:$0xff]
  %v62 = vld [vmem:[%s1 + $0xb0] sm:$0xff]
  %v63 = vld [vmem:[%s1 + $0xb8] sm:$0xff]
  %v64 = vld [vmem:[%s1 + $0xc0] sm:$0xff]
  %v65 = vld [vmem:[%s1 + $0xc8] sm:$0xff]
  %v66 = vld [vmem:[%s1 + $0xd0] sm:$0xff]
  %v67 = vld [vmem:[%s1 + $0xd8] sm:$0xff]
  %v68 = vld [vmem:[%s1 + $0xe0] sm:$0xff]
  %v69 = vld [vmem:[%s1 + $0xe8] sm:$0xff]
  %v70 = vld [vmem:[%s1 + $0xf0] sm:$0xff]
  %v71 = vld [vmem:[%s1 + $0xf8] sm:$0xff]
  %72 = vmatprep.subr.mxu0 %v41
  %73 = vmatpush1.msra.mxu0 %v40
  %74 = vmatprep.subr.mxu0 %v43
  %75 = vmatpush1.msra.mxu0 %v42
  %76 = vmatprep.subr.mxu0 %v45
  %77 = vmatpush1.msra.mxu0 %v44
  %78 = vmatprep.subr.mxu0 %v47
  %79 = vmatpush1.msra.mxu0 %v46
  %80 = vmatprep.subr.mxu0 %v49
  %81 = vmatpush1.msra.mxu0 %v48
  %82 = vmatprep.subr.mxu0 %v51
  %83 = vmatpush1.msra.mxu0 %v50
  %84 = vmatprep.subr.mxu0 %v53
  %85 = vmatpush1.msra.mxu0 %v52
  %86 = vmatprep.subr.mxu0 %v55
  %87 = vmatpush1.msra.mxu0 %v54
  %88 = vmatprep.subr.mxu0 %v57
  %89 = vmatpush1.msra.mxu0 %v56
  %90 = vmatprep.subr.mxu0 %v59
  %91 = vmatpush1.msra.mxu0 %v58
  %92 = vmatprep.subr.mxu0 %v61
  %93 = vmatpush1.msra.mxu0 %v60
  %94 = vmatprep.subr.mxu0 %v63
  %95 = vmatpush1.msra.mxu0 %v62
  %96 = vmatprep.subr.mxu0 %v65
  %97 = vmatpush1.msra.mxu0 %v64
  %98 = vmatprep.subr.mxu0 %v67
  %99 = vmatpush1.msra.mxu0 %v66
  %100 = vmatprep.subr.mxu0 %v69
  %101 = vmatpush1.msra.mxu0 %v68
  %102 = vmatprep.subr.mxu0 %v71
  %103 = vmatpush1.msra.mxu0 %v70
  %104 = vmatprep.subr.mxu0 0.0
  %105 = vmatpush1.msra.mxu0 0.0
  %106 = vmatprep.subr.mxu0 0.0
  %107 = vmatpush1.msra.mxu0 0.0
  %108 = vmatprep.subr.mxu0 0.0
  %109 = vmatpush1.msra.mxu0 0.0
  %110 = vmatprep.subr.mxu0 0.0
  %111 = vmatpush1.msra.mxu0 0.0
  %112 = vmatprep.subr.mxu0 0.0
  %113 = vmatpush1.msra.mxu0 0.0
  %114 = vmatprep.subr.mxu0 0.0
  %115 = vmatpush1.msra.mxu0 0.0
  %116 = vmatprep.subr.mxu0 0.0
  %117 = vmatpush1.msra.mxu0 0.0
  %118 = vmatprep.subr.mxu0 0.0
  %119 = vmatpush1.msra.mxu0 0.0
  %120 = vmatprep.subr.mxu0 0.0
  %121 = vmatpush1.msra.mxu0 0.0
  %122 = vmatprep.subr.mxu0 0.0
  %123 = vmatpush1.msra.mxu0 0.0
  %124 = vmatprep.subr.mxu0 0.0
  %125 = vmatpush1.msra.mxu0 0.0
  %126 = vmatprep.subr.mxu0 0.0
  %127 = vmatpush1.msra.mxu0 0.0
  %128 = vmatprep.subr.mxu0 0.0
  %129 = vmatpush1.msra.mxu0 0.0
  %130 = vmatprep.subr.mxu0 0.0
  %131 = vmatpush1.msra.mxu0 0.0
  %132 = vmatprep.subr.mxu0 0.0
  %133 = vmatpush1.msra.mxu0 0.0
  %134 = vmatprep.subr.mxu0 0.0
  %135 = vmatpush1.msra.mxu0 0.0
  %136 = vmatprep.mubr.f32.mxu0 0.0
  %137 = vmatmul.mubr.f32.gmra.mrb[0].mxu0 %v38
  %v138 = vpop.f32.mrb[0].mxu0
  %v139 = vadd.f32 0.0, %v138
  %v140 = vpop.f32.mrb[0].mxu0
  %v141 = vadd.f32 0.0, %v140
  %142 = vmatprep.mubr.f32.mxu0 0.0
  %143 = vmatmul.mubr.f32.gmra.mrb[0].mxu0 %v39
  %v144 = vpop.f32.mrb[0].mxu0
  %v145 = vadd.f32 0.0, %v144
  %v146 = vpop.f32.mrb[0].mxu0
  %v147 = vadd.f32 0.0, %v146
  %148 = vdwg.mxu0
  %v149 = vadd.f32 %v34, %v139
  %v150 = vadd.f32 %v35, %v141
  %v151 = vadd.f32 %v36, %v145
  %v152 = vadd.f32 %v37, %v147
  %153 = vst [vmem:[#allocation2] sm:$0xff] %v149
  %154 = vst [vmem:[#allocation2 + $0x8] sm:$0xff] %v150
  %155 = vst [vmem:[#allocation2 + $0x10] sm:$0xff] %v151
  %156 = vst [vmem:[#allocation2 + $0x18] sm:$0xff] %v152
  // Predicated region
  $region18: #{translation_transformer_forward.45} parent=0 // pred_check
    %p157 = pneg %p14
  $region19: #{translation_transformer_forward.45} parent=0 // pred_check_branch
    %159 = sbr.rel (%p157) target = $region21
  $region20: #{translation_transformer_forward.45} parent=0 // pred_region
    %v160 = vld [vmem:[#allocation2] sm:$0xff]
    %v161 = vld [vmem:[#allocation2 + $0x8] sm:$0xff]
    %v162 = vld [vmem:[#allocation2 + $0x10] sm:$0xff]
    %v163 = vld [vmem:[#allocation2 + $0x18] sm:$0xff]
    %164 = vst [vmem:[%s3] sm:$0xff] %v160
    %165 = vst [vmem:[%s3 + $0x8] sm:$0xff] %v161
    %166 = vst [vmem:[%s3 + $0x10] sm:$0xff] %v162
    %167 = vst [vmem:[%s3 + $0x18] sm:$0xff] %v163
  $region21: #{translation_transformer_forward.45} parent=0 // pred_fallthru
    _
  // Predicated region
  $region22: #{translation_transformer_forward.45} parent=0 // pred_check
    _
  $region23: #{translation_transformer_forward.45} parent=0 // pred_check_branch
    %169 = sbr.rel (0) target = $region25
  $region24: #{translation_transformer_forward.45} parent=0 // pred_region
    _
  $region25: #{translation_transformer_forward.45} parent=0 // pred_fallthru
    _
  // Predicated region
  $region26: #{translation_transformer_forward.45} parent=0 // pred_check
    _
  $region27: #{translation_transformer_forward.45} parent=0 // pred_check_branch
    %171 = sbr.rel (0) target = $region29
  $region28: #{translation_transformer_forward.45} parent=0 // pred_region
    _
  $region29: #{translation_transformer_forward.45} parent=0 // pred_fallthru
    _

// kernel: translation_transformer_forward.31
$region0: #{translation_transformer_forward.31}
  #allocation0 [shape = 'u32[]', space=smem, size = 0x4, offset = 0x4, fixed_abs, tag = 'smem constant byte address 0x4 - core index']
  #allocation1 [shape = 'u32[144,128]{1,0:T(1,128)}', space=vmem, size = 0x12000, scoped, tag = 'internal scratch']
  #allocation2 [shape = 'f32[16,256]{1,0:T(8,128)}', space=vmem, size = 0x4000, scoped, tag = 'scratch operand']
  %s0 = inlined_call_operand.vmem [shape: f32[16,128], index: 0, kind: input, shape index: {}]
  %s1 = inlined_call_operand.vmem [shape: f32[128,768], index: 1, kind: input, shape index: {}]
  %s2 = inlined_call_operand.vmem [shape: f32[1,768], index: 2, kind: input, shape index: {}]
  %s3 = inlined_call_operand.vmem [shape: f32[16,768], index: 3, kind: output, shape index: {}]
  %s4 = sld [smem:[#allocation0]]
  $region95: #{translation_transformer_forward.31} parent=0
    _
  %s6 = ssub.s32 1, %s4
  %s7 = scalar_select 0, %s6, %s4
  $region1: #{translation_transformer_forward.31} parent=0
    #allocation3 [shape = 'u8[262144]{0}', space=vmem, size = 0x40000, scoped, tag = 'input window, operand 1']
    #allocation4 [shape = 'u8[32768]{0}', space=vmem, size = 0x8000, scoped, tag = 'output window, operand 0']
    loop: start=0, step=1, limit=5
    $region2: #{translation_transformer_forward.31} parent=1 // loop_pre_header
      _
    $region3: #{translation_transformer_forward.31} parent=1 // loop_header
      %s9 = sphi 0, %s13
      %p10 = scmp.ge.s32.totalorder %s9, 5
      %s16 = sphi 0, %s35
      %s17 = sphi 0, %s31
      %s18 = sphi 0, %s27
      %s19 = sphi 0, %s16
      %s20 = sphi 0, %s17
      %s21 = sphi 0, %s18
      %s22 = sphi 0, %s19
      %s23 = sphi 0, %s20
      %s24 = sphi 0, %s21
      %s40 = sphi 0, %s42
      %s43 = sphi 0, %s40
      %s44 = sphi 0, %s43
      %s60 = sphi 0, %s44
      %s68 = sphi 0, %s70
      %s71 = sphi 0, %s68
      %s72 = sphi 0, %s71
      %s88 = sphi 0, %s72
      %s94 = sphi 0, %s96
      %s97 = sphi 0, %s94
      %s98 = sphi 0, %s97
      %s114 = sphi 0, %s98
      %s122 = sphi 0, %s124
      %s125 = sphi 0, %s122
      %s126 = sphi 0, %s125
      %s142 = sphi 0, %s126
    $region4: #{translation_transformer_forward.31} parent=1 // loop_header_branch
      %12 = sbr.rel (%p10) target = $region8
    $region5: #{translation_transformer_forward.31} parent=1 // loop_body
      %s14 = ssub.s32 %s9, 1
      %s15 = ssub.s32 %s9, 2
      %s25 = sadd.s32 1, %s18
      %p26 = scmp.ge.s32.totalorder %s25, 1
      %s27 = scalar_select %p26, 0, %s25
      %s28 = sadd.s32 1, %s17
      %s29 = scalar_select %p26, %s28, %s17
      %p30 = scmp.ge.s32.totalorder %s29, 3
      %s31 = scalar_select %p30, 0, %s29
      %s32 = sadd.s32 1, %s16
      %s33 = scalar_select %p30, %s32, %s16
      %p34 = scmp.ge.s32.totalorder %s33, 1
      %s35 = scalar_select %p34, 0, %s33
      %s36 = ssub.s32 %s16, %s35
      %s37 = ssub.s32 %s18, %s27
      %s38 = sor.u32 %s36, %s37
      %p39 = scmp.eq.s32.totalorder %s38, 0
      %s41 = sadd.s32 %s40, 1
      %s42 = scalar_select %p39, %s40, %s41
      %p45 = pneg %p39
      %p46 = scmp.eq.s32.totalorder %s9, 2
      %p47 = por %p45, %p46
      %p48 = scmp.ne.s32.totalorder %s40, %s43
      %p49 = scmp.eq.s32.totalorder %s9, 0
      %p50 = por %p48, %p49
      %p51 = scmp.ne.s32.totalorder %s40, %s43
      %p52 = scmp.eq.s32.totalorder %s14, 2
      %p53 = por %p51, %p52
      %p54 = scmp.ne.s32.totalorder %s43, %s44
      %p55 = scmp.eq.s32.totalorder %s14, 0
      %p56 = por %p54, %p55
      %p57 = scmp.ne.s32.totalorder %s43, %s44
      %p58 = scmp.eq.s32.totalorder %s15, 2
      %p59 = por %p57, %p58
      %p61 = scmp.ne.s32.totalorder %s44, %s60
      %p62 = scmp.eq.s32.totalorder %s15, 0
      %p63 = por %p61, %p62
      %s64 = ssub.s32 %s18, %s27
      %s65 = ssub.s32 %s17, %s31
      %s66 = sor.u32 %s64, %s65
      %p67 = scmp.eq.s32.totalorder %s66, 0
      %s69 = sadd.s32 %s68, 1
      %s70 = scalar_select %p67, %s68, %s69
      %p73 = pneg %p67
      %p74 = scmp.eq.s32.totalorder %s9, 2
      %p75 = por %p73, %p74
      %p76 = scmp.ne.s32.totalorder %s68, %s71
      %p77 = scmp.eq.s32.totalorder %s9, 0
      %p78 = por %p76, %p77
      %p79 = scmp.ne.s32.totalorder %s68, %s71
      %p80 = scmp.eq.s32.totalorder %s14, 2
      %p81 = por %p79, %p80
      %p82 = scmp.ne.s32.totalorder %s71, %s72
      %p83 = scmp.eq.s32.totalorder %s14, 0
      %p84 = por %p82, %p83
      %p85 = scmp.ne.s32.totalorder %s71, %s72
      %p86 = scmp.eq.s32.totalorder %s15, 2
      %p87 = por %p85, %p86
      %p89 = scmp.ne.s32.totalorder %s72, %s88
      %p90 = scmp.eq.s32.totalorder %s15, 0
      %p91 = por %p89, %p90
      %s92 = ssub.s32 %s17, %s31
      %p93 = scmp.eq.s32.totalorder %s92, 0
      %s95 = sadd.s32 %s94, 1
      %s96 = scalar_select %p93, %s94, %s95
      %p99 = pneg %p93
      %p100 = scmp.eq.s32.totalorder %s9, 2
      %p101 = por %p99, %p100
      %p102 = scmp.ne.s32.totalorder %s94, %s97
      %p103 = scmp.eq.s32.totalorder %s9, 0
      %p104 = por %p102, %p103
      %p105 = scmp.ne.s32.totalorder %s94, %s97
      %p106 = scmp.eq.s32.totalorder %s14, 2
      %p107 = por %p105, %p106
      %p108 = scmp.ne.s32.totalorder %s97, %s98
      %p109 = scmp.eq.s32.totalorder %s14, 0
      %p110 = por %p108, %p109
      %p111 = scmp.ne.s32.totalorder %s97, %s98
      %p112 = scmp.eq.s32.totalorder %s15, 2
      %p113 = por %p111, %p112
      %p115 = scmp.ne.s32.totalorder %s98, %s114
      %p116 = scmp.eq.s32.totalorder %s15, 0
      %p117 = por %p115, %p116
      %s118 = ssub.s32 %s16, %s35
      %s119 = ssub.s32 %s17, %s31
      %s120 = sor.u32 %s118, %s119
      %p121 = scmp.eq.s32.totalorder %s120, 0
      %s123 = sadd.s32 %s122, 1
      %s124 = scalar_select %p121, %s122, %s123
      %p127 = pneg %p121
      %p128 = scmp.eq.s32.totalorder %s9, 2
      %p129 = por %p127, %p128
      %p130 = scmp.ne.s32.totalorder %s122, %s125
      %p131 = scmp.eq.s32.totalorder %s9, 0
      %p132 = por %p130, %p131
      %p133 = scmp.ne.s32.totalorder %s122, %s125
      %p134 = scmp.eq.s32.totalorder %s14, 2
      %p135 = por %p133, %p134
      %p136 = scmp.ne.s32.totalorder %s125, %s126
      %p137 = scmp.eq.s32.totalorder %s14, 0
      %p138 = por %p136, %p137
      %p139 = scmp.ne.s32.totalorder %s125, %s126
      %p140 = scmp.eq.s32.totalorder %s15, 2
      %p141 = por %p139, %p140
      %p143 = scmp.ne.s32.totalorder %s126, %s142
      %p144 = scmp.eq.s32.totalorder %s15, 0
      %p145 = por %p143, %p144
      %p146 = scmp.le.s32.totalorder 1, %s9
      %p147 = scmp.lt.s32.totalorder %s9, 4
      %p148 = pnand %p146, %p147
      %p149 = pneg %p148
      // Predicated region
      $region9: #{translation_transformer_forward.31} parent=5 // pred_check
        _
      $region10: #{translation_transformer_forward.31} parent=5 // pred_check_branch
        %151 = sbr.rel (%p148) target = $region12
      $region11: #{translation_transformer_forward.31} parent=5 // pred_region
        %s152 = ssub.s32 %s9, 1
        // Predicated region
        $region13: #{translation_transformer_forward.31} parent=11 // pred_check
          %p153 = pneg %p56
        $region14: #{translation_transformer_forward.31} parent=11 // pred_check_branch
          %155 = sbr.rel (%p153) target = $region16
        $region15: #{translation_transformer_forward.31} parent=11 // pred_region
          %s156 = smul.u32 2, %s19
          %p157 = scmp.lt.s32.totalorder %s156, 1
          %s158 = scalar_select %p157, %s156, 1
          %p159 = scmp.lt.s32.totalorder %s21, 0
          %s160 = scalar_select %p159, %s21, 0
          %s161 = sadd.s32 %s160, %s158
          %s162 = smul.addr %s161, 8
          %s163 = scalar_lea.vmem %s0, %s162
          %s164 = smul.u32 2, %s19
        $region16: #{translation_transformer_forward.31} parent=11 // pred_fallthru
          _
      $region12: #{translation_transformer_forward.31} parent=5 // pred_fallthru
        _
      %p165 = scmp.lt.s32.totalorder %s9, 3
      // Predicated region
      $region17: #{translation_transformer_forward.31} parent=5 // pred_check
        %p166 = pneg %p165
      $region18: #{translation_transformer_forward.31} parent=5 // pred_check_branch
        %168 = sbr.rel (%p166) target = $region20
      $region19: #{translation_transformer_forward.31} parent=5 // pred_region
        // Predicated region
        $region21: #{translation_transformer_forward.31} parent=19 // pred_check
          %p169 = pneg %p78
        $region22: #{translation_transformer_forward.31} parent=19 // pred_check_branch
          %171 = sbr.rel (%p169) target = $region24
        $region23: #{translation_transformer_forward.31} parent=19 // pred_region
          %s172 = sand.u32 %s68, 1
          %s173 = sand.u32 %s68, 1
          %s174 = smul.addr %s173, 256
          %s175 = scalar_lea.vmem [#allocation3], %s174
          %s176 = smul.u32 16, %s18
          %s177 = smul.u32 2, %s17
          %s178 = smul.addr %s176, 6
          %s179 = sadd.s32 %s177, %s178
          %s180 = smul.addr %s179, 8
          %s181 = scalar_lea.vmem %s1, %s180
          // Predicated region
          $region25: #{translation_transformer_forward.31} parent=23 // pred_check
            _
          $region26: #{translation_transformer_forward.31} parent=23 // pred_check_branch
            %183 = sbr.rel (0) target = $region28
          $region27: #{translation_transformer_forward.31} parent=23 // pred_region
            // Predicated region
            $region29: #{translation_transformer_forward.31} parent=27 // pred_check
              _
            $region30: #{translation_transformer_forward.31} parent=27 // pred_check_branch
              %185 = sbr.rel (0) target = $region32
            $region31: #{translation_transformer_forward.31} parent=27 // pred_region
              loop: start=0, step=1, limit=1
              $region33: #{translation_transformer_forward.31} parent=31 // loop_pre_header
                _
              $region34: #{translation_transformer_forward.31} parent=31 // loop_header
                %s187 = sphi 0, %s191
                %p188 = scmp.ge.s32.totalorder %s187, 1
                %s192 = sphi %s181, %s181
                %s193 = sphi %s175, %s175
              $region35: #{translation_transformer_forward.31} parent=31 // loop_header_branch
                %190 = sbr.rel (%p188) target = $region39
              $region36: #{translation_transformer_forward.31} parent=31 // loop_body
                %v194 = vld [vmem:[%s192] sm:$0xff]
                %195 = vst [vmem:[%s193] sm:$0xff] %v194
                %v196 = vld [vmem:[%s192 + $0x8] sm:$0xff]
                %197 = vst [vmem:[%s193 + $0x8] sm:$0xff] %v196
                %v198 = vld [vmem:[%s192 + $0x30] sm:$0xff]
                %199 = vst [vmem:[%s193 + $0x10] sm:$0xff] %v198
                %v200 = vld [vmem:[%s192 + $0x38] sm:$0xff]
                %201 = vst [vmem:[%s193 + $0x18] sm:$0xff] %v200
                %v202 = vld [vmem:[%s192 + $0x60] sm:$0xff]
                %203 = vst [vmem:[%s193 + $0x20] sm:$0xff] %v202
                %v204 = vld [vmem:[%s192 + $0x68] sm:$0xff]
                %205 = vst [vmem:[%s193 + $0x28] sm:$0xff] %v204
                %v206 = vld [vmem:[%s192 + $0x90] sm:$0xff]
                %207 = vst [vmem:[%s193 + $0x30] sm:$0xff] %v206
                %v208 = vld [vmem:[%s192 + $0x98] sm:$0xff]
                %209 = vst [vmem:[%s193 + $0x38] sm:$0xff] %v208
                %v210 = vld [vmem:[%s192 + $0xc0] sm:$0xff]
                %211 = vst [vmem:[%s193 + $0x40] sm:$0xff] %v210
                %v212 = vld [vmem:[%s192 + $0xc8] sm:$0xff]
                %213 = vst [vmem:[%s193 + $0x48] sm:$0xff] %v212
                %v214 = vld [vmem:[%s192 + $0xf0] sm:$0xff]
                %215 = vst [vmem:[%s193 + $0x50] sm:$0xff] %v214
                %v216 = vld [vmem:[%s192 + $0xf8] sm:$0xff]
                %217 = vst [vmem:[%s193 + $0x58] sm:$0xff] %v216
                %v218 = vld [vmem:[%s192 + $0x120] sm:$0xff]
                %219 = vst [vmem:[%s193 + $0x60] sm:$0xff] %v218
                %v220 = vld [vmem:[%s192 + $0x128] sm:$0xff]
                %221 = vst [vmem:[%s193 + $0x68] sm:$0xff] %v220
                %v222 = vld [vmem:[%s192 + $0x150] sm:$0xff]
                %223 = vst [vmem:[%s193 + $0x70] sm:$0xff] %v222
                %v224 = vld [vmem:[%s192 + $0x158] sm:$0xff]
                %225 = vst [vmem:[%s193 + $0x78] sm:$0xff] %v224
                %v226 = vld [vmem:[%s192 + $0x180] sm:$0xff]
                %227 = vst [vmem:[%s193 + $0x80] sm:$0xff] %v226
                %v228 = vld [vmem:[%s192 + $0x188] sm:$0xff]
                %229 = vst [vmem:[%s193 + $0x88] sm:$0xff] %v228
                %v230 = vld [vmem:[%s192 + $0x1b0] sm:$0xff]
                %231 = vst [vmem:[%s193 + $0x90] sm:$0xff] %v230
                %v232 = vld [vmem:[%s192 + $0x1b8] sm:$0xff]
                %233 = vst [vmem:[%s193 + $0x98] sm:$0xff] %v232
                %v234 = vld [vmem:[%s192 + $0x1e0] sm:$0xff]
                %235 = vst [vmem:[%s193 + $0xa0] sm:$0xff] %v234
                %v236 = vld [vmem:[%s192 + $0x1e8] sm:$0xff]
                %237 = vst [vmem:[%s193 + $0xa8] sm:$0xff] %v236
                %v238 = vld [vmem:[%s192 + $0x210] sm:$0xff]
                %239 = vst [vmem:[%s193 + $0xb0] sm:$0xff] %v238
                %v240 = vld [vmem:[%s192 + $0x218] sm:$0xff]
                %241 = vst [vmem:[%s193 + $0xb8] sm:$0xff] %v240
                %v242 = vld [vmem:[%s192 + $0x240] sm:$0xff]
                %243 = vst [vmem:[%s193 + $0xc0] sm:$0xff] %v242
                %v244 = vld [vmem:[%s192 + $0x248] sm:$0xff]
                %245 = vst [vmem:[%s193 + $0xc8] sm:$0xff] %v244
                %v246 = vld [vmem:[%s192 + $0x270] sm:$0xff]
                %247 = vst [vmem:[%s193 + $0xd0] sm:$0xff] %v246
                %v248 = vld [vmem:[%s192 + $0x278] sm:$0xff]
                %249 = vst [vmem:[%s193 + $0xd8] sm:$0xff] %v248
                %v250 = vld [vmem:[%s192 + $0x2a0] sm:$0xff]
                %251 = vst [vmem:[%s193 + $0xe0] sm:$0xff] %v250
                %v252 = vld [vmem:[%s192 + $0x2a8] sm:$0xff]
                %253 = vst [vmem:[%s193 + $0xe8] sm:$0xff] %v252
                %v254 = vld [vmem:[%s192 + $0x2d0] sm:$0xff]
                %255 = vst [vmem:[%s193 + $0xf0] sm:$0xff] %v254
                %v256 = vld [vmem:[%s192 + $0x2d8] sm:$0xff]
                %257 = vst [vmem:[%s193 + $0xf8] sm:$0xff] %v256
              $region37: #{translation_transformer_forward.31} parent=31 // loop_footer
                %s191 = sadd.s32 1, %s187
              $region38: #{translation_transformer_forward.31} parent=31 // loop_footer_branch
                %186 = sbr.rel target = $region34
              $region39: #{translation_transformer_forward.31} parent=31 // loop_exit
                _
            $region32: #{translation_transformer_forward.31} parent=27 // pred_fallthru
              _
            // Predicated region
            $region40: #{translation_transformer_forward.31} parent=27 // pred_check
              _
            $region41: #{translation_transformer_forward.31} parent=27 // pred_check_branch
              %259 = sbr.rel target = $region43
            $region42: #{translation_transformer_forward.31} parent=27 // pred_region
              _
            $region43: #{translation_transformer_forward.31} parent=27 // pred_fallthru
              _
          $region28: #{translation_transformer_forward.31} parent=23 // pred_fallthru
            _
          %260 = vnop
        $region24: #{translation_transformer_forward.31} parent=19 // pred_fallthru
          _
        // Predicated region
        $region44: #{translation_transformer_forward.31} parent=19 // pred_check
          %p261 = pneg %p104
        $region45: #{translation_transformer_forward.31} parent=19 // pred_check_branch
          %263 = sbr.rel (%p261) target = $region47
        $region46: #{translation_transformer_forward.31} parent=19 // pred_region
          %s264 = smul.u32 2, %s17
          %p265 = scmp.lt.s32.totalorder %s264, 5
          %s266 = scalar_select %p265, %s264, 5
          %s267 = scalar_lea.vmem %s2, %s266
          %s268 = smul.u32 2, %s17
        $region47: #{translation_transformer_forward.31} parent=19 // pred_fallthru
          _
      $region20: #{translation_transformer_forward.31} parent=5 // pred_fallthru
        _
      %p269 = scmp.le.s32.totalorder 1, %s9
      %p270 = scmp.lt.s32.totalorder %s9, 4
      %p271 = pnand %p269, %p270
      %p272 = pneg %p271
      // Predicated region
      $region48: #{translation_transformer_forward.31} parent=5 // pred_check
        _
      $region49: #{translation_transformer_forward.31} parent=5 // pred_check_branch
        %274 = sbr.rel (%p271) target = $region51
      $region50: #{translation_transformer_forward.31} parent=5 // pred_region
        %s275 = ssub.s32 %s9, 1
        %s276 = sand.u32 %s71, 1
        %s277 = sand.u32 %s71, 1
        %s278 = smul.addr %s277, 256
        %s279 = scalar_lea.vmem [#allocation3], %s278
        // Predicated region
        $region52: #{translation_transformer_forward.31} parent=50 // pred_check
          %p280 = pneg %p84
        $region53: #{translation_transformer_forward.31} parent=50 // pred_check_branch
          %282 = sbr.rel (%p280) target = $region55
        $region54: #{translation_transformer_forward.31} parent=50 // pred_region
          _
        $region55: #{translation_transformer_forward.31} parent=50 // pred_fallthru
          _
        %s283 = smul.u32 2, %s19
        %p284 = scmp.lt.s32.totalorder %s283, 1
        %s285 = scalar_select %p284, %s283, 1
        %p286 = scmp.lt.s32.totalorder %s21, 0
        %s287 = scalar_select %p286, %s21, 0
        %s288 = sadd.s32 %s287, %s285
        %s289 = smul.addr %s288, 8
        %s290 = scalar_lea.vmem %s0, %s289
        %p291 = pneg %p56
        %p292 = pneg %p53
        %s293 = sand.u32 %s71, 1
        %s294 = sand.u32 %s71, 1
        %s295 = smul.addr %s294, 256
        %s296 = scalar_lea.vmem [#allocation3], %s295
        %p297 = pneg %p84
        %p298 = pneg %p81
        %s299 = smul.u32 2, %s20
        %p300 = scmp.lt.s32.totalorder %s299, 5
        %s301 = scalar_select %p300, %s299, 5
        %s302 = scalar_lea.vmem %s2, %s301
        %p303 = pneg %p110
        %p304 = pneg %p107
        %p305 = pneg %p138
        %p306 = pneg %p135
        %s307 = sand.u32 %s125, 1
        %s308 = sand.u32 %s125, 1
        %s309 = smul.addr %s308, 32
        %s310 = scalar_lea.vmem [#allocation4], %s309
        %s311 = smul.u32 2, %s19
        %p312 = scmp.lt.s32.totalorder %s311, 1
        %s313 = scalar_select %p312, %s311, 1
        %p314 = scmp.lt.s32.totalorder %s21, 0
        %s315 = scalar_select %p314, %s21, 0
        %s316 = sadd.s32 %s315, %s313
        %s317 = smul.addr %s316, 8
        %s318 = scalar_lea.vmem %s0, %s317
        %s319 = smul.u32 2, %s19
        %s320 = smul.u32 16, %s21
        %s321 = smul.u32 2, %s20
        %s322 = smul.u32 2, %s20
        %p323 = scmp.lt.s32.totalorder %s322, 5
        %s324 = scalar_select %p323, %s322, 5
        %s325 = scalar_lea.vmem %s2, %s324
        %s326 = smul.u32 2, %s20
        %s327 = smul.u32 2, %s19
        %s328 = smul.u32 2, %s20
        %p329 = scmp.eq.s32.totalorder %s21, 0
        // Predicated region
        $region56: #{translation_transformer_forward.31} parent=50 // pred_check
          %p330 = pneg %p329
        $region57: #{translation_transformer_forward.31} parent=50 // pred_check_branch
          %332 = sbr.rel (%p330) target = $region59
        $region58: #{translation_transformer_forward.31} parent=50 // pred_region
          %v333 = vld [vmem:[%s325] sm:$0x3]
          %v335 = vlaneseq
          %v336 = vshrl.u32 %v335, 7
          %v337 = vsub.s32 0, %v336
          %v338 = vrot.slane %v333, %v337
          %v339 = vlaneseq
          %v340 = vshrl.u32 %v339, 7
          %v341 = vsub.s32 1, %v340
          %v342 = vrot.slane %v333, %v341
          %345 = vst [vmem:[#allocation2] sm:$0xff] %v338
          %346 = vst [vmem:[#allocation2 + $0x8] sm:$0xff] %v342
          %347 = vst [vmem:[#allocation2 + $0x10] sm:$0xff] %v338
          %348 = vst [vmem:[#allocation2 + $0x18] sm:$0xff] %v342
        $region59: #{translation_transformer_forward.31} parent=50 // pred_fallthru
          _
        %v349 = vld [vmem:[#allocation2] sm:$0xff]
        %v350 = vld [vmem:[#allocation2 + $0x8] sm:$0xff]
        %v351 = vld [vmem:[#allocation2 + $0x10] sm:$0xff]
        %v352 = vld [vmem:[#allocation2 + $0x18] sm:$0xff]
        %v353 = vld [vmem:[%s318] sm:$0xff]
        %v354 = vld [vmem:[%s318 + $0x8] sm:$0xff]
        %v355 = vld [vmem:[%s279] sm:$0xff]
        %v356 = vld [vmem:[%s279 + $0x8] sm:$0xff]
        %v357 = vld [vmem:[%s279 + $0x10] sm:$0xff]
        %v358 = vld [vmem:[%s279 + $0x18] sm:$0xff]
        %v359 = vld [vmem:[%s279 + $0x20] sm:$0xff]
        %v360 = vld [vmem:[%s279 + $0x28] sm:$0xff]
        %v361 = vld [vmem:[%s279 + $0x30] sm:$0xff]
        %v362 = vld [vmem:[%s279 + $0x38] sm:$0xff]
        %v363 = vld [vmem:[%s279 + $0x40] sm:$0xff]
        %v364 = vld [vmem:[%s279 + $0x48] sm:$0xff]
        %v365 = vld [vmem:[%s279 + $0x50] sm:$0xff]
        %v366 = vld [vmem:[%s279 + $0x58] sm:$0xff]
        %v367 = vld [vmem:[%s279 + $0x60] sm:$0xff]
        %v368 = vld [vmem:[%s279 + $0x68] sm:$0xff]
        %v369 = vld [vmem:[%s279 + $0x70] sm:$0xff]
        %v370 = vld [vmem:[%s279 + $0x78] sm:$0xff]
        %v371 = vld [vmem:[%s279 + $0x80] sm:$0xff]
        %v372 = vld [vmem:[%s279 + $0x88] sm:$0xff]
        %v373 = vld [vmem:[%s279 + $0x90] sm:$0xff]
        %v374 = vld [vmem:[%s279 + $0x98] sm:$0xff]
        %v375 = vld [vmem:[%s279 + $0xa0] sm:$0xff]
        %v376 = vld [vmem:[%s279 + $0xa8] sm:$0xff]
        %v377 = vld [vmem:[%s279 + $0xb0] sm:$0xff]
        %v378 = vld [vmem:[%s279 + $0xb8] sm:$0xff]
        %v379 = vld [vmem:[%s279 + $0xc0] sm:$0xff]
        %v380 = vld [vmem:[%s279 + $0xc8] sm:$0xff]
        %v381 = vld [vmem:[%s279 + $0xd0] sm:$0xff]
        %v382 = vld [vmem:[%s279 + $0xd8] sm:$0xff]
        %v383 = vld [vmem:[%s279 + $0xe0] sm:$0xff]
        %v384 = vld [vmem:[%s279 + $0xe8] sm:$0xff]
        %v385 = vld [vmem:[%s279 + $0xf0] sm:$0xff]
        %v386 = vld [vmem:[%s279 + $0xf8] sm:$0xff]
        %387 = vmatprep.subr.mxu0 %v356
        %388 = vmatpush1.msra.mxu0 %v355
        %389 = vmatprep.subr.mxu0 %v358
        %390 = vmatpush1.msra.mxu0 %v357
        %391 = vmatprep.subr.mxu0 %v360
        %392 = vmatpush1.msra.mxu0 %v359
        %393 = vmatprep.subr.mxu0 %v362
        %394 = vmatpush1.msra.mxu0 %v361
        %395 = vmatprep.subr.mxu0 %v364
        %396 = vmatpush1.msra.mxu0 %v363
        %397 = vmatprep.subr.mxu0 %v366
        %398 = vmatpush1.msra.mxu0 %v365
        %399 = vmatprep.subr.mxu0 %v368
        %400 = vmatpush1.msra.mxu0 %v367
        %401 = vmatprep.subr.mxu0 %v370
        %402 = vmatpush1.msra.mxu0 %v369
        %403 = vmatprep.subr.mxu0 %v372
        %404 = vmatpush1.msra.mxu0 %v371
        %405 = vmatprep.subr.mxu0 %v374
        %406 = vmatpush1.msra.mxu0 %v373
        %407 = vmatprep.subr.mxu0 %v376
        %408 = vmatpush1.msra.mxu0 %v375
        %409 = vmatprep.subr.mxu0 %v378
        %410 = vmatpush1.msra.mxu0 %v377
        %411 = vmatprep.subr.mxu0 %v380
        %412 = vmatpush1.msra.mxu0 %v379
        %413 = vmatprep.subr.mxu0 %v382
        %414 = vmatpush1.msra.mxu0 %v381
        %415 = vmatprep.subr.mxu0 %v384
        %416 = vmatpush1.msra.mxu0 %v383
        %417 = vmatprep.subr.mxu0 %v386
        %418 = vmatpush1.msra.mxu0 %v385
        %419 = vmatprep.subr.mxu0 0.0
        %420 = vmatpush1.msra.mxu0 0.0
        %421 = vmatprep.subr.mxu0 0.0
        %422 = vmatpush1.msra.mxu0 0.0
        %423 = vmatprep.subr.mxu0 0.0
        %424 = vmatpush1.msra.mxu0 0.0
        %425 = vmatprep.subr.mxu0 0.0
        %426 = vmatpush1.msra.mxu0 0.0
        %427 = vmatprep.subr.mxu0 0.0
        %428 = vmatpush1.msra.mxu0 0.0
        %429 = vmatprep.subr.mxu0 0.0
        %430 = vmatpush1.msra.mxu0 0.0
        %431 = vmatprep.subr.mxu0 0.0
        %432 = vmatpush1.msra.mxu0 0.0
        %433 = vmatprep.subr.mxu0 0.0
        %434 = vmatpush1.msra.mxu0 0.0
        %435 = vmatprep.subr.mxu0 0.0
        %436 = vmatpush1.msra.mxu0 0.0
        %437 = vmatprep.subr.mxu0 0.0
        %438 = vmatpush1.msra.mxu0 0.0
        %439 = vmatprep.subr.mxu0 0.0
        %440 = vmatpush1.msra.mxu0 0.0
        %441 = vmatprep.subr.mxu0 0.0
        %442 = vmatpush1.msra.mxu0 0.0
        %443 = vmatprep.subr.mxu0 0.0
        %444 = vmatpush1.msra.mxu0 0.0
        %445 = vmatprep.subr.mxu0 0.0
        %446 = vmatpush1.msra.mxu0 0.0
        %447 = vmatprep.subr.mxu0 0.0
        %448 = vmatpush1.msra.mxu0 0.0
        %449 = vmatprep.subr.mxu0 0.0
        %450 = vmatpush1.msra.mxu0 0.0
        %451 = vmatprep.mubr.f32.mxu0 0.0
        %452 = vmatmul.mubr.f32.gmra.mrb[0].mxu0 %v353
        %v453 = vpop.f32.mrb[0].mxu0
        %v454 = vadd.f32 0.0, %v453
        %v455 = vpop.f32.mrb[0].mxu0
        %v456 = vadd.f32 0.0, %v455
        %457 = vmatprep.mubr.f32.mxu0 0.0
        %458 = vmatmul.mubr.f32.gmra.mrb[0].mxu0 %v354
        %v459 = vpop.f32.mrb[0].mxu0
        %v460 = vadd.f32 0.0, %v459
        %v461 = vpop.f32.mrb[0].mxu0
        %v462 = vadd.f32 0.0, %v461
        %463 = vdwg.mxu0
        %v464 = vadd.f32 %v349, %v454
        %v465 = vadd.f32 %v350, %v456
        %v466 = vadd.f32 %v351, %v460
        %v467 = vadd.f32 %v352, %v462
        %468 = vst [vmem:[#allocation2] sm:$0xff] %v464
        %469 = vst [vmem:[#allocation2 + $0x8] sm:$0xff] %v465
        %470 = vst [vmem:[#allocation2 + $0x10] sm:$0xff] %v466
        %471 = vst [vmem:[#allocation2 + $0x18] sm:$0xff] %v467
        // Predicated region
        $region60: #{translation_transformer_forward.31} parent=50 // pred_check
          %p472 = pneg %p329
        $region61: #{translation_transformer_forward.31} parent=50 // pred_check_branch
          %474 = sbr.rel (%p472) target = $region63
        $region62: #{translation_transformer_forward.31} parent=50 // pred_region
          %v475 = vld [vmem:[#allocation2] sm:$0xff]
          %v476 = vld [vmem:[#allocation2 + $0x8] sm:$0xff]
          %v477 = vld [vmem:[#allocation2 + $0x10] sm:$0xff]
          %v478 = vld [vmem:[#allocation2 + $0x18] sm:$0xff]
          %479 = vst [vmem:[%s310] sm:$0xff] %v475
          %480 = vst [vmem:[%s310 + $0x8] sm:$0xff] %v476
          %481 = vst [vmem:[%s310 + $0x10] sm:$0xff] %v477
          %482 = vst [vmem:[%s310 + $0x18] sm:$0xff] %v478
        $region63: #{translation_transformer_forward.31} parent=50 // pred_fallthru
          _
        %s483 = sand.u32 %s125, 1
        %s484 = sand.u32 %s125, 1
        %s485 = smul.addr %s484, 32
        %s486 = scalar_lea.vmem [#allocation4], %s485
        // Predicated region
        $region64: #{translation_transformer_forward.31} parent=50 // pred_check
          %p487 = pneg %p135
        $region65: #{translation_transformer_forward.31} parent=50 // pred_check_branch
          %489 = sbr.rel (%p487) target = $region67
        $region66: #{translation_transformer_forward.31} parent=50 // pred_region
          %s490 = smul.u32 2, %s19
          %s491 = smul.u32 2, %s20
          %s492 = smul.addr %s490, 6
          %s493 = sadd.s32 %s491, %s492
          %s494 = smul.addr %s493, 8
          %s495 = scalar_lea.vmem %s3, %s494
          // Predicated region
          $region68: #{translation_transformer_forward.31} parent=66 // pred_check
            _
          $region69: #{translation_transformer_forward.31} parent=66 // pred_check_branch
            %497 = sbr.rel (0) target = $region71
          $region70: #{translation_transformer_forward.31} parent=66 // pred_region
            // Predicated region
            $region72: #{translation_transformer_forward.31} parent=70 // pred_check
              _
            $region73: #{translation_transformer_forward.31} parent=70 // pred_check_branch
              %499 = sbr.rel (0) target = $region75
            $region74: #{translation_transformer_forward.31} parent=70 // pred_region
              loop: start=0, step=1, limit=1
              $region76: #{translation_transformer_forward.31} parent=74 // loop_pre_header
                _
              $region77: #{translation_transformer_forward.31} parent=74 // loop_header
                %s501 = sphi 0, %s505
                %p502 = scmp.ge.s32.totalorder %s501, 1
                %s506 = sphi %s486, %s486
                %s507 = sphi %s495, %s495
              $region78: #{translation_transformer_forward.31} parent=74 // loop_header_branch
                %504 = sbr.rel (%p502) target = $region82
              $region79: #{translation_transformer_forward.31} parent=74 // loop_body
                %v508 = vld [vmem:[%s506] sm:$0xff]
                %509 = vst [vmem:[%s507] sm:$0xff] %v508
                %v510 = vld [vmem:[%s506 + $0x8] sm:$0xff]
                %511 = vst [vmem:[%s507 + $0x8] sm:$0xff] %v510
                %v512 = vld [vmem:[%s506 + $0x10] sm:$0xff]
                %513 = vst [vmem:[%s507 + $0x30] sm:$0xff] %v512
                %v514 = vld [vmem:[%s506 + $0x18] sm:$0xff]
                %515 = vst [vmem:[%s507 + $0x38] sm:$0xff] %v514
              $region80: #{translation_transformer_forward.31} parent=74 // loop_footer
                %s505 = sadd.s32 1, %s501
              $region81: #{translation_transformer_forward.31} parent=74 // loop_footer_branch
                %500 = sbr.rel target = $region77
              $region82: #{translation_transformer_forward.31} parent=74 // loop_exit
                _
            $region75: #{translation_transformer_forward.31} parent=70 // pred_fallthru
              _
            // Predicated region
            $region83: #{translation_transformer_forward.31} parent=70 // pred_check
              _
            $region84: #{translation_transformer_forward.31} parent=70 // pred_check_branch
              %517 = sbr.rel target = $region86
            $region85: #{translation_transformer_forward.31} parent=70 // pred_region
              _
            $region86: #{translation_transformer_forward.31} parent=70 // pred_fallthru
              _
          $region71: #{translation_transformer_forward.31} parent=66 // pred_fallthru
            _
          %518 = vnop
        $region67: #{translation_transformer_forward.31} parent=50 // pred_fallthru
          _
      $region51: #{translation_transformer_forward.31} parent=5 // pred_fallthru
        _
      %p519 = scmp.le.s32.totalorder 2, %s9
      // Predicated region
      $region87: #{translation_transformer_forward.31} parent=5 // pred_check
        %p520 = pneg %p519
      $region88: #{translation_transformer_forward.31} parent=5 // pred_check_branch
        %522 = sbr.rel (%p520) target = $region90
      $region89: #{translation_transformer_forward.31} parent=5 // pred_region
        %s523 = ssub.s32 %s9, 2
        // Predicated region
        $region91: #{translation_transformer_forward.31} parent=89 // pred_check
          %p524 = pneg %p141
        $region92: #{translation_transformer_forward.31} parent=89 // pred_check_branch
          %526 = sbr.rel (%p524) target = $region94
        $region93: #{translation_transformer_forward.31} parent=89 // pred_region
          %s527 = sand.u32 %s126, 1
          %s528 = sand.u32 %s126, 1
          %s529 = smul.addr %s528, 32
          %s530 = scalar_lea.vmem [#allocation4], %s529
        $region94: #{translation_transformer_forward.31} parent=89 // pred_fallthru
          _
      $region90: #{translation_transformer_forward.31} parent=5 // pred_fallthru
        _
    $region6: #{translation_transformer_forward.31} parent=1 // loop_footer
      %s13 = sadd.s32 1, %s9
    $region7: #{translation_transformer_forward.31} parent=1 // loop_footer_branch
      %8 = sbr.rel target = $region3
    $region8: #{translation_transformer_forward.31} parent=1 // loop_exit
      _

// kernel: translation_transformer_forward.34
$region0: #{translation_transformer_forward.34}
  #allocation0 [shape = 'u32[]', space=smem, size = 0x4, offset = 0x4, fixed_abs, tag = 'smem constant byte address 0x4 - core index']
  #allocation1 [shape = 'u32[144,128]{1,0:T(1,128)}', space=vmem, size = 0x12000, scoped, tag = 'internal scratch']
  #allocation2 [shape = 'f32[16,128]{1,0:T(8,128)}', space=vmem, size = 0x2000, scoped, tag = 'scratch operand']
  %s0 = inlined_call_operand.vmem [shape: f32[16,128], index: 0, kind: input, shape index: {}]
  %s1 = inlined_call_operand.vmem [shape: f32[128,128], index: 1, kind: input, shape index: {}]
  %s2 = inlined_call_operand.vmem [shape: f32[1,128], index: 2, kind: input, shape index: {}]
  %s3 = inlined_call_operand.vmem [shape: f32[16,128], index: 3, kind: output, shape index: {}]
  %s4 = sld [smem:[#allocation0]]
  $region30: #{translation_transformer_forward.34} parent=0
    _
  %s6 = ssub.s32 1, %s4
  %s7 = scalar_select 0, %s6, %s4
  // Predicated region
  $region2: #{translation_transformer_forward.34} parent=0 // pred_check
    _
  $region3: #{translation_transformer_forward.34} parent=0 // pred_check_branch
    %9 = sbr.rel (0) target = $region5
  $region4: #{translation_transformer_forward.34} parent=0 // pred_region
    _
  $region5: #{translation_transformer_forward.34} parent=0 // pred_fallthru
    _
  // Predicated region
  $region6: #{translation_transformer_forward.34} parent=0 // pred_check
    _
  $region7: #{translation_transformer_forward.34} parent=0 // pred_check_branch
    %11 = sbr.rel (0) target = $region9
  $region8: #{translation_transformer_forward.34} parent=0 // pred_region
    _
  $region9: #{translation_transformer_forward.34} parent=0 // pred_fallthru
    _
  // Predicated region
  $region10: #{translation_transformer_forward.34} parent=0 // pred_check
    _
  $region11: #{translation_transformer_forward.34} parent=0 // pred_check_branch
    %13 = sbr.rel (0) target = $region13
  $region12: #{translation_transformer_forward.34} parent=0 // pred_region
    _
  $region13: #{translation_transformer_forward.34} parent=0 // pred_fallthru
    _
  %p14 = scmp.eq.s32.totalorder 0, 0
  // Predicated region
  $region14: #{translation_transformer_forward.34} parent=0 // pred_check
    %p15 = pneg %p14
  $region15: #{translation_transformer_forward.34} parent=0 // pred_check_branch
    %17 = sbr.rel (%p15) target = $region17
  $region16: #{translation_transformer_forward.34} parent=0 // pred_region
    %v18 = vld [vmem:[%s2] sm:$0x1]
    %v20 = vlaneseq
    %v21 = vshrl.u32 %v20, 7
    %v22 = vsub.s32 0, %v21
    %v23 = vrot.slane %v18, %v22
    %25 = vst [vmem:[#allocation2] sm:$0xff] %v23
    %26 = vst [vmem:[#allocation2 + $0x8] sm:$0xff] %v23
  $region17: #{translation_transformer_forward.34} parent=0 // pred_fallthru
    _
  %v27 = vld [vmem:[#allocation2] sm:$0xff]
  %v28 = vld [vmem:[#allocation2 + $0x8] sm:$0xff]
  %v29 = vld [vmem:[%s0] sm:$0xff]
  %v30 = vld [vmem:[%s0 + $0x8] sm:$0xff]
  %v31 = vld [vmem:[%s1] sm:$0xff]
  %v32 = vld [vmem:[%s1 + $0x8] sm:$0xff]
  %v33 = vld [vmem:[%s1 + $0x10] sm:$0xff]
  %v34 = vld [vmem:[%s1 + $0x18] sm:$0xff]
  %v35 = vld [vmem:[%s1 + $0x20] sm:$0xff]
  %v36 = vld [vmem:[%s1 + $0x28] sm:$0xff]
  %v37 = vld [vmem:[%s1 + $0x30] sm:$0xff]
  %v38 = vld [vmem:[%s1 + $0x38] sm:$0xff]
  %v39 = vld [vmem:[%s1 + $0x40] sm:$0xff]
  %v40 = vld [vmem:[%s1 + $0x48] sm:$0xff]
  %v41 = vld [vmem:[%s1 + $0x50] sm:$0xff]
  %v42 = vld [vmem:[%s1 + $0x58] sm:$0xff]
  %v43 = vld [vmem:[%s1 + $0x60] sm:$0xff]
  %v44 = vld [vmem:[%s1 + $0x68] sm:$0xff]
  %v45 = vld [vmem:[%s1 + $0x70] sm:$0xff]
  %v46 = vld [vmem:[%s1 + $0x78] sm:$0xff]
  %47 = vmatprep.subr.mxu0 0.0
  %48 = vmatpush1.msra.mxu0 %v31
  %49 = vmatprep.subr.mxu0 0.0
  %50 = vmatpush1.msra.mxu0 %v32
  %51 = vmatprep.subr.mxu0 0.0
  %52 = vmatpush1.msra.mxu0 %v33
  %53 = vmatprep.subr.mxu0 0.0
  %54 = vmatpush1.msra.mxu0 %v34
  %55 = vmatprep.subr.mxu0 0.0
  %56 = vmatpush1.msra.mxu0 %v35
  %57 = vmatprep.subr.mxu0 0.0
  %58 = vmatpush1.msra.mxu0 %v36
  %59 = vmatprep.subr.mxu0 0.0
  %60 = vmatpush1.msra.mxu0 %v37
  %61 = vmatprep.subr.mxu0 0.0
  %62 = vmatpush1.msra.mxu0 %v38
  %63 = vmatprep.subr.mxu0 0.0
  %64 = vmatpush1.msra.mxu0 %v39
  %65 = vmatprep.subr.mxu0 0.0
  %66 = vmatpush1.msra.mxu0 %v40
  %67 = vmatprep.subr.mxu0 0.0
  %68 = vmatpush1.msra.mxu0 %v41
  %69 = vmatprep.subr.mxu0 0.0
  %70 = vmatpush1.msra.mxu0 %v42
  %71 = vmatprep.subr.mxu0 0.0
  %72 = vmatpush1.msra.mxu0 %v43
  %73 = vmatprep.subr.mxu0 0.0
  %74 = vmatpush1.msra.mxu0 %v44
  %75 = vmatprep.subr.mxu0 0.0
  %76 = vmatpush1.msra.mxu0 %v45
  %77 = vmatprep.subr.mxu0 0.0
  %78 = vmatpush1.msra.mxu0 %v46
  %79 = vmatprep.subr.mxu0 0.0
  %80 = vmatpush1.msra.mxu0 0.0
  %81 = vmatprep.subr.mxu0 0.0
  %82 = vmatpush1.msra.mxu0 0.0
  %83 = vmatprep.subr.mxu0 0.0
  %84 = vmatpush1.msra.mxu0 0.0
  %85 = vmatprep.subr.mxu0 0.0
  %86 = vmatpush1.msra.mxu0 0.0
  %87 = vmatprep.subr.mxu0 0.0
  %88 = vmatpush1.msra.mxu0 0.0
  %89 = vmatprep.subr.mxu0 0.0
  %90 = vmatpush1.msra.mxu0 0.0
  %91 = vmatprep.subr.mxu0 0.0
  %92 = vmatpush1.msra.mxu0 0.0
  %93 = vmatprep.subr.mxu0 0.0
  %94 = vmatpush1.msra.mxu0 0.0
  %95 = vmatprep.subr.mxu0 0.0
  %96 = vmatpush1.msra.mxu0 0.0
  %97 = vmatprep.subr.mxu0 0.0
  %98 = vmatpush1.msra.mxu0 0.0
  %99 = vmatprep.subr.mxu0 0.0
  %100 = vmatpush1.msra.mxu0 0.0
  %101 = vmatprep.subr.mxu0 0.0
  %102 = vmatpush1.msra.mxu0 0.0
  %103 = vmatprep.subr.mxu0 0.0
  %104 = vmatpush1.msra.mxu0 0.0
  %105 = vmatprep.subr.mxu0 0.0
  %106 = vmatpush1.msra.mxu0 0.0
  %107 = vmatprep.subr.mxu0 0.0
  %108 = vmatpush1.msra.mxu0 0.0
  %109 = vmatprep.subr.mxu0 0.0
  %110 = vmatpush1.msra.mxu0 0.0
  %111 = vmatprep.mubr.f32.mxu0 0.0
  %112 = vmatmul.mubr.f32.gmra.mrb[0].mxu0 %v29
  %v113 = vpop.f32.mrb[0].mxu0
  %v114 = vadd.f32 0.0, %v113
  %v115 = vpop.f32.mrb[0].mxu0
  %116 = vmatprep.mubr.f32.mxu0 0.0
  %117 = vmatmul.mubr.f32.gmra.mrb[0].mxu0 %v30
  %v118 = vpop.f32.mrb[0].mxu0
  %v119 = vadd.f32 0.0, %v118
  %v120 = vpop.f32.mrb[0].mxu0
  %121 = vdwg.mxu0
  %v122 = vadd.f32 %v27, %v114
  %v123 = vadd.f32 %v28, %v119
  %124 = vst [vmem:[#allocation2] sm:$0xff] %v122
  %125 = vst [vmem:[#allocation2 + $0x8] sm:$0xff] %v123
  // Predicated region
  $region18: #{translation_transformer_forward.34} parent=0 // pred_check
    %p126 = pneg %p14
  $region19: #{translation_transformer_forward.34} parent=0 // pred_check_branch
    %128 = sbr.rel (%p126) target = $region21
  $region20: #{translation_transformer_forward.34} parent=0 // pred_region
    %v129 = vld [vmem:[#allocation2] sm:$0xff]
    %v130 = vld [vmem:[#allocation2 + $0x8] sm:$0xff]
    %v131 = vmul.f32 %v129, 0.5
    %v132 = vmul.f32 %v130, 0.5
    %v133 = vmul.f32 %v129, 0.70710677
    %v134 = vmul.f32 %v130, 0.70710677
    %v135 = verf.f32.pop %v133
    %v136 = verf.f32.pop %v134
    %v137 = vadd.f32 %v135, 1.0
    %v138 = vadd.f32 %v136, 1.0
    %v139 = vmul.f32 %v131, %v137
    %v140 = vmul.f32 %v132, %v138
    %141 = vst [vmem:[%s3] sm:$0xff] %v139
    %142 = vst [vmem:[%s3 + $0x8] sm:$0xff] %v140
  $region21: #{translation_transformer_forward.34} parent=0 // pred_fallthru
    _
  // Predicated region
  $region22: #{translation_transformer_forward.34} parent=0 // pred_check
    _
  $region23: #{translation_transformer_forward.34} parent=0 // pred_check_branch
    %144 = sbr.rel (0) target = $region25
  $region24: #{translation_transformer_forward.34} parent=0 // pred_region
    _
  $region25: #{translation_transformer_forward.34} parent=0 // pred_fallthru
    _
  // Predicated region
  $region26: #{translation_transformer_forward.34} parent=0 // pred_check
    _
  $region27: #{translation_transformer_forward.34} parent=0 // pred_check_branch
    %146 = sbr.rel (0) target = $region29
  $region28: #{translation_transformer_forward.34} parent=0 // pred_region
    _
  $region29: #{translation_transformer_forward.34} parent=0 // pred_fallthru
    _

// kernel: translation_transformer_forward.35
$region0: #{translation_transformer_forward.35}
  #allocation0 [shape = 'u32[]', space=smem, size = 0x4, offset = 0x4, fixed_abs, tag = 'smem constant byte address 0x4 - core index']
  #allocation1 [shape = 'u32[144,128]{1,0:T(1,128)}', space=vmem, size = 0x12000, scoped, tag = 'internal scratch']
  #allocation2 [shape = 'f32[16,128]{1,0:T(8,128)}', space=vmem, size = 0x2000, scoped, tag = 'scratch operand']
  %s0 = inlined_call_operand.vmem [shape: f32[16,128], index: 0, kind: input, shape index: {}]
  %s1 = inlined_call_operand.vmem [shape: f32[128,128], index: 1, kind: input, shape index: {}]
  %s2 = inlined_call_operand.vmem [shape: f32[1,128], index: 2, kind: input, shape index: {}]
  %s3 = inlined_call_operand.vmem [shape: f32[16,128], index: 3, kind: input, shape index: {}]
  %s4 = inlined_call_operand.vmem [shape: f32[1,128], index: 4, kind: input, shape index: {}]
  %s5 = inlined_call_operand.vmem [shape: f32[1,128], index: 5, kind: input, shape index: {}]
  %s6 = inlined_call_operand.vmem [shape: f32[16,128], index: 6, kind: output, shape index: {}]
  %s7 = sld [smem:[#allocation0]]
  $region42: #{translation_transformer_forward.35} parent=0
    _
  %s9 = ssub.s32 1, %s7
  %s10 = scalar_select 0, %s9, %s7
  // Predicated region
  $region2: #{translation_transformer_forward.35} parent=0 // pred_check
    _
  $region3: #{translation_transformer_forward.35} parent=0 // pred_check_branch
    %12 = sbr.rel (0) target = $region5
  $region4: #{translation_transformer_forward.35} parent=0 // pred_region
    _
  $region5: #{translation_transformer_forward.35} parent=0 // pred_fallthru
    _
  // Predicated region
  $region6: #{translation_transformer_forward.35} parent=0 // pred_check
    _
  $region7: #{translation_transformer_forward.35} parent=0 // pred_check_branch
    %14 = sbr.rel (0) target = $region9
  $region8: #{translation_transformer_forward.35} parent=0 // pred_region
    _
  $region9: #{translation_transformer_forward.35} parent=0 // pred_fallthru
    _
  // Predicated region
  $region10: #{translation_transformer_forward.35} parent=0 // pred_check
    _
  $region11: #{translation_transformer_forward.35} parent=0 // pred_check_branch
    %16 = sbr.rel (0) target = $region13
  $region12: #{translation_transformer_forward.35} parent=0 // pred_region
    _
  $region13: #{translation_transformer_forward.35} parent=0 // pred_fallthru
    _
  // Predicated region
  $region14: #{translation_transformer_forward.35} parent=0 // pred_check
    _
  $region15: #{translation_transformer_forward.35} parent=0 // pred_check_branch
    %18 = sbr.rel (0) target = $region17
  $region16: #{translation_transformer_forward.35} parent=0 // pred_region
    _
  $region17: #{translation_transformer_forward.35} parent=0 // pred_fallthru
    _
  // Predicated region
  $region18: #{translation_transformer_forward.35} parent=0 // pred_check
    _
  $region19: #{translation_transformer_forward.35} parent=0 // pred_check_branch
    %20 = sbr.rel (0) target = $region21
  $region20: #{translation_transformer_forward.35} parent=0 // pred_region
    _
  $region21: #{translation_transformer_forward.35} parent=0 // pred_fallthru
    _
  // Predicated region
  $region22: #{translation_transformer_forward.35} parent=0 // pred_check
    _
  $region23: #{translation_transformer_forward.35} parent=0 // pred_check_branch
    %22 = sbr.rel (0) target = $region25
  $region24: #{translation_transformer_forward.35} parent=0 // pred_region
    _
  $region25: #{translation_transformer_forward.35} parent=0 // pred_fallthru
    _
  %p23 = scmp.eq.s32.totalorder 0, 0
  // Predicated region
  $region26: #{translation_transformer_forward.35} parent=0 // pred_check
    %p24 = pneg %p23
  $region27: #{translation_transformer_forward.35} parent=0 // pred_check_branch
    %26 = sbr.rel (%p24) target = $region29
  $region28: #{translation_transformer_forward.35} parent=0 // pred_region
    %v27 = vld [vmem:[%s2] sm:$0x1]
    %v29 = vlaneseq
    %v30 = vshrl.u32 %v29, 7
    %v31 = vsub.s32 0, %v30
    %v32 = vrot.slane %v27, %v31
    %34 = vst [vmem:[#allocation2] sm:$0xff] %v32
    %35 = vst [vmem:[#allocation2 + $0x8] sm:$0xff] %v32
  $region29: #{translation_transformer_forward.35} parent=0 // pred_fallthru
    _
  %v36 = vld [vmem:[#allocation2] sm:$0xff]
  %v37 = vld [vmem:[#allocation2 + $0x8] sm:$0xff]
  %v38 = vld [vmem:[%s0] sm:$0xff]
  %v39 = vld [vmem:[%s0 + $0x8] sm:$0xff]
  %v40 = vld [vmem:[%s1] sm:$0xff]
  %v41 = vld [vmem:[%s1 + $0x8] sm:$0xff]
  %v42 = vld [vmem:[%s1 + $0x10] sm:$0xff]
  %v43 = vld [vmem:[%s1 + $0x18] sm:$0xff]
  %v44 = vld [vmem:[%s1 + $0x20] sm:$0xff]
  %v45 = vld [vmem:[%s1 + $0x28] sm:$0xff]
  %v46 = vld [vmem:[%s1 + $0x30] sm:$0xff]
  %v47 = vld [vmem:[%s1 + $0x38] sm:$0xff]
  %v48 = vld [vmem:[%s1 + $0x40] sm:$0xff]
  %v49 = vld [vmem:[%s1 + $0x48] sm:$0xff]
  %v50 = vld [vmem:[%s1 + $0x50] sm:$0xff]
  %v51 = vld [vmem:[%s1 + $0x58] sm:$0xff]
  %v52 = vld [vmem:[%s1 + $0x60] sm:$0xff]
  %v53 = vld [vmem:[%s1 + $0x68] sm:$0xff]
  %v54 = vld [vmem:[%s1 + $0x70] sm:$0xff]
  %v55 = vld [vmem:[%s1 + $0x78] sm:$0xff]
  %56 = vmatprep.subr.mxu0 0.0
  %57 = vmatpush1.msra.mxu0 %v40
  %58 = vmatprep.subr.mxu0 0.0
  %59 = vmatpush1.msra.mxu0 %v41
  %60 = vmatprep.subr.mxu0 0.0
  %61 = vmatpush1.msra.mxu0 %v42
  %62 = vmatprep.subr.mxu0 0.0
  %63 = vmatpush1.msra.mxu0 %v43
  %64 = vmatprep.subr.mxu0 0.0
  %65 = vmatpush1.msra.mxu0 %v44
  %66 = vmatprep.subr.mxu0 0.0
  %67 = vmatpush1.msra.mxu0 %v45
  %68 = vmatprep.subr.mxu0 0.0
  %69 = vmatpush1.msra.mxu0 %v46
  %70 = vmatprep.subr.mxu0 0.0
  %71 = vmatpush1.msra.mxu0 %v47
  %72 = vmatprep.subr.mxu0 0.0
  %73 = vmatpush1.msra.mxu0 %v48
  %74 = vmatprep.subr.mxu0 0.0
  %75 = vmatpush1.msra.mxu0 %v49
  %76 = vmatprep.subr.mxu0 0.0
  %77 = vmatpush1.msra.mxu0 %v50
  %78 = vmatprep.subr.mxu0 0.0
  %79 = vmatpush1.msra.mxu0 %v51
  %80 = vmatprep.subr.mxu0 0.0
  %81 = vmatpush1.msra.mxu0 %v52
  %82 = vmatprep.subr.mxu0 0.0
  %83 = vmatpush1.msra.mxu0 %v53
  %84 = vmatprep.subr.mxu0 0.0
  %85 = vmatpush1.msra.mxu0 %v54
  %86 = vmatprep.subr.mxu0 0.0
  %87 = vmatpush1.msra.mxu0 %v55
  %88 = vmatprep.subr.mxu0 0.0
  %89 = vmatpush1.msra.mxu0 0.0
  %90 = vmatprep.subr.mxu0 0.0
  %91 = vmatpush1.msra.mxu0 0.0
  %92 = vmatprep.subr.mxu0 0.0
  %93 = vmatpush1.msra.mxu0 0.0
  %94 = vmatprep.subr.mxu0 0.0
  %95 = vmatpush1.msra.mxu0 0.0
  %96 = vmatprep.subr.mxu0 0.0
  %97 = vmatpush1.msra.mxu0 0.0
  %98 = vmatprep.subr.mxu0 0.0
  %99 = vmatpush1.msra.mxu0 0.0
  %100 = vmatprep.subr.mxu0 0.0
  %101 = vmatpush1.msra.mxu0 0.0
  %102 = vmatprep.subr.mxu0 0.0
  %103 = vmatpush1.msra.mxu0 0.0
  %104 = vmatprep.subr.mxu0 0.0
  %105 = vmatpush1.msra.mxu0 0.0
  %106 = vmatprep.subr.mxu0 0.0
  %107 = vmatpush1.msra.mxu0 0.0
  %108 = vmatprep.subr.mxu0 0.0
  %109 = vmatpush1.msra.mxu0 0.0
  %110 = vmatprep.subr.mxu0 0.0
  %111 = vmatpush1.msra.mxu0 0.0
  %112 = vmatprep.subr.mxu0 0.0
  %113 = vmatpush1.msra.mxu0 0.0
  %114 = vmatprep.subr.mxu0 0.0
  %115 = vmatpush1.msra.mxu0 0.0
  %116 = vmatprep.subr.mxu0 0.0
  %117 = vmatpush1.msra.mxu0 0.0
  %118 = vmatprep.subr.mxu0 0.0
  %119 = vmatpush1.msra.mxu0 0.0
  %120 = vmatprep.mubr.f32.mxu0 0.0
  %121 = vmatmul.mubr.f32.gmra.mrb[0].mxu0 %v38
  %v122 = vpop.f32.mrb[0].mxu0
  %v123 = vadd.f32 0.0, %v122
  %v124 = vpop.f32.mrb[0].mxu0
  %125 = vmatprep.mubr.f32.mxu0 0.0
  %126 = vmatmul.mubr.f32.gmra.mrb[0].mxu0 %v39
  %v127 = vpop.f32.mrb[0].mxu0
  %v128 = vadd.f32 0.0, %v127
  %v129 = vpop.f32.mrb[0].mxu0
  %130 = vdwg.mxu0
  %v131 = vadd.f32 %v36, %v123
  %v132 = vadd.f32 %v37, %v128
  %133 = vst [vmem:[#allocation2] sm:$0xff] %v131
  %134 = vst [vmem:[#allocation2 + $0x8] sm:$0xff] %v132
  // Predicated region
  $region30: #{translation_transformer_forward.35} parent=0 // pred_check
    %p135 = pneg %p23
  $region31: #{translation_transformer_forward.35} parent=0 // pred_check_branch
    %137 = sbr.rel (%p135) target = $region33
  $region32: #{translation_transformer_forward.35} parent=0 // pred_region
    %v138 = vld [vmem:[#allocation2] sm:$0xff]
    %v139 = vld [vmem:[#allocation2 + $0x8] sm:$0xff]
    %v140 = vld [vmem:[%s3] sm:$0xff]
    %v141 = vld [vmem:[%s3 + $0x8] sm:$0xff]
    %v142 = vadd.f32 %v138, %v140
    %v143 = vadd.f32 %v139, %v141
    %144 = vadd.xlane.f32.xlu0 %v142
    %v145 = vpop.xlane.xlu0 %144
    %146 = vadd.xlane.f32.xlu0 %v143
    %v147 = vpop.xlane.xlu0 %146
    %v148 = vmul.f32 %v145, 0.03125
    %v149 = vmul.f32 %v147, 0.03125
    %v150 = vsub.f32 %v142, %v148
    %v151 = vsub.f32 %v143, %v149
    %v152 = vmul.f32 %v150, %v150
    %v153 = vmul.f32 %v151, %v151
    %154 = vadd.xlane.f32.xlu0 %v152
    %v155 = vpop.xlane.xlu0 %154
    %156 = vadd.xlane.f32.xlu0 %v153
    %v157 = vpop.xlane.xlu0 %156
    %v158 = vmul.f32 %v148, 96.0
    %v159 = vmul.f32 %v149, 96.0
    %v160 = vmul.f32 %v158, %v148
    %v161 = vmul.f32 %v159, %v149
    %v162 = vsub.f32 %v155, %v160
    %v163 = vsub.f32 %v157, %v161
    %v164 = vmul.f32 %v162, 0.03125
    %v165 = vmul.f32 %v163, 0.03125
    %v166 = vadd.f32 %v164, 1e-05
    %v167 = vadd.f32 %v165, 1e-05
    %v168 = vrsqrt.pop %v166
    %v169 = vrsqrt.pop %v167
    %v170 = vmul.f32 %v150, %v168
    %v171 = vmul.f32 %v151, %v169
    %v172 = vld [vmem:[%s4] sm:$0x1]
    %v174 = vlaneseq
    %v175 = vshrl.u32 %v174, 7
    %v176 = vsub.s32 0, %v175
    %v177 = vrot.slane %v172, %v176
    %v179 = vmul.f32 %v170, %v177
    %v180 = vmul.f32 %v171, %v177
    %v181 = vld [vmem:[%s5] sm:$0x1]
    %v183 = vlaneseq
    %v184 = vshrl.u32 %v183, 7
    %v185 = vsub.s32 0, %v184
    %v186 = vrot.slane %v181, %v185
    %v188 = vadd.f32 %v179, %v186
    %v189 = vadd.f32 %v180, %v186
    %190 = vst [vmem:[%s6] sm:$0xff] %v188
    %191 = vst [vmem:[%s6 + $0x8] sm:$0xff] %v189
  $region33: #{translation_transformer_forward.35} parent=0 // pred_fallthru
    _
  // Predicated region
  $region34: #{translation_transformer_forward.35} parent=0 // pred_check
    _
  $region35: #{translation_transformer_forward.35} parent=0 // pred_check_branch
    %193 = sbr.rel (0) target = $region37
  $region36: #{translation_transformer_forward.35} parent=0 // pred_region
    _
  $region37: #{translation_transformer_forward.35} parent=0 // pred_fallthru
    _
  // Predicated region
  $region38: #{translation_transformer_forward.35} parent=0 // pred_check
    _
  $region39: #{translation_transformer_forward.35} parent=0 // pred_check_branch
    %195 = sbr.rel (0) target = $region41
  $region40: #{translation_transformer_forward.35} parent=0 // pred_region
    _
  $region41: #{translation_transformer_forward.35} parent=0 // pred_fallthru
    _

// kernel: translation_transformer_forward.32
$region0: #{translation_transformer_forward.32}
  #allocation0 [shape = 'u32[]', space=smem, size = 0x4, offset = 0x4, fixed_abs, tag = 'smem constant byte address 0x4 - core index']
  #allocation1 [shape = 'u32[144,128]{1,0:T(1,128)}', space=vmem, size = 0x12000, scoped, tag = 'internal scratch']
  %s0 = inlined_call_operand.vmem [shape: f32[4,8,128], index: 0, kind: input, shape index: {}]
  %s1 = inlined_call_operand.vmem [shape: f32[4,8,128], index: 1, kind: input, shape index: {}]
  %s2 = inlined_call_operand.vmem [shape: f32[4,8,128], index: 2, kind: input, shape index: {}]
  %s3 = inlined_call_operand.vmem [shape: f32[4,8,128], index: 3, kind: output, shape index: {}]
  %s4 = sld [smem:[#allocation0]]
  $region22: #{translation_transformer_forward.32} parent=0
    _
  %s6 = ssub.s32 1, %s4
  %s7 = scalar_select 0, %s6, %s4
  // Predicated region
  $region2: #{translation_transformer_forward.32} parent=0 // pred_check
    _
  $region3: #{translation_transformer_forward.32} parent=0 // pred_check_branch
    %9 = sbr.rel (0) target = $region5
  $region4: #{translation_transformer_forward.32} parent=0 // pred_region
    _
  $region5: #{translation_transformer_forward.32} parent=0 // pred_fallthru
    _
  // Predicated region
  $region6: #{translation_transformer_forward.32} parent=0 // pred_check
    _
  $region7: #{translation_transformer_forward.32} parent=0 // pred_check_branch
    %11 = sbr.rel (0) target = $region9
  $region8: #{translation_transformer_forward.32} parent=0 // pred_region
    _
  $region9: #{translation_transformer_forward.32} parent=0 // pred_fallthru
    _
  // Predicated region
  $region10: #{translation_transformer_forward.32} parent=0 // pred_check
    _
  $region11: #{translation_transformer_forward.32} parent=0 // pred_check_branch
    %13 = sbr.rel (0) target = $region13
  $region12: #{translation_transformer_forward.32} parent=0 // pred_region
    _
  $region13: #{translation_transformer_forward.32} parent=0 // pred_fallthru
    _
  %v14 = vld [vmem:[%s0] sm:$0xff]
  %v15 = vld [vmem:[%s0 + $0x8] sm:$0xff]
  %v16 = vld [vmem:[%s0 + $0x10] sm:$0xff]
  %v17 = vld [vmem:[%s0 + $0x18] sm:$0xff]
  %v18 = vld [vmem:[%s1] sm:$0xff]
  %v19 = vld [vmem:[%s1 + $0x8] sm:$0xff]
  %v20 = vld [vmem:[%s1 + $0x10] sm:$0xff]
  %v21 = vld [vmem:[%s1 + $0x18] sm:$0xff]
  %v22 = vld [vmem:[%s2] sm:$0xff]
  %v23 = vld [vmem:[%s2 + $0x8] sm:$0xff]
  %v24 = vld [vmem:[%s2 + $0x10] sm:$0xff]
  %v25 = vld [vmem:[%s2 + $0x18] sm:$0xff]
  %26 = vmatprep.subr.mxu0 0.0
  %27 = vmatpush1.xpose.msra.mxu0 %v18
  %28 = vmatprep.subr.mxu0 0.0
  %29 = vmatpush1.xpose.msra.mxu0 0.0
  %30 = vmatprep.subr.mxu0 0.0
  %31 = vmatpush1.xpose.msra.mxu0 0.0
  %32 = vmatprep.subr.mxu0 0.0
  %33 = vmatpush1.xpose.msra.mxu0 0.0
  %34 = vmatprep.subr.mxu0 0.0
  %35 = vmatpush1.xpose.msra.mxu0 0.0
  %36 = vmatprep.subr.mxu0 0.0
  %37 = vmatpush1.xpose.msra.mxu0 0.0
  %38 = vmatprep.subr.mxu0 0.0
  %39 = vmatpush1.xpose.msra.mxu0 0.0
  %40 = vmatprep.subr.mxu0 0.0
  %41 = vmatpush1.xpose.msra.mxu0 0.0
  %42 = vmatprep.subr.mxu0 0.0
  %43 = vmatpush1.xpose.msra.mxu0 0.0
  %44 = vmatprep.subr.mxu0 0.0
  %45 = vmatpush1.xpose.msra.mxu0 0.0
  %46 = vmatprep.subr.mxu0 0.0
  %47 = vmatpush1.xpose.msra.mxu0 0.0
  %48 = vmatprep.subr.mxu0 0.0
  %49 = vmatpush1.xpose.msra.mxu0 0.0
  %50 = vmatprep.subr.mxu0 0.0
  %51 = vmatpush1.xpose.msra.mxu0 0.0
  %52 = vmatprep.subr.mxu0 0.0
  %53 = vmatpush1.xpose.msra.mxu0 0.0
  %54 = vmatprep.subr.mxu0 0.0
  %55 = vmatpush1.xpose.msra.mxu0 0.0
  %56 = vmatprep.subr.mxu0 0.0
  %57 = vmatpush1.xpose.msra.mxu0 0.0
  %58 = vmatprep.subr.mxu0 0.0
  %59 = vmatpush1.xpose.msra.mxu0 0.0
  %60 = vmatprep.subr.mxu0 0.0
  %61 = vmatpush1.xpose.msra.mxu0 0.0
  %62 = vmatprep.subr.mxu0 0.0
  %63 = vmatpush1.xpose.msra.mxu0 0.0
  %64 = vmatprep.subr.mxu0 0.0
  %65 = vmatpush1.xpose.msra.mxu0 0.0
  %66 = vmatprep.subr.mxu0 0.0
  %67 = vmatpush1.xpose.msra.mxu0 0.0
  %68 = vmatprep.subr.mxu0 0.0
  %69 = vmatpush1.xpose.msra.mxu0 0.0
  %70 = vmatprep.subr.mxu0 0.0
  %71 = vmatpush1.xpose.msra.mxu0 0.0
  %72 = vmatprep.subr.mxu0 0.0
  %73 = vmatpush1.xpose.msra.mxu0 0.0
  %74 = vmatprep.subr.mxu0 0.0
  %75 = vmatpush1.xpose.msra.mxu0 0.0
  %76 = vmatprep.subr.mxu0 0.0
  %77 = vmatpush1.xpose.msra.mxu0 0.0
  %78 = vmatprep.subr.mxu0 0.0
  %79 = vmatpush1.xpose.msra.mxu0 0.0
  %80 = vmatprep.subr.mxu0 0.0
  %81 = vmatpush1.xpose.msra.mxu0 0.0
  %82 = vmatprep.subr.mxu0 0.0
  %83 = vmatpush1.xpose.msra.mxu0 0.0
  %84 = vmatprep.subr.mxu0 0.0
  %85 = vmatpush1.xpose.msra.mxu0 0.0
  %86 = vmatprep.subr.mxu0 0.0
  %87 = vmatpush1.xpose.msra.mxu0 0.0
  %88 = vmatprep.subr.mxu0 0.0
  %89 = vmatpush1.xpose.msra.mxu0 0.0
  %90 = vmatprep.mubr.f32.mxu0 0.0
  %91 = vmatmul.mubr.f32.gmra.mrb[0].mxu0 %v14
  %v92 = vpop.f32.mrb[0].mxu0
  %v93 = vadd.f32 0.0, %v92
  %v94 = vpop.f32.mrb[0].mxu0
  %95 = vdwg.mxu0
  %96 = vmatprep.subr.mxu0 0.0
  %97 = vmatpush1.xpose.msra.mxu0 %v19
  %98 = vmatprep.subr.mxu0 0.0
  %99 = vmatpush1.xpose.msra.mxu0 0.0
  %100 = vmatprep.subr.mxu0 0.0
  %101 = vmatpush1.xpose.msra.mxu0 0.0
  %102 = vmatprep.subr.mxu0 0.0
  %103 = vmatpush1.xpose.msra.mxu0 0.0
  %104 = vmatprep.subr.mxu0 0.0
  %105 = vmatpush1.xpose.msra.mxu0 0.0
  %106 = vmatprep.subr.mxu0 0.0
  %107 = vmatpush1.xpose.msra.mxu0 0.0
  %108 = vmatprep.subr.mxu0 0.0
  %109 = vmatpush1.xpose.msra.mxu0 0.0
  %110 = vmatprep.subr.mxu0 0.0
  %111 = vmatpush1.xpose.msra.mxu0 0.0
  %112 = vmatprep.subr.mxu0 0.0
  %113 = vmatpush1.xpose.msra.mxu0 0.0
  %114 = vmatprep.subr.mxu0 0.0
  %115 = vmatpush1.xpose.msra.mxu0 0.0
  %116 = vmatprep.subr.mxu0 0.0
  %117 = vmatpush1.xpose.msra.mxu0 0.0
  %118 = vmatprep.subr.mxu0 0.0
  %119 = vmatpush1.xpose.msra.mxu0 0.0
  %120 = vmatprep.subr.mxu0 0.0
  %121 = vmatpush1.xpose.msra.mxu0 0.0
  %122 = vmatprep.subr.mxu0 0.0
  %123 = vmatpush1.xpose.msra.mxu0 0.0
  %124 = vmatprep.subr.mxu0 0.0
  %125 = vmatpush1.xpose.msra.mxu0 0.0
  %126 = vmatprep.subr.mxu0 0.0
  %127 = vmatpush1.xpose.msra.mxu0 0.0
  %128 = vmatprep.subr.mxu0 0.0
  %129 = vmatpush1.xpose.msra.mxu0 0.0
  %130 = vmatprep.subr.mxu0 0.0
  %131 = vmatpush1.xpose.msra.mxu0 0.0
  %132 = vmatprep.subr.mxu0 0.0
  %133 = vmatpush1.xpose.msra.mxu0 0.0
  %134 = vmatprep.subr.mxu0 0.0
  %135 = vmatpush1.xpose.msra.mxu0 0.0
  %136 = vmatprep.subr.mxu0 0.0
  %137 = vmatpush1.xpose.msra.mxu0 0.0
  %138 = vmatprep.subr.mxu0 0.0
  %139 = vmatpush1.xpose.msra.mxu0 0.0
  %140 = vmatprep.subr.mxu0 0.0
  %141 = vmatpush1.xpose.msra.mxu0 0.0
  %142 = vmatprep.subr.mxu0 0.0
  %143 = vmatpush1.xpose.msra.mxu0 0.0
  %144 = vmatprep.subr.mxu0 0.0
  %145 = vmatpush1.xpose.msra.mxu0 0.0
  %146 = vmatprep.subr.mxu0 0.0
  %147 = vmatpush1.xpose.msra.mxu0 0.0
  %148 = vmatprep.subr.mxu0 0.0
  %149 = vmatpush1.xpose.msra.mxu0 0.0
  %150 = vmatprep.subr.mxu0 0.0
  %151 = vmatpush1.xpose.msra.mxu0 0.0
  %152 = vmatprep.subr.mxu0 0.0
  %153 = vmatpush1.xpose.msra.mxu0 0.0
  %154 = vmatprep.subr.mxu0 0.0
  %155 = vmatpush1.xpose.msra.mxu0 0.0
  %156 = vmatprep.subr.mxu0 0.0
  %157 = vmatpush1.xpose.msra.mxu0 0.0
  %158 = vmatprep.subr.mxu0 0.0
  %159 = vmatpush1.xpose.msra.mxu0 0.0
  %160 = vmatprep.mubr.f32.mxu0 0.0
  %161 = vmatmul.mubr.f32.gmra.mrb[0].mxu0 %v15
  %v162 = vpop.f32.mrb[0].mxu0
  %v163 = vadd.f32 0.0, %v162
  %v164 = vpop.f32.mrb[0].mxu0
  %165 = vdwg.mxu0
  %166 = vmatprep.subr.mxu0 0.0
  %167 = vmatpush1.xpose.msra.mxu0 %v20
  %168 = vmatprep.subr.mxu0 0.0
  %169 = vmatpush1.xpose.msra.mxu0 0.0
  %170 = vmatprep.subr.mxu0 0.0
  %171 = vmatpush1.xpose.msra.mxu0 0.0
  %172 = vmatprep.subr.mxu0 0.0
  %173 = vmatpush1.xpose.msra.mxu0 0.0
  %174 = vmatprep.subr.mxu0 0.0
  %175 = vmatpush1.xpose.msra.mxu0 0.0
  %176 = vmatprep.subr.mxu0 0.0
  %177 = vmatpush1.xpose.msra.mxu0 0.0
  %178 = vmatprep.subr.mxu0 0.0
  %179 = vmatpush1.xpose.msra.mxu0 0.0
  %180 = vmatprep.subr.mxu0 0.0
  %181 = vmatpush1.xpose.msra.mxu0 0.0
  %182 = vmatprep.subr.mxu0 0.0
  %183 = vmatpush1.xpose.msra.mxu0 0.0
  %184 = vmatprep.subr.mxu0 0.0
  %185 = vmatpush1.xpose.msra.mxu0 0.0
  %186 = vmatprep.subr.mxu0 0.0
  %187 = vmatpush1.xpose.msra.mxu0 0.0
  %188 = vmatprep.subr.mxu0 0.0
  %189 = vmatpush1.xpose.msra.mxu0 0.0
  %190 = vmatprep.subr.mxu0 0.0
  %191 = vmatpush1.xpose.msra.mxu0 0.0
  %192 = vmatprep.subr.mxu0 0.0
  %193 = vmatpush1.xpose.msra.mxu0 0.0
  %194 = vmatprep.subr.mxu0 0.0
  %195 = vmatpush1.xpose.msra.mxu0 0.0
  %196 = vmatprep.subr.mxu0 0.0
  %197 = vmatpush1.xpose.msra.mxu0 0.0
  %198 = vmatprep.subr.mxu0 0.0
  %199 = vmatpush1.xpose.msra.mxu0 0.0
  %200 = vmatprep.subr.mxu0 0.0
  %201 = vmatpush1.xpose.msra.mxu0 0.0
  %202 = vmatprep.subr.mxu0 0.0
  %203 = vmatpush1.xpose.msra.mxu0 0.0
  %204 = vmatprep.subr.mxu0 0.0
  %205 = vmatpush1.xpose.msra.mxu0 0.0
  %206 = vmatprep.subr.mxu0 0.0
  %207 = vmatpush1.xpose.msra.mxu0 0.0
  %208 = vmatprep.subr.mxu0 0.0
  %209 = vmatpush1.xpose.msra.mxu0 0.0
  %210 = vmatprep.subr.mxu0 0.0
  %211 = vmatpush1.xpose.msra.mxu0 0.0
  %212 = vmatprep.subr.mxu0 0.0
  %213 = vmatpush1.xpose.msra.mxu0 0.0
  %214 = vmatprep.subr.mxu0 0.0
  %215 = vmatpush1.xpose.msra.mxu0 0.0
  %216 = vmatprep.subr.mxu0 0.0
  %217 = vmatpush1.xpose.msra.mxu0 0.0
  %218 = vmatprep.subr.mxu0 0.0
  %219 = vmatpush1.xpose.msra.mxu0 0.0
  %220 = vmatprep.subr.mxu0 0.0
  %221 = vmatpush1.xpose.msra.mxu0 0.0
  %222 = vmatprep.subr.mxu0 0.0
  %223 = vmatpush1.xpose.msra.mxu0 0.0
  %224 = vmatprep.subr.mxu0 0.0
  %225 = vmatpush1.xpose.msra.mxu0 0.0
  %226 = vmatprep.subr.mxu0 0.0
  %227 = vmatpush1.xpose.msra.mxu0 0.0
  %228 = vmatprep.subr.mxu0 0.0
  %229 = vmatpush1.xpose.msra.mxu0 0.0
  %230 = vmatprep.mubr.f32.mxu0 0.0
  %231 = vmatmul.mubr.f32.gmra.mrb[0].mxu0 %v16
  %v232 = vpop.f32.mrb[0].mxu0
  %v233 = vadd.f32 0.0, %v232
  %v234 = vpop.f32.mrb[0].mxu0
  %235 = vdwg.mxu0
  %236 = vmatprep.subr.mxu0 0.0
  %237 = vmatpush1.xpose.msra.mxu0 %v21
  %238 = vmatprep.subr.mxu0 0.0
  %239 = vmatpush1.xpose.msra.mxu0 0.0
  %240 = vmatprep.subr.mxu0 0.0
  %241 = vmatpush1.xpose.msra.mxu0 0.0
  %242 = vmatprep.subr.mxu0 0.0
  %243 = vmatpush1.xpose.msra.mxu0 0.0
  %244 = vmatprep.subr.mxu0 0.0
  %245 = vmatpush1.xpose.msra.mxu0 0.0
  %246 = vmatprep.subr.mxu0 0.0
  %247 = vmatpush1.xpose.msra.mxu0 0.0
  %248 = vmatprep.subr.mxu0 0.0
  %249 = vmatpush1.xpose.msra.mxu0 0.0
  %250 = vmatprep.subr.mxu0 0.0
  %251 = vmatpush1.xpose.msra.mxu0 0.0
  %252 = vmatprep.subr.mxu0 0.0
  %253 = vmatpush1.xpose.msra.mxu0 0.0
  %254 = vmatprep.subr.mxu0 0.0
  %255 = vmatpush1.xpose.msra.mxu0 0.0
  %256 = vmatprep.subr.mxu0 0.0
  %257 = vmatpush1.xpose.msra.mxu0 0.0
  %258 = vmatprep.subr.mxu0 0.0
  %259 = vmatpush1.xpose.msra.mxu0 0.0
  %260 = vmatprep.subr.mxu0 0.0
  %261 = vmatpush1.xpose.msra.mxu0 0.0
  %262 = vmatprep.subr.mxu0 0.0
  %263 = vmatpush1.xpose.msra.mxu0 0.0
  %264 = vmatprep.subr.mxu0 0.0
  %265 = vmatpush1.xpose.msra.mxu0 0.0
  %266 = vmatprep.subr.mxu0 0.0
  %267 = vmatpush1.xpose.msra.mxu0 0.0
  %268 = vmatprep.subr.mxu0 0.0
  %269 = vmatpush1.xpose.msra.mxu0 0.0
  %270 = vmatprep.subr.mxu0 0.0
  %271 = vmatpush1.xpose.msra.mxu0 0.0
  %272 = vmatprep.subr.mxu0 0.0
  %273 = vmatpush1.xpose.msra.mxu0 0.0
  %274 = vmatprep.subr.mxu0 0.0
  %275 = vmatpush1.xpose.msra.mxu0 0.0
  %276 = vmatprep.subr.mxu0 0.0
  %277 = vmatpush1.xpose.msra.mxu0 0.0
  %278 = vmatprep.subr.mxu0 0.0
  %279 = vmatpush1.xpose.msra.mxu0 0.0
  %280 = vmatprep.subr.mxu0 0.0
  %281 = vmatpush1.xpose.msra.mxu0 0.0
  %282 = vmatprep.subr.mxu0 0.0
  %283 = vmatpush1.xpose.msra.mxu0 0.0
  %284 = vmatprep.subr.mxu0 0.0
  %285 = vmatpush1.xpose.msra.mxu0 0.0
  %286 = vmatprep.subr.mxu0 0.0
  %287 = vmatpush1.xpose.msra.mxu0 0.0
  %288 = vmatprep.subr.mxu0 0.0
  %289 = vmatpush1.xpose.msra.mxu0 0.0
  %290 = vmatprep.subr.mxu0 0.0
  %291 = vmatpush1.xpose.msra.mxu0 0.0
  %292 = vmatprep.subr.mxu0 0.0
  %293 = vmatpush1.xpose.msra.mxu0 0.0
  %294 = vmatprep.subr.mxu0 0.0
  %295 = vmatpush1.xpose.msra.mxu0 0.0
  %296 = vmatprep.subr.mxu0 0.0
  %297 = vmatpush1.xpose.msra.mxu0 0.0
  %298 = vmatprep.subr.mxu0 0.0
  %299 = vmatpush1.xpose.msra.mxu0 0.0
  %300 = vmatprep.mubr.f32.mxu0 0.0
  %301 = vmatmul.mubr.f32.gmra.mrb[0].mxu0 %v17
  %v302 = vpop.f32.mrb[0].mxu0
  %v303 = vadd.f32 0.0, %v302
  %v304 = vpop.f32.mrb[0].mxu0
  %305 = vdwg.mxu0
  %v306 = vmul.f32 %v93, 0.25
  %v307 = vmul.f32 %v163, 0.25
  %v308 = vmul.f32 %v233, 0.25
  %v309 = vmul.f32 %v303, 0.25
  %vm310 = vcmask 64512
  %v311 = vsel %vm310, %v306, -inf
  %312 = vmax.xlane.f32.xlu0 %v311
  %v313 = vpop.xlane.xlu0 %312
  %v314 = vsel %vm310, %v307, -inf
  %315 = vmax.xlane.f32.xlu0 %v314
  %v316 = vpop.xlane.xlu0 %315
  %v317 = vsel %vm310, %v308, -inf
  %318 = vmax.xlane.f32.xlu0 %v317
  %v319 = vpop.xlane.xlu0 %318
  %v320 = vsel %vm310, %v309, -inf
  %321 = vmax.xlane.f32.xlu0 %v320
  %v322 = vpop.xlane.xlu0 %321
  %v323 = vsub.f32 %v306, %v313
  %v324 = vsub.f32 %v307, %v316
  %v325 = vsub.f32 %v308, %v319
  %v326 = vsub.f32 %v309, %v322
  %v327 = vmul.f32 %v323, 1.442695
  %v328 = vpow.pop %v327
  %v329 = vmul.f32 %v324, 1.442695
  %v330 = vpow.pop %v329
  %v331 = vmul.f32 %v325, 1.442695
  %v332 = vpow.pop %v331
  %v333 = vmul.f32 %v326, 1.442695
  %v334 = vpow.pop %v333
  %v335 = vsel %vm310, %v328, 0.0
  %336 = vadd.xlane.f32.xlu0 %v335
  %v337 = vpop.xlane.xlu0 %336
  %v338 = vsel %vm310, %v330, 0.0
  %339 = vadd.xlane.f32.xlu0 %v338
  %v340 = vpop.xlane.xlu0 %339
  %v341 = vsel %vm310, %v332, 0.0
  %342 = vadd.xlane.f32.xlu0 %v341
  %v343 = vpop.xlane.xlu0 %342
  %v344 = vsel %vm310, %v334, 0.0
  %345 = vadd.xlane.f32.xlu0 %v344
  %v346 = vpop.xlane.xlu0 %345
  %v348 = vsel %vm310, %v328, 0
  %350 = vmatprep.subr.mxu0 0.0
  %351 = vmatpush1.msra.mxu0 %v22
  %352 = vmatprep.subr.mxu0 0.0
  %353 = vmatpush1.msra.mxu0 0.0
  %354 = vmatprep.subr.mxu0 0.0
  %355 = vmatpush1.msra.mxu0 0.0
  %356 = vmatprep.subr.mxu0 0.0
  %357 = vmatpush1.msra.mxu0 0.0
  %358 = vmatprep.subr.mxu0 0.0
  %359 = vmatpush1.msra.mxu0 0.0
  %360 = vmatprep.subr.mxu0 0.0
  %361 = vmatpush1.msra.mxu0 0.0
  %362 = vmatprep.subr.mxu0 0.0
  %363 = vmatpush1.msra.mxu0 0.0
  %364 = vmatprep.subr.mxu0 0.0
  %365 = vmatpush1.msra.mxu0 0.0
  %366 = vmatprep.subr.mxu0 0.0
  %367 = vmatpush1.msra.mxu0 0.0
  %368 = vmatprep.subr.mxu0 0.0
  %369 = vmatpush1.msra.mxu0 0.0
  %370 = vmatprep.subr.mxu0 0.0
  %371 = vmatpush1.msra.mxu0 0.0
  %372 = vmatprep.subr.mxu0 0.0
  %373 = vmatpush1.msra.mxu0 0.0
  %374 = vmatprep.subr.mxu0 0.0
  %375 = vmatpush1.msra.mxu0 0.0
  %376 = vmatprep.subr.mxu0 0.0
  %377 = vmatpush1.msra.mxu0 0.0
  %378 = vmatprep.subr.mxu0 0.0
  %379 = vmatpush1.msra.mxu0 0.0
  %380 = vmatprep.subr.mxu0 0.0
  %381 = vmatpush1.msra.mxu0 0.0
  %382 = vmatprep.subr.mxu0 0.0
  %383 = vmatpush1.msra.mxu0 0.0
  %384 = vmatprep.subr.mxu0 0.0
  %385 = vmatpush1.msra.mxu0 0.0
  %386 = vmatprep.subr.mxu0 0.0
  %387 = vmatpush1.msra.mxu0 0.0
  %388 = vmatprep.subr.mxu0 0.0
  %389 = vmatpush1.msra.mxu0 0.0
  %390 = vmatprep.subr.mxu0 0.0
  %391 = vmatpush1.msra.mxu0 0.0
  %392 = vmatprep.subr.mxu0 0.0
  %393 = vmatpush1.msra.mxu0 0.0
  %394 = vmatprep.subr.mxu0 0.0
  %395 = vmatpush1.msra.mxu0 0.0
  %396 = vmatprep.subr.mxu0 0.0
  %397 = vmatpush1.msra.mxu0 0.0
  %398 = vmatprep.subr.mxu0 0.0
  %399 = vmatpush1.msra.mxu0 0.0
  %400 = vmatprep.subr.mxu0 0.0
  %401 = vmatpush1.msra.mxu0 0.0
  %402 = vmatprep.subr.mxu0 0.0
  %403 = vmatpush1.msra.mxu0 0.0
  %404 = vmatprep.subr.mxu0 0.0
  %405 = vmatpush1.msra.mxu0 0.0
  %406 = vmatprep.subr.mxu0 0.0
  %407 = vmatpush1.msra.mxu0 0.0
  %408 = vmatprep.subr.mxu0 0.0
  %409 = vmatpush1.msra.mxu0 0.0
  %410 = vmatprep.subr.mxu0 0.0
  %411 = vmatpush1.msra.mxu0 0.0
  %412 = vmatprep.subr.mxu0 0.0
  %413 = vmatpush1.msra.mxu0 0.0
  %414 = vmatprep.mubr.f32.mxu0 0.0
  %415 = vmatmul.mubr.f32.gmra.mrb[0].mxu0 %v348
  %v416 = vpop.f32.mrb[0].mxu0
  %v417 = vadd.f32 0.0, %v416
  %v418 = vpop.f32.mrb[0].mxu0
  %419 = vdwg.mxu0
  %v421 = vsel %vm310, %v330, 0
  %423 = vmatprep.subr.mxu0 0.0
  %424 = vmatpush1.msra.mxu0 %v23
  %425 = vmatprep.subr.mxu0 0.0
  %426 = vmatpush1.msra.mxu0 0.0
  %427 = vmatprep.subr.mxu0 0.0
  %428 = vmatpush1.msra.mxu0 0.0
  %429 = vmatprep.subr.mxu0 0.0
  %430 = vmatpush1.msra.mxu0 0.0
  %431 = vmatprep.subr.mxu0 0.0
  %432 = vmatpush1.msra.mxu0 0.0
  %433 = vmatprep.subr.mxu0 0.0
  %434 = vmatpush1.msra.mxu0 0.0
  %435 = vmatprep.subr.mxu0 0.0
  %436 = vmatpush1.msra.mxu0 0.0
  %437 = vmatprep.subr.mxu0 0.0
  %438 = vmatpush1.msra.mxu0 0.0
  %439 = vmatprep.subr.mxu0 0.0
  %440 = vmatpush1.msra.mxu0 0.0
  %441 = vmatprep.subr.mxu0 0.0
  %442 = vmatpush1.msra.mxu0 0.0
  %443 = vmatprep.subr.mxu0 0.0
  %444 = vmatpush1.msra.mxu0 0.0
  %445 = vmatprep.subr.mxu0 0.0
  %446 = vmatpush1.msra.mxu0 0.0
  %447 = vmatprep.subr.mxu0 0.0
  %448 = vmatpush1.msra.mxu0 0.0
  %449 = vmatprep.subr.mxu0 0.0
  %450 = vmatpush1.msra.mxu0 0.0
  %451 = vmatprep.subr.mxu0 0.0
  %452 = vmatpush1.msra.mxu0 0.0
  %453 = vmatprep.subr.mxu0 0.0
  %454 = vmatpush1.msra.mxu0 0.0
  %455 = vmatprep.subr.mxu0 0.0
  %456 = vmatpush1.msra.mxu0 0.0
  %457 = vmatprep.subr.mxu0 0.0
  %458 = vmatpush1.msra.mxu0 0.0
  %459 = vmatprep.subr.mxu0 0.0
  %460 = vmatpush1.msra.mxu0 0.0
  %461 = vmatprep.subr.mxu0 0.0
  %462 = vmatpush1.msra.mxu0 0.0
  %463 = vmatprep.subr.mxu0 0.0
  %464 = vmatpush1.msra.mxu0 0.0
  %465 = vmatprep.subr.mxu0 0.0
  %466 = vmatpush1.msra.mxu0 0.0
  %467 = vmatprep.subr.mxu0 0.0
  %468 = vmatpush1.msra.mxu0 0.0
  %469 = vmatprep.subr.mxu0 0.0
  %470 = vmatpush1.msra.mxu0 0.0
  %471 = vmatprep.subr.mxu0 0.0
  %472 = vmatpush1.msra.mxu0 0.0
  %473 = vmatprep.subr.mxu0 0.0
  %474 = vmatpush1.msra.mxu0 0.0
  %475 = vmatprep.subr.mxu0 0.0
  %476 = vmatpush1.msra.mxu0 0.0
  %477 = vmatprep.subr.mxu0 0.0
  %478 = vmatpush1.msra.mxu0 0.0
  %479 = vmatprep.subr.mxu0 0.0
  %480 = vmatpush1.msra.mxu0 0.0
  %481 = vmatprep.subr.mxu0 0.0
  %482 = vmatpush1.msra.mxu0 0.0
  %483 = vmatprep.subr.mxu0 0.0
  %484 = vmatpush1.msra.mxu0 0.0
  %485 = vmatprep.subr.mxu0 0.0
  %486 = vmatpush1.msra.mxu0 0.0
  %487 = vmatprep.mubr.f32.mxu0 0.0
  %488 = vmatmul.mubr.f32.gmra.mrb[0].mxu0 %v421
  %v489 = vpop.f32.mrb[0].mxu0
  %v490 = vadd.f32 0.0, %v489
  %v491 = vpop.f32.mrb[0].mxu0
  %492 = vdwg.mxu0
  %v494 = vsel %vm310, %v332, 0
  %496 = vmatprep.subr.mxu0 0.0
  %497 = vmatpush1.msra.mxu0 %v24
  %498 = vmatprep.subr.mxu0 0.0
  %499 = vmatpush1.msra.mxu0 0.0
  %500 = vmatprep.subr.mxu0 0.0
  %501 = vmatpush1.msra.mxu0 0.0
  %502 = vmatprep.subr.mxu0 0.0
  %503 = vmatpush1.msra.mxu0 0.0
  %504 = vmatprep.subr.mxu0 0.0
  %505 = vmatpush1.msra.mxu0 0.0
  %506 = vmatprep.subr.mxu0 0.0
  %507 = vmatpush1.msra.mxu0 0.0
  %508 = vmatprep.subr.mxu0 0.0
  %509 = vmatpush1.msra.mxu0 0.0
  %510 = vmatprep.subr.mxu0 0.0
  %511 = vmatpush1.msra.mxu0 0.0
  %512 = vmatprep.subr.mxu0 0.0
  %513 = vmatpush1.msra.mxu0 0.0
  %514 = vmatprep.subr.mxu0 0.0
  %515 = vmatpush1.msra.mxu0 0.0
  %516 = vmatprep.subr.mxu0 0.0
  %517 = vmatpush1.msra.mxu0 0.0
  %518 = vmatprep.subr.mxu0 0.0
  %519 = vmatpush1.msra.mxu0 0.0
  %520 = vmatprep.subr.mxu0 0.0
  %521 = vmatpush1.msra.mxu0 0.0
  %522 = vmatprep.subr.mxu0 0.0
  %523 = vmatpush1.msra.mxu0 0.0
  %524 = vmatprep.subr.mxu0 0.0
  %525 = vmatpush1.msra.mxu0 0.0
  %526 = vmatprep.subr.mxu0 0.0
  %527 = vmatpush1.msra.mxu0 0.0
  %528 = vmatprep.subr.mxu0 0.0
  %529 = vmatpush1.msra.mxu0 0.0
  %530 = vmatprep.subr.mxu0 0.0
  %531 = vmatpush1.msra.mxu0 0.0
  %532 = vmatprep.subr.mxu0 0.0
  %533 = vmatpush1.msra.mxu0 0.0
  %534 = vmatprep.subr.mxu0 0.0
  %535 = vmatpush1.msra.mxu0 0.0
  %536 = vmatprep.subr.mxu0 0.0
  %537 = vmatpush1.msra.mxu0 0.0
  %538 = vmatprep.subr.mxu0 0.0
  %539 = vmatpush1.msra.mxu0 0.0
  %540 = vmatprep.subr.mxu0 0.0
  %541 = vmatpush1.msra.mxu0 0.0
  %542 = vmatprep.subr.mxu0 0.0
  %543 = vmatpush1.msra.mxu0 0.0
  %544 = vmatprep.subr.mxu0 0.0
  %545 = vmatpush1.msra.mxu0 0.0
  %546 = vmatprep.subr.mxu0 0.0
  %547 = vmatpush1.msra.mxu0 0.0
  %548 = vmatprep.subr.mxu0 0.0
  %549 = vmatpush1.msra.mxu0 0.0
  %550 = vmatprep.subr.mxu0 0.0
  %551 = vmatpush1.msra.mxu0 0.0
  %552 = vmatprep.subr.mxu0 0.0
  %553 = vmatpush1.msra.mxu0 0.0
  %554 = vmatprep.subr.mxu0 0.0
  %555 = vmatpush1.msra.mxu0 0.0
  %556 = vmatprep.subr.mxu0 0.0
  %557 = vmatpush1.msra.mxu0 0.0
  %558 = vmatprep.subr.mxu0 0.0
  %559 = vmatpush1.msra.mxu0 0.0
  %560 = vmatprep.mubr.f32.mxu0 0.0
  %561 = vmatmul.mubr.f32.gmra.mrb[0].mxu0 %v494
  %v562 = vpop.f32.mrb[0].mxu0
  %v563 = vadd.f32 0.0, %v562
  %v564 = vpop.f32.mrb[0].mxu0
  %565 = vdwg.mxu0
  %v567 = vsel %vm310, %v334, 0
  %569 = vmatprep.subr.mxu0 0.0
  %570 = vmatpush1.msra.mxu0 %v25
  %571 = vmatprep.subr.mxu0 0.0
  %572 = vmatpush1.msra.mxu0 0.0
  %573 = vmatprep.subr.mxu0 0.0
  %574 = vmatpush1.msra.mxu0 0.0
  %575 = vmatprep.subr.mxu0 0.0
  %576 = vmatpush1.msra.mxu0 0.0
  %577 = vmatprep.subr.mxu0 0.0
  %578 = vmatpush1.msra.mxu0 0.0
  %579 = vmatprep.subr.mxu0 0.0
  %580 = vmatpush1.msra.mxu0 0.0
  %581 = vmatprep.subr.mxu0 0.0
  %582 = vmatpush1.msra.mxu0 0.0
  %583 = vmatprep.subr.mxu0 0.0
  %584 = vmatpush1.msra.mxu0 0.0
  %585 = vmatprep.subr.mxu0 0.0
  %586 = vmatpush1.msra.mxu0 0.0
  %587 = vmatprep.subr.mxu0 0.0
  %588 = vmatpush1.msra.mxu0 0.0
  %589 = vmatprep.subr.mxu0 0.0
  %590 = vmatpush1.msra.mxu0 0.0
  %591 = vmatprep.subr.mxu0 0.0
  %592 = vmatpush1.msra.mxu0 0.0
  %593 = vmatprep.subr.mxu0 0.0
  %594 = vmatpush1.msra.mxu0 0.0
  %595 = vmatprep.subr.mxu0 0.0
  %596 = vmatpush1.msra.mxu0 0.0
  %597 = vmatprep.subr.mxu0 0.0
  %598 = vmatpush1.msra.mxu0 0.0
  %599 = vmatprep.subr.mxu0 0.0
  %600 = vmatpush1.msra.mxu0 0.0
  %601 = vmatprep.subr.mxu0 0.0
  %602 = vmatpush1.msra.mxu0 0.0
  %603 = vmatprep.subr.mxu0 0.0
  %604 = vmatpush1.msra.mxu0 0.0
  %605 = vmatprep.subr.mxu0 0.0
  %606 = vmatpush1.msra.mxu0 0.0
  %607 = vmatprep.subr.mxu0 0.0
  %608 = vmatpush1.msra.mxu0 0.0
  %609 = vmatprep.subr.mxu0 0.0
  %610 = vmatpush1.msra.mxu0 0.0
  %611 = vmatprep.subr.mxu0 0.0
  %612 = vmatpush1.msra.mxu0 0.0
  %613 = vmatprep.subr.mxu0 0.0
  %614 = vmatpush1.msra.mxu0 0.0
  %615 = vmatprep.subr.mxu0 0.0
  %616 = vmatpush1.msra.mxu0 0.0
  %617 = vmatprep.subr.mxu0 0.0
  %618 = vmatpush1.msra.mxu0 0.0
  %619 = vmatprep.subr.mxu0 0.0
  %620 = vmatpush1.msra.mxu0 0.0
  %621 = vmatprep.subr.mxu0 0.0
  %622 = vmatpush1.msra.mxu0 0.0
  %623 = vmatprep.subr.mxu0 0.0
  %624 = vmatpush1.msra.mxu0 0.0
  %625 = vmatprep.subr.mxu0 0.0
  %626 = vmatpush1.msra.mxu0 0.0
  %627 = vmatprep.subr.mxu0 0.0
  %628 = vmatpush1.msra.mxu0 0.0
  %629 = vmatprep.subr.mxu0 0.0
  %630 = vmatpush1.msra.mxu0 0.0
  %631 = vmatprep.subr.mxu0 0.0
  %632 = vmatpush1.msra.mxu0 0.0
  %633 = vmatprep.mubr.f32.mxu0 0.0
  %634 = vmatmul.mubr.f32.gmra.mrb[0].mxu0 %v567
  %v635 = vpop.f32.mrb[0].mxu0
  %v636 = vadd.f32 0.0, %v635
  %v637 = vpop.f32.mrb[0].mxu0
  %638 = vdwg.mxu0
  %v639 = vrcp.pop %v337
  %v640 = vrcp.pop %v340
  %v641 = vrcp.pop %v343
  %v642 = vrcp.pop %v346
  %v643 = vmul.f32 %v417, %v639
  %v644 = vmul.f32 %v490, %v640
  %v645 = vmul.f32 %v563, %v641
  %v646 = vmul.f32 %v636, %v642
  %647 = vst [vmem:[%s3] sm:$0xff] %v643
  %648 = vst [vmem:[%s3 + $0x8] sm:$0xff] %v644
  %649 = vst [vmem:[%s3 + $0x10] sm:$0xff] %v645
  %650 = vst [vmem:[%s3 + $0x18] sm:$0xff] %v646
  // Predicated region
  $region14: #{translation_transformer_forward.32} parent=0 // pred_check
    _
  $region15: #{translation_transformer_forward.32} parent=0 // pred_check_branch
    %652 = sbr.rel (0) target = $region17
  $region16: #{translation_transformer_forward.32} parent=0 // pred_region
    _
  $region17: #{translation_transformer_forward.32} parent=0 // pred_fallthru
    _
  // Predicated region
  $region18: #{translation_transformer_forward.32} parent=0 // pred_check
    _
  $region19: #{translation_transformer_forward.32} parent=0 // pred_check_branch
    %654 = sbr.rel (0) target = $region21
  $region20: #{translation_transformer_forward.32} parent=0 // pred_region
    _
  $region21: #{translation_transformer_forward.32} parent=0 // pred_fallthru
    _

// kernel: translation_transformer_forward.41
$region0: #{translation_transformer_forward.41}
  #allocation0 [shape = 'u32[]', space=smem, size = 0x4, offset = 0x4, fixed_abs, tag = 'smem constant byte address 0x4 - core index']
  #allocation1 [shape = 'u32[144,128]{1,0:T(1,128)}', space=vmem, size = 0x12000, scoped, tag = 'internal scratch']
  %s0 = inlined_call_operand.vmem [shape: f32[16,128], index: 0, kind: input, shape index: {}]
  %s1 = inlined_call_operand.vmem [shape: f32[1,128], index: 1, kind: input, shape index: {}]
  %s2 = inlined_call_operand.vmem [shape: f32[1,128], index: 2, kind: input, shape index: {}]
  %s3 = inlined_call_operand.vmem [shape: f32[16,128], index: 3, kind: output, shape index: {}]
  %s4 = sld [smem:[#allocation0]]
  $region22: #{translation_transformer_forward.41} parent=0
    _
  %s6 = ssub.s32 1, %s4
  %s7 = scalar_select 0, %s6, %s4
  // Predicated region
  $region2: #{translation_transformer_forward.41} parent=0 // pred_check
    _
  $region3: #{translation_transformer_forward.41} parent=0 // pred_check_branch
    %9 = sbr.rel (0) target = $region5
  $region4: #{translation_transformer_forward.41} parent=0 // pred_region
    _
  $region5: #{translation_transformer_forward.41} parent=0 // pred_fallthru
    _
  // Predicated region
  $region6: #{translation_transformer_forward.41} parent=0 // pred_check
    _
  $region7: #{translation_transformer_forward.41} parent=0 // pred_check_branch
    %11 = sbr.rel (0) target = $region9
  $region8: #{translation_transformer_forward.41} parent=0 // pred_region
    _
  $region9: #{translation_transformer_forward.41} parent=0 // pred_fallthru
    _
  // Predicated region
  $region10: #{translation_transformer_forward.41} parent=0 // pred_check
    _
  $region11: #{translation_transformer_forward.41} parent=0 // pred_check_branch
    %13 = sbr.rel (0) target = $region13
  $region12: #{translation_transformer_forward.41} parent=0 // pred_region
    _
  $region13: #{translation_transformer_forward.41} parent=0 // pred_fallthru
    _
  %v14 = vld [vmem:[%s0] sm:$0xff]
  %v15 = vld [vmem:[%s0 + $0x8] sm:$0xff]
  %16 = vadd.xlane.f32.xlu0 %v14
  %v17 = vpop.xlane.xlu0 %16
  %18 = vadd.xlane.f32.xlu0 %v15
  %v19 = vpop.xlane.xlu0 %18
  %v20 = vmul.f32 %v17, 0.03125
  %v21 = vmul.f32 %v19, 0.03125
  %v22 = vsub.f32 %v14, %v20
  %v23 = vsub.f32 %v15, %v21
  %v24 = vmul.f32 %v22, %v22
  %v25 = vmul.f32 %v23, %v23
  %26 = vadd.xlane.f32.xlu0 %v24
  %v27 = vpop.xlane.xlu0 %26
  %28 = vadd.xlane.f32.xlu0 %v25
  %v29 = vpop.xlane.xlu0 %28
  %v30 = vmul.f32 %v20, 96.0
  %v31 = vmul.f32 %v21, 96.0
  %v32 = vmul.f32 %v30, %v20
  %v33 = vmul.f32 %v31, %v21
  %v34 = vsub.f32 %v27, %v32
  %v35 = vsub.f32 %v29, %v33
  %v36 = vmul.f32 %v34, 0.03125
  %v37 = vmul.f32 %v35, 0.03125
  %v38 = vadd.f32 %v36, 1e-05
  %v39 = vadd.f32 %v37, 1e-05
  %v40 = vrsqrt.pop %v38
  %v41 = vrsqrt.pop %v39
  %v42 = vmul.f32 %v22, %v40
  %v43 = vmul.f32 %v23, %v41
  %v44 = vld [vmem:[%s1] sm:$0x1]
  %v46 = vlaneseq
  %v47 = vshrl.u32 %v46, 7
  %v48 = vsub.s32 0, %v47
  %v49 = vrot.slane %v44, %v48
  %v51 = vmul.f32 %v42, %v49
  %v52 = vmul.f32 %v43, %v49
  %v53 = vld [vmem:[%s2] sm:$0x1]
  %v55 = vlaneseq
  %v56 = vshrl.u32 %v55, 7
  %v57 = vsub.s32 0, %v56
  %v58 = vrot.slane %v53, %v57
  %v60 = vadd.f32 %v51, %v58
  %v61 = vadd.f32 %v52, %v58
  %62 = vst [vmem:[%s3] sm:$0xff] %v60
  %63 = vst [vmem:[%s3 + $0x8] sm:$0xff] %v61
  // Predicated region
  $region14: #{translation_transformer_forward.41} parent=0 // pred_check
    _
  $region15: #{translation_transformer_forward.41} parent=0 // pred_check_branch
    %65 = sbr.rel (0) target = $region17
  $region16: #{translation_transformer_forward.41} parent=0 // pred_region
    _
  $region17: #{translation_transformer_forward.41} parent=0 // pred_fallthru
    _
  // Predicated region
  $region18: #{translation_transformer_forward.41} parent=0 // pred_check
    _
  $region19: #{translation_transformer_forward.41} parent=0 // pred_check_branch
    %67 = sbr.rel (0) target = $region21
  $region20: #{translation_transformer_forward.41} parent=0 // pred_region
    _
  $region21: #{translation_transformer_forward.41} parent=0 // pred_fallthru
    _

// kernel: translation_transformer_forward.61
$region0: #{translation_transformer_forward.61}
  #allocation0 [shape = 'u32[]', space=smem, size = 0x4, offset = 0x4, fixed_abs, tag = 'smem constant byte address 0x4 - core index']
  #allocation1 [shape = 'u32[144,128]{1,0:T(1,128)}', space=vmem, size = 0x12000, scoped, tag = 'internal scratch']
  #allocation2 [shape = 'f32[16,128]{1,0:T(8,128)}', space=vmem, size = 0x2000, scoped, tag = 'scratch operand']
  %s0 = inlined_call_operand.vmem [shape: f32[16,128], index: 0, kind: input, shape index: {}]
  %s1 = inlined_call_operand.vmem [shape: f32[128,128], index: 1, kind: input, shape index: {}]
  %s2 = inlined_call_operand.vmem [shape: f32[1,128], index: 2, kind: input, shape index: {}]
  %s3 = inlined_call_operand.vmem [shape: f32[16,128], index: 3, kind: output, shape index: {}]
  %s4 = sld [smem:[#allocation0]]
  $region30: #{translation_transformer_forward.61} parent=0
    _
  %s6 = ssub.s32 1, %s4
  %s7 = scalar_select 0, %s6, %s4
  // Predicated region
  $region2: #{translation_transformer_forward.61} parent=0 // pred_check
    _
  $region3: #{translation_transformer_forward.61} parent=0 // pred_check_branch
    %9 = sbr.rel (0) target = $region5
  $region4: #{translation_transformer_forward.61} parent=0 // pred_region
    _
  $region5: #{translation_transformer_forward.61} parent=0 // pred_fallthru
    _
  // Predicated region
  $region6: #{translation_transformer_forward.61} parent=0 // pred_check
    _
  $region7: #{translation_transformer_forward.61} parent=0 // pred_check_branch
    %11 = sbr.rel (0) target = $region9
  $region8: #{translation_transformer_forward.61} parent=0 // pred_region
    _
  $region9: #{translation_transformer_forward.61} parent=0 // pred_fallthru
    _
  // Predicated region
  $region10: #{translation_transformer_forward.61} parent=0 // pred_check
    _
  $region11: #{translation_transformer_forward.61} parent=0 // pred_check_branch
    %13 = sbr.rel (0) target = $region13
  $region12: #{translation_transformer_forward.61} parent=0 // pred_region
    _
  $region13: #{translation_transformer_forward.61} parent=0 // pred_fallthru
    _
  %p14 = scmp.eq.s32.totalorder 0, 0
  // Predicated region
  $region14: #{translation_transformer_forward.61} parent=0 // pred_check
    %p15 = pneg %p14
  $region15: #{translation_transformer_forward.61} parent=0 // pred_check_branch
    %17 = sbr.rel (%p15) target = $region17
  $region16: #{translation_transformer_forward.61} parent=0 // pred_region
    %v18 = vld [vmem:[%s2] sm:$0x1]
    %v20 = vlaneseq
    %v21 = vshrl.u32 %v20, 7
    %v22 = vsub.s32 0, %v21
    %v23 = vrot.slane %v18, %v22
    %25 = vst [vmem:[#allocation2] sm:$0xff] %v23
    %26 = vst [vmem:[#allocation2 + $0x8] sm:$0xff] %v23
  $region17: #{translation_transformer_forward.61} parent=0 // pred_fallthru
    _
  %v27 = vld [vmem:[#allocation2] sm:$0xff]
  %v28 = vld [vmem:[#allocation2 + $0x8] sm:$0xff]
  %v29 = vld [vmem:[%s0] sm:$0xff]
  %v30 = vld [vmem:[%s0 + $0x8] sm:$0xff]
  %v31 = vld [vmem:[%s1] sm:$0xff]
  %v32 = vld [vmem:[%s1 + $0x8] sm:$0xff]
  %v33 = vld [vmem:[%s1 + $0x10] sm:$0xff]
  %v34 = vld [vmem:[%s1 + $0x18] sm:$0xff]
  %v35 = vld [vmem:[%s1 + $0x20] sm:$0xff]
  %v36 = vld [vmem:[%s1 + $0x28] sm:$0xff]
  %v37 = vld [vmem:[%s1 + $0x30] sm:$0xff]
  %v38 = vld [vmem:[%s1 + $0x38] sm:$0xff]
  %v39 = vld [vmem:[%s1 + $0x40] sm:$0xff]
  %v40 = vld [vmem:[%s1 + $0x48] sm:$0xff]
  %v41 = vld [vmem:[%s1 + $0x50] sm:$0xff]
  %v42 = vld [vmem:[%s1 + $0x58] sm:$0xff]
  %v43 = vld [vmem:[%s1 + $0x60] sm:$0xff]
  %v44 = vld [vmem:[%s1 + $0x68] sm:$0xff]
  %v45 = vld [vmem:[%s1 + $0x70] sm:$0xff]
  %v46 = vld [vmem:[%s1 + $0x78] sm:$0xff]
  %47 = vmatprep.subr.mxu0 0.0
  %48 = vmatpush1.msra.mxu0 %v31
  %49 = vmatprep.subr.mxu0 0.0
  %50 = vmatpush1.msra.mxu0 %v32
  %51 = vmatprep.subr.mxu0 0.0
  %52 = vmatpush1.msra.mxu0 %v33
  %53 = vmatprep.subr.mxu0 0.0
  %54 = vmatpush1.msra.mxu0 %v34
  %55 = vmatprep.subr.mxu0 0.0
  %56 = vmatpush1.msra.mxu0 %v35
  %57 = vmatprep.subr.mxu0 0.0
  %58 = vmatpush1.msra.mxu0 %v36
  %59 = vmatprep.subr.mxu0 0.0
  %60 = vmatpush1.msra.mxu0 %v37
  %61 = vmatprep.subr.mxu0 0.0
  %62 = vmatpush1.msra.mxu0 %v38
  %63 = vmatprep.subr.mxu0 0.0
  %64 = vmatpush1.msra.mxu0 %v39
  %65 = vmatprep.subr.mxu0 0.0
  %66 = vmatpush1.msra.mxu0 %v40
  %67 = vmatprep.subr.mxu0 0.0
  %68 = vmatpush1.msra.mxu0 %v41
  %69 = vmatprep.subr.mxu0 0.0
  %70 = vmatpush1.msra.mxu0 %v42
  %71 = vmatprep.subr.mxu0 0.0
  %72 = vmatpush1.msra.mxu0 %v43
  %73 = vmatprep.subr.mxu0 0.0
  %74 = vmatpush1.msra.mxu0 %v44
  %75 = vmatprep.subr.mxu0 0.0
  %76 = vmatpush1.msra.mxu0 %v45
  %77 = vmatprep.subr.mxu0 0.0
  %78 = vmatpush1.msra.mxu0 %v46
  %79 = vmatprep.subr.mxu0 0.0
  %80 = vmatpush1.msra.mxu0 0.0
  %81 = vmatprep.subr.mxu0 0.0
  %82 = vmatpush1.msra.mxu0 0.0
  %83 = vmatprep.subr.mxu0 0.0
  %84 = vmatpush1.msra.mxu0 0.0
  %85 = vmatprep.subr.mxu0 0.0
  %86 = vmatpush1.msra.mxu0 0.0
  %87 = vmatprep.subr.mxu0 0.0
  %88 = vmatpush1.msra.mxu0 0.0
  %89 = vmatprep.subr.mxu0 0.0
  %90 = vmatpush1.msra.mxu0 0.0
  %91 = vmatprep.subr.mxu0 0.0
  %92 = vmatpush1.msra.mxu0 0.0
  %93 = vmatprep.subr.mxu0 0.0
  %94 = vmatpush1.msra.mxu0 0.0
  %95 = vmatprep.subr.mxu0 0.0
  %96 = vmatpush1.msra.mxu0 0.0
  %97 = vmatprep.subr.mxu0 0.0
  %98 = vmatpush1.msra.mxu0 0.0
  %99 = vmatprep.subr.mxu0 0.0
  %100 = vmatpush1.msra.mxu0 0.0
  %101 = vmatprep.subr.mxu0 0.0
  %102 = vmatpush1.msra.mxu0 0.0
  %103 = vmatprep.subr.mxu0 0.0
  %104 = vmatpush1.msra.mxu0 0.0
  %105 = vmatprep.subr.mxu0 0.0
  %106 = vmatpush1.msra.mxu0 0.0
  %107 = vmatprep.subr.mxu0 0.0
  %108 = vmatpush1.msra.mxu0 0.0
  %109 = vmatprep.subr.mxu0 0.0
  %110 = vmatpush1.msra.mxu0 0.0
  %111 = vmatprep.mubr.f32.mxu0 0.0
  %112 = vmatmul.mubr.f32.gmra.mrb[0].mxu0 %v29
  %v113 = vpop.f32.mrb[0].mxu0
  %v114 = vadd.f32 0.0, %v113
  %v115 = vpop.f32.mrb[0].mxu0
  %116 = vmatprep.mubr.f32.mxu0 0.0
  %117 = vmatmul.mubr.f32.gmra.mrb[0].mxu0 %v30
  %v118 = vpop.f32.mrb[0].mxu0
  %v119 = vadd.f32 0.0, %v118
  %v120 = vpop.f32.mrb[0].mxu0
  %121 = vdwg.mxu0
  %v122 = vadd.f32 %v27, %v114
  %v123 = vadd.f32 %v28, %v119
  %124 = vst [vmem:[#allocation2] sm:$0xff] %v122
  %125 = vst [vmem:[#allocation2 + $0x8] sm:$0xff] %v123
  // Predicated region
  $region18: #{translation_transformer_forward.61} parent=0 // pred_check
    %p126 = pneg %p14
  $region19: #{translation_transformer_forward.61} parent=0 // pred_check_branch
    %128 = sbr.rel (%p126) target = $region21
  $region20: #{translation_transformer_forward.61} parent=0 // pred_region
    %v129 = vld [vmem:[#allocation2] sm:$0xff]
    %v130 = vld [vmem:[#allocation2 + $0x8] sm:$0xff]
    %131 = vst [vmem:[%s3] sm:$0xff] %v129
    %132 = vst [vmem:[%s3 + $0x8] sm:$0xff] %v130
  $region21: #{translation_transformer_forward.61} parent=0 // pred_fallthru
    _
  // Predicated region
  $region22: #{translation_transformer_forward.61} parent=0 // pred_check
    _
  $region23: #{translation_transformer_forward.61} parent=0 // pred_check_branch
    %134 = sbr.rel (0) target = $region25
  $region24: #{translation_transformer_forward.61} parent=0 // pred_region
    _
  $region25: #{translation_transformer_forward.61} parent=0 // pred_fallthru
    _
  // Predicated region
  $region26: #{translation_transformer_forward.61} parent=0 // pred_check
    _
  $region27: #{translation_transformer_forward.61} parent=0 // pred_check_branch
    %136 = sbr.rel (0) target = $region29
  $region28: #{translation_transformer_forward.61} parent=0 // pred_region
    _
  $region29: #{translation_transformer_forward.61} parent=0 // pred_fallthru
    _

// kernel: translation_transformer_forward.46
$region0: #{translation_transformer_forward.46}
  #allocation0 [shape = 'u32[]', space=smem, size = 0x4, offset = 0x4, fixed_abs, tag = 'smem constant byte address 0x4 - core index']
  #allocation1 [shape = 'u32[144,128]{1,0:T(1,128)}', space=vmem, size = 0x12000, scoped, tag = 'internal scratch']
  #allocation2 [shape = 'f32[16,512]{1,0:T(8,128)}', space=vmem, size = 0x8000, scoped, tag = 'scratch operand']
  %s0 = inlined_call_operand.vmem [shape: f32[16,128], index: 0, kind: input, shape index: {}]
  %s1 = inlined_call_operand.vmem [shape: f32[128,512], index: 1, kind: input, shape index: {}]
  %s2 = inlined_call_operand.vmem [shape: f32[1,512], index: 2, kind: input, shape index: {}]
  %s3 = inlined_call_operand.vmem [shape: f32[16,512], index: 3, kind: output, shape index: {}]
  %s4 = sld [smem:[#allocation0]]
  $region30: #{translation_transformer_forward.46} parent=0
    _
  %s6 = ssub.s32 1, %s4
  %s7 = scalar_select 0, %s6, %s4
  // Predicated region
  $region2: #{translation_transformer_forward.46} parent=0 // pred_check
    _
  $region3: #{translation_transformer_forward.46} parent=0 // pred_check_branch
    %9 = sbr.rel (0) target = $region5
  $region4: #{translation_transformer_forward.46} parent=0 // pred_region
    _
  $region5: #{translation_transformer_forward.46} parent=0 // pred_fallthru
    _
  // Predicated region
  $region6: #{translation_transformer_forward.46} parent=0 // pred_check
    _
  $region7: #{translation_transformer_forward.46} parent=0 // pred_check_branch
    %11 = sbr.rel (0) target = $region9
  $region8: #{translation_transformer_forward.46} parent=0 // pred_region
    _
  $region9: #{translation_transformer_forward.46} parent=0 // pred_fallthru
    _
  // Predicated region
  $region10: #{translation_transformer_forward.46} parent=0 // pred_check
    _
  $region11: #{translation_transformer_forward.46} parent=0 // pred_check_branch
    %13 = sbr.rel (0) target = $region13
  $region12: #{translation_transformer_forward.46} parent=0 // pred_region
    _
  $region13: #{translation_transformer_forward.46} parent=0 // pred_fallthru
    _
  %p14 = scmp.eq.s32.totalorder 0, 0
  // Predicated region
  $region14: #{translation_transformer_forward.46} parent=0 // pred_check
    %p15 = pneg %p14
  $region15: #{translation_transformer_forward.46} parent=0 // pred_check_branch
    %17 = sbr.rel (%p15) target = $region17
  $region16: #{translation_transformer_forward.46} parent=0 // pred_region
    %v18 = vld [vmem:[%s2] sm:$0xf]
    %v20 = vlaneseq
    %v21 = vshrl.u32 %v20, 7
    %v22 = vsub.s32 0, %v21
    %v23 = vrot.slane %v18, %v22
    %v24 = vlaneseq
    %v25 = vshrl.u32 %v24, 7
    %v26 = vsub.s32 1, %v25
    %v27 = vrot.slane %v18, %v26
    %v28 = vlaneseq
    %v29 = vshrl.u32 %v28, 7
    %v30 = vsub.s32 2, %v29
    %v31 = vrot.slane %v18, %v30
    %v32 = vlaneseq
    %v33 = vshrl.u32 %v32, 7
    %v34 = vsub.s32 3, %v33
    %v35 = vrot.slane %v18, %v34
    %40 = vst [vmem:[#allocation2] sm:$0xff] %v23
    %41 = vst [vmem:[#allocation2 + $0x8] sm:$0xff] %v27
    %42 = vst [vmem:[#allocation2 + $0x10] sm:$0xff] %v31
    %43 = vst [vmem:[#allocation2 + $0x18] sm:$0xff] %v35
    %44 = vst [vmem:[#allocation2 + $0x20] sm:$0xff] %v23
    %45 = vst [vmem:[#allocation2 + $0x28] sm:$0xff] %v27
    %46 = vst [vmem:[#allocation2 + $0x30] sm:$0xff] %v31
    %47 = vst [vmem:[#allocation2 + $0x38] sm:$0xff] %v35
  $region17: #{translation_transformer_forward.46} parent=0 // pred_fallthru
    _
  %v48 = vld [vmem:[#allocation2] sm:$0xff]
  %v49 = vld [vmem:[#allocation2 + $0x8] sm:$0xff]
  %v50 = vld [vmem:[#allocation2 + $0x10] sm:$0xff]
  %v51 = vld [vmem:[#allocation2 + $0x18] sm:$0xff]
  %v52 = vld [vmem:[#allocation2 + $0x20] sm:$0xff]
  %v53 = vld [vmem:[#allocation2 + $0x28] sm:$0xff]
  %v54 = vld [vmem:[#allocation2 + $0x30] sm:$0xff]
  %v55 = vld [vmem:[#allocation2 + $0x38] sm:$0xff]
  %v56 = vld [vmem:[%s0] sm:$0xff]
  %v57 = vld [vmem:[%s0 + $0x8] sm:$0xff]
  %v58 = vld [vmem:[%s1] sm:$0xff]
  %v59 = vld [vmem:[%s1 + $0x8] sm:$0xff]
  %v60 = vld [vmem:[%s1 + $0x10] sm:$0xff]
  %v61 = vld [vmem:[%s1 + $0x18] sm:$0xff]
  %v62 = vld [vmem:[%s1 + $0x20] sm:$0xff]
  %v63 = vld [vmem:[%s1 + $0x28] sm:$0xff]
  %v64 = vld [vmem:[%s1 + $0x30] sm:$0xff]
  %v65 = vld [vmem:[%s1 + $0x38] sm:$0xff]
  %v66 = vld [vmem:[%s1 + $0x40] sm:$0xff]
  %v67 = vld [vmem:[%s1 + $0x48] sm:$0xff]
  %v68 = vld [vmem:[%s1 + $0x50] sm:$0xff]
  %v69 = vld [vmem:[%s1 + $0x58] sm:$0xff]
  %v70 = vld [vmem:[%s1 + $0x60] sm:$0xff]
  %v71 = vld [vmem:[%s1 + $0x68] sm:$0xff]
  %v72 = vld [vmem:[%s1 + $0x70] sm:$0xff]
  %v73 = vld [vmem:[%s1 + $0x78] sm:$0xff]
  %v74 = vld [vmem:[%s1 + $0x80] sm:$0xff]
  %v75 = vld [vmem:[%s1 + $0x88] sm:$0xff]
  %v76 = vld [vmem:[%s1 + $0x90] sm:$0xff]
  %v77 = vld [vmem:[%s1 + $0x98] sm:$0xff]
  %v78 = vld [vmem:[%s1 + $0xa0] sm:$0xff]
  %v79 = vld [vmem:[%s1 + $0xa8] sm:$0xff]
  %v80 = vld [vmem:[%s1 + $0xb0] sm:$0xff]
  %v81 = vld [vmem:[%s1 + $0xb8] sm:$0xff]
  %v82 = vld [vmem:[%s1 + $0xc0] sm:$0xff]
  %v83 = vld [vmem:[%s1 + $0xc8] sm:$0xff]
  %v84 = vld [vmem:[%s1 + $0xd0] sm:$0xff]
  %v85 = vld [vmem:[%s1 + $0xd8] sm:$0xff]
  %v86 = vld [vmem:[%s1 + $0xe0] sm:$0xff]
  %v87 = vld [vmem:[%s1 + $0xe8] sm:$0xff]
  %v88 = vld [vmem:[%s1 + $0xf0] sm:$0xff]
  %v89 = vld [vmem:[%s1 + $0xf8] sm:$0xff]
  %v90 = vld [vmem:[%s1 + $0x100] sm:$0xff]
  %v91 = vld [vmem:[%s1 + $0x108] sm:$0xff]
  %v92 = vld [vmem:[%s1 + $0x110] sm:$0xff]
  %v93 = vld [vmem:[%s1 + $0x118] sm:$0xff]
  %v94 = vld [vmem:[%s1 + $0x120] sm:$0xff]
  %v95 = vld [vmem:[%s1 + $0x128] sm:$0xff]
  %v96 = vld [vmem:[%s1 + $0x130] sm:$0xff]
  %v97 = vld [vmem:[%s1 + $0x138] sm:$0xff]
  %v98 = vld [vmem:[%s1 + $0x140] sm:$0xff]
  %v99 = vld [vmem:[%s1 + $0x148] sm:$0xff]
  %v100 = vld [vmem:[%s1 + $0x150] sm:$0xff]
  %v101 = vld [vmem:[%s1 + $0x158] sm:$0xff]
  %v102 = vld [vmem:[%s1 + $0x160] sm:$0xff]
  %v103 = vld [vmem:[%s1 + $0x168] sm:$0xff]
  %v104 = vld [vmem:[%s1 + $0x170] sm:$0xff]
  %v105 = vld [vmem:[%s1 + $0x178] sm:$0xff]
  %v106 = vld [vmem:[%s1 + $0x180] sm:$0xff]
  %v107 = vld [vmem:[%s1 + $0x188] sm:$0xff]
  %v108 = vld [vmem:[%s1 + $0x190] sm:$0xff]
  %v109 = vld [vmem:[%s1 + $0x198] sm:$0xff]
  %v110 = vld [vmem:[%s1 + $0x1a0] sm:$0xff]
  %v111 = vld [vmem:[%s1 + $0x1a8] sm:$0xff]
  %v112 = vld [vmem:[%s1 + $0x1b0] sm:$0xff]
  %v113 = vld [vmem:[%s1 + $0x1b8] sm:$0xff]
  %v114 = vld [vmem:[%s1 + $0x1c0] sm:$0xff]
  %v115 = vld [vmem:[%s1 + $0x1c8] sm:$0xff]
  %v116 = vld [vmem:[%s1 + $0x1d0] sm:$0xff]
  %v117 = vld [vmem:[%s1 + $0x1d8] sm:$0xff]
  %v118 = vld [vmem:[%s1 + $0x1e0] sm:$0xff]
  %v119 = vld [vmem:[%s1 + $0x1e8] sm:$0xff]
  %v120 = vld [vmem:[%s1 + $0x1f0] sm:$0xff]
  %v121 = vld [vmem:[%s1 + $0x1f8] sm:$0xff]
  %122 = vmatprep.subr.mxu0 %v59
  %123 = vmatpush1.msra.mxu0 %v58
  %124 = vmatprep.subr.mxu0 %v63
  %125 = vmatpush1.msra.mxu0 %v62
  %126 = vmatprep.subr.mxu0 %v67
  %127 = vmatpush1.msra.mxu0 %v66
  %128 = vmatprep.subr.mxu0 %v71
  %129 = vmatpush1.msra.mxu0 %v70
  %130 = vmatprep.subr.mxu0 %v75
  %131 = vmatpush1.msra.mxu0 %v74
  %132 = vmatprep.subr.mxu0 %v79
  %133 = vmatpush1.msra.mxu0 %v78
  %134 = vmatprep.subr.mxu0 %v83
  %135 = vmatpush1.msra.mxu0 %v82
  %136 = vmatprep.subr.mxu0 %v87
  %137 = vmatpush1.msra.mxu0 %v86
  %138 = vmatprep.subr.mxu0 %v91
  %139 = vmatpush1.msra.mxu0 %v90
  %140 = vmatprep.subr.mxu0 %v95
  %141 = vmatpush1.msra.mxu0 %v94
  %142 = vmatprep.subr.mxu0 %v99
  %143 = vmatpush1.msra.mxu0 %v98
  %144 = vmatprep.subr.mxu0 %v103
  %145 = vmatpush1.msra.mxu0 %v102
  %146 = vmatprep.subr.mxu0 %v107
  %147 = vmatpush1.msra.mxu0 %v106
  %148 = vmatprep.subr.mxu0 %v111
  %149 = vmatpush1.msra.mxu0 %v110
  %150 = vmatprep.subr.mxu0 %v115
  %151 = vmatpush1.msra.mxu0 %v114
  %152 = vmatprep.subr.mxu0 %v119
  %153 = vmatpush1.msra.mxu0 %v118
  %154 = vmatprep.subr.mxu0 0.0
  %155 = vmatpush1.msra.mxu0 0.0
  %156 = vmatprep.subr.mxu0 0.0
  %157 = vmatpush1.msra.mxu0 0.0
  %158 = vmatprep.subr.mxu0 0.0
  %159 = vmatpush1.msra.mxu0 0.0
  %160 = vmatprep.subr.mxu0 0.0
  %161 = vmatpush1.msra.mxu0 0.0
  %162 = vmatprep.subr.mxu0 0.0
  %163 = vmatpush1.msra.mxu0 0.0
  %164 = vmatprep.subr.mxu0 0.0
  %165 = vmatpush1.msra.mxu0 0.0
  %166 = vmatprep.subr.mxu0 0.0
  %167 = vmatpush1.msra.mxu0 0.0
  %168 = vmatprep.subr.mxu0 0.0
  %169 = vmatpush1.msra.mxu0 0.0
  %170 = vmatprep.subr.mxu0 0.0
  %171 = vmatpush1.msra.mxu0 0.0
  %172 = vmatprep.subr.mxu0 0.0
  %173 = vmatpush1.msra.mxu0 0.0
  %174 = vmatprep.subr.mxu0 0.0
  %175 = vmatpush1.msra.mxu0 0.0
  %176 = vmatprep.subr.mxu0 0.0
  %177 = vmatpush1.msra.mxu0 0.0
  %178 = vmatprep.subr.mxu0 0.0
  %179 = vmatpush1.msra.mxu0 0.0
  %180 = vmatprep.subr.mxu0 0.0
  %181 = vmatpush1.msra.mxu0 0.0
  %182 = vmatprep.subr.mxu0 0.0
  %183 = vmatpush1.msra.mxu0 0.0
  %184 = vmatprep.subr.mxu0 0.0
  %185 = vmatpush1.msra.mxu0 0.0
  %186 = vmatprep.mubr.f32.mxu0 0.0
  %187 = vmatmul.mubr.f32.gmra.mrb[0].mxu0 %v56
  %v188 = vpop.f32.mrb[0].mxu0
  %v189 = vadd.f32 0.0, %v188
  %v190 = vpop.f32.mrb[0].mxu0
  %v191 = vadd.f32 0.0, %v190
  %192 = vmatprep.mubr.f32.mxu0 0.0
  %193 = vmatmul.mubr.f32.gmra.mrb[0].mxu0 %v57
  %v194 = vpop.f32.mrb[0].mxu0
  %v195 = vadd.f32 0.0, %v194
  %v196 = vpop.f32.mrb[0].mxu0
  %v197 = vadd.f32 0.0, %v196
  %198 = vdwg.mxu0
  %199 = vmatprep.subr.mxu0 %v61
  %200 = vmatpush1.msra.mxu0 %v60
  %201 = vmatprep.subr.mxu0 %v65
  %202 = vmatpush1.msra.mxu0 %v64
  %203 = vmatprep.subr.mxu0 %v69
  %204 = vmatpush1.msra.mxu0 %v68
  %205 = vmatprep.subr.mxu0 %v73
  %206 = vmatpush1.msra.mxu0 %v72
  %207 = vmatprep.subr.mxu0 %v77
  %208 = vmatpush1.msra.mxu0 %v76
  %209 = vmatprep.subr.mxu0 %v81
  %210 = vmatpush1.msra.mxu0 %v80
  %211 = vmatprep.subr.mxu0 %v85
  %212 = vmatpush1.msra.mxu0 %v84
  %213 = vmatprep.subr.mxu0 %v89
  %214 = vmatpush1.msra.mxu0 %v88
  %215 = vmatprep.subr.mxu0 %v93
  %216 = vmatpush1.msra.mxu0 %v92
  %217 = vmatprep.subr.mxu0 %v97
  %218 = vmatpush1.msra.mxu0 %v96
  %219 = vmatprep.subr.mxu0 %v101
  %220 = vmatpush1.msra.mxu0 %v100
  %221 = vmatprep.subr.mxu0 %v105
  %222 = vmatpush1.msra.mxu0 %v104
  %223 = vmatprep.subr.mxu0 %v109
  %224 = vmatpush1.msra.mxu0 %v108
  %225 = vmatprep.subr.mxu0 %v113
  %226 = vmatpush1.msra.mxu0 %v112
  %227 = vmatprep.subr.mxu0 %v117
  %228 = vmatpush1.msra.mxu0 %v116
  %229 = vmatprep.subr.mxu0 %v121
  %230 = vmatpush1.msra.mxu0 %v120
  %231 = vmatprep.subr.mxu0 0.0
  %232 = vmatpush1.msra.mxu0 0.0
  %233 = vmatprep.subr.mxu0 0.0
  %234 = vmatpush1.msra.mxu0 0.0
  %235 = vmatprep.subr.mxu0 0.0
  %236 = vmatpush1.msra.mxu0 0.0
  %237 = vmatprep.subr.mxu0 0.0
  %238 = vmatpush1.msra.mxu0 0.0
  %239 = vmatprep.subr.mxu0 0.0
  %240 = vmatpush1.msra.mxu0 0.0
  %241 = vmatprep.subr.mxu0 0.0
  %242 = vmatpush1.msra.mxu0 0.0
  %243 = vmatprep.subr.mxu0 0.0
  %244 = vmatpush1.msra.mxu0 0.0
  %245 = vmatprep.subr.mxu0 0.0
  %246 = vmatpush1.msra.mxu0 0.0
  %247 = vmatprep.subr.mxu0 0.0
  %248 = vmatpush1.msra.mxu0 0.0
  %249 = vmatprep.subr.mxu0 0.0
  %250 = vmatpush1.msra.mxu0 0.0
  %251 = vmatprep.subr.mxu0 0.0
  %252 = vmatpush1.msra.mxu0 0.0
  %253 = vmatprep.subr.mxu0 0.0
  %254 = vmatpush1.msra.mxu0 0.0
  %255 = vmatprep.subr.mxu0 0.0
  %256 = vmatpush1.msra.mxu0 0.0
  %257 = vmatprep.subr.mxu0 0.0
  %258 = vmatpush1.msra.mxu0 0.0
  %259 = vmatprep.subr.mxu0 0.0
  %260 = vmatpush1.msra.mxu0 0.0
  %261 = vmatprep.subr.mxu0 0.0
  %262 = vmatpush1.msra.mxu0 0.0
  %263 = vmatprep.mubr.f32.mxu0 0.0
  %264 = vmatmul.mubr.f32.gmra.mrb[0].mxu0 %v56
  %v265 = vpop.f32.mrb[0].mxu0
  %v266 = vadd.f32 0.0, %v265
  %v267 = vpop.f32.mrb[0].mxu0
  %v268 = vadd.f32 0.0, %v267
  %269 = vmatprep.mubr.f32.mxu0 0.0
  %270 = vmatmul.mubr.f32.gmra.mrb[0].mxu0 %v57
  %v271 = vpop.f32.mrb[0].mxu0
  %v272 = vadd.f32 0.0, %v271
  %v273 = vpop.f32.mrb[0].mxu0
  %v274 = vadd.f32 0.0, %v273
  %275 = vdwg.mxu0
  %v276 = vadd.f32 %v48, %v189
  %v277 = vadd.f32 %v49, %v191
  %v278 = vadd.f32 %v50, %v266
  %v279 = vadd.f32 %v51, %v268
  %v280 = vadd.f32 %v52, %v195
  %v281 = vadd.f32 %v53, %v197
  %v282 = vadd.f32 %v54, %v272
  %v283 = vadd.f32 %v55, %v274
  %284 = vst [vmem:[#allocation2] sm:$0xff] %v276
  %285 = vst [vmem:[#allocation2 + $0x8] sm:$0xff] %v277
  %286 = vst [vmem:[#allocation2 + $0x10] sm:$0xff] %v278
  %287 = vst [vmem:[#allocation2 + $0x18] sm:$0xff] %v279
  %288 = vst [vmem:[#allocation2 + $0x20] sm:$0xff] %v280
  %289 = vst [vmem:[#allocation2 + $0x28] sm:$0xff] %v281
  %290 = vst [vmem:[#allocation2 + $0x30] sm:$0xff] %v282
  %291 = vst [vmem:[#allocation2 + $0x38] sm:$0xff] %v283
  // Predicated region
  $region18: #{translation_transformer_forward.46} parent=0 // pred_check
    %p292 = pneg %p14
  $region19: #{translation_transformer_forward.46} parent=0 // pred_check_branch
    %294 = sbr.rel (%p292) target = $region21
  $region20: #{translation_transformer_forward.46} parent=0 // pred_region
    %v295 = vld [vmem:[#allocation2] sm:$0xff]
    %v296 = vld [vmem:[#allocation2 + $0x8] sm:$0xff]
    %v297 = vld [vmem:[#allocation2 + $0x10] sm:$0xff]
    %v298 = vld [vmem:[#allocation2 + $0x18] sm:$0xff]
    %v299 = vld [vmem:[#allocation2 + $0x20] sm:$0xff]
    %v300 = vld [vmem:[#allocation2 + $0x28] sm:$0xff]
    %v301 = vld [vmem:[#allocation2 + $0x30] sm:$0xff]
    %v302 = vld [vmem:[#allocation2 + $0x38] sm:$0xff]
    %303 = vst [vmem:[%s3] sm:$0xff] %v295
    %304 = vst [vmem:[%s3 + $0x8] sm:$0xff] %v296
    %305 = vst [vmem:[%s3 + $0x10] sm:$0xff] %v297
    %306 = vst [vmem:[%s3 + $0x18] sm:$0xff] %v298
    %307 = vst [vmem:[%s3 + $0x20] sm:$0xff] %v299
    %308 = vst [vmem:[%s3 + $0x28] sm:$0xff] %v300
    %309 = vst [vmem:[%s3 + $0x30] sm:$0xff] %v301
    %310 = vst [vmem:[%s3 + $0x38] sm:$0xff] %v302
  $region21: #{translation_transformer_forward.46} parent=0 // pred_fallthru
    _
  // Predicated region
  $region22: #{translation_transformer_forward.46} parent=0 // pred_check
    _
  $region23: #{translation_transformer_forward.46} parent=0 // pred_check_branch
    %312 = sbr.rel (0) target = $region25
  $region24: #{translation_transformer_forward.46} parent=0 // pred_region
    _
  $region25: #{translation_transformer_forward.46} parent=0 // pred_fallthru
    _
  // Predicated region
  $region26: #{translation_transformer_forward.46} parent=0 // pred_check
    _
  $region27: #{translation_transformer_forward.46} parent=0 // pred_check_branch
    %314 = sbr.rel (0) target = $region29
  $region28: #{translation_transformer_forward.46} parent=0 // pred_region
    _
  $region29: #{translation_transformer_forward.46} parent=0 // pred_fallthru
    _

// kernel: translation_transformer_forward.47
$region0: #{translation_transformer_forward.47}
  #allocation0 [shape = 'u32[]', space=smem, size = 0x4, offset = 0x4, fixed_abs, tag = 'smem constant byte address 0x4 - core index']
  #allocation1 [shape = 'u32[144,128]{1,0:T(1,128)}', space=vmem, size = 0x12000, scoped, tag = 'internal scratch']
  %s0 = inlined_call_operand.vmem [shape: f32[4,7,128], index: 0, kind: input, shape index: {}]
  %s1 = inlined_call_operand.vmem [shape: f32[4,8,128], index: 1, kind: input, shape index: {}]
  %s2 = inlined_call_operand.vmem [shape: f32[4,8,128], index: 2, kind: input, shape index: {}]
  %s3 = inlined_call_operand.vmem [shape: f32[4,7,128], index: 3, kind: output, shape index: {}]
  %s4 = sld [smem:[#allocation0]]
  $region22: #{translation_transformer_forward.47} parent=0
    _
  %s6 = ssub.s32 1, %s4
  %s7 = scalar_select 0, %s6, %s4
  // Predicated region
  $region2: #{translation_transformer_forward.47} parent=0 // pred_check
    _
  $region3: #{translation_transformer_forward.47} parent=0 // pred_check_branch
    %9 = sbr.rel (0) target = $region5
  $region4: #{translation_transformer_forward.47} parent=0 // pred_region
    _
  $region5: #{translation_transformer_forward.47} parent=0 // pred_fallthru
    _
  // Predicated region
  $region6: #{translation_transformer_forward.47} parent=0 // pred_check
    _
  $region7: #{translation_transformer_forward.47} parent=0 // pred_check_branch
    %11 = sbr.rel (0) target = $region9
  $region8: #{translation_transformer_forward.47} parent=0 // pred_region
    _
  $region9: #{translation_transformer_forward.47} parent=0 // pred_fallthru
    _
  // Predicated region
  $region10: #{translation_transformer_forward.47} parent=0 // pred_check
    _
  $region11: #{translation_transformer_forward.47} parent=0 // pred_check_branch
    %13 = sbr.rel (0) target = $region13
  $region12: #{translation_transformer_forward.47} parent=0 // pred_region
    _
  $region13: #{translation_transformer_forward.47} parent=0 // pred_fallthru
    _
  %v14 = vld [vmem:[%s0] sm:$0x7f]
  %v15 = vld [vmem:[%s0 + $0x8] sm:$0x7f]
  %v16 = vld [vmem:[%s0 + $0x10] sm:$0x7f]
  %v17 = vld [vmem:[%s0 + $0x18] sm:$0x7f]
  %v18 = vld [vmem:[%s1] sm:$0xff]
  %v19 = vld [vmem:[%s1 + $0x8] sm:$0xff]
  %v20 = vld [vmem:[%s1 + $0x10] sm:$0xff]
  %v21 = vld [vmem:[%s1 + $0x18] sm:$0xff]
  %v22 = vld [vmem:[%s2] sm:$0xff]
  %v23 = vld [vmem:[%s2 + $0x8] sm:$0xff]
  %v24 = vld [vmem:[%s2 + $0x10] sm:$0xff]
  %v25 = vld [vmem:[%s2 + $0x18] sm:$0xff]
  %26 = vmatprep.subr.mxu0 0.0
  %27 = vmatpush1.xpose.msra.mxu0 %v18
  %28 = vmatprep.subr.mxu0 0.0
  %29 = vmatpush1.xpose.msra.mxu0 0.0
  %30 = vmatprep.subr.mxu0 0.0
  %31 = vmatpush1.xpose.msra.mxu0 0.0
  %32 = vmatprep.subr.mxu0 0.0
  %33 = vmatpush1.xpose.msra.mxu0 0.0
  %34 = vmatprep.subr.mxu0 0.0
  %35 = vmatpush1.xpose.msra.mxu0 0.0
  %36 = vmatprep.subr.mxu0 0.0
  %37 = vmatpush1.xpose.msra.mxu0 0.0
  %38 = vmatprep.subr.mxu0 0.0
  %39 = vmatpush1.xpose.msra.mxu0 0.0
  %40 = vmatprep.subr.mxu0 0.0
  %41 = vmatpush1.xpose.msra.mxu0 0.0
  %42 = vmatprep.subr.mxu0 0.0
  %43 = vmatpush1.xpose.msra.mxu0 0.0
  %44 = vmatprep.subr.mxu0 0.0
  %45 = vmatpush1.xpose.msra.mxu0 0.0
  %46 = vmatprep.subr.mxu0 0.0
  %47 = vmatpush1.xpose.msra.mxu0 0.0
  %48 = vmatprep.subr.mxu0 0.0
  %49 = vmatpush1.xpose.msra.mxu0 0.0
  %50 = vmatprep.subr.mxu0 0.0
  %51 = vmatpush1.xpose.msra.mxu0 0.0
  %52 = vmatprep.subr.mxu0 0.0
  %53 = vmatpush1.xpose.msra.mxu0 0.0
  %54 = vmatprep.subr.mxu0 0.0
  %55 = vmatpush1.xpose.msra.mxu0 0.0
  %56 = vmatprep.subr.mxu0 0.0
  %57 = vmatpush1.xpose.msra.mxu0 0.0
  %58 = vmatprep.subr.mxu0 0.0
  %59 = vmatpush1.xpose.msra.mxu0 0.0
  %60 = vmatprep.subr.mxu0 0.0
  %61 = vmatpush1.xpose.msra.mxu0 0.0
  %62 = vmatprep.subr.mxu0 0.0
  %63 = vmatpush1.xpose.msra.mxu0 0.0
  %64 = vmatprep.subr.mxu0 0.0
  %65 = vmatpush1.xpose.msra.mxu0 0.0
  %66 = vmatprep.subr.mxu0 0.0
  %67 = vmatpush1.xpose.msra.mxu0 0.0
  %68 = vmatprep.subr.mxu0 0.0
  %69 = vmatpush1.xpose.msra.mxu0 0.0
  %70 = vmatprep.subr.mxu0 0.0
  %71 = vmatpush1.xpose.msra.mxu0 0.0
  %72 = vmatprep.subr.mxu0 0.0
  %73 = vmatpush1.xpose.msra.mxu0 0.0
  %74 = vmatprep.subr.mxu0 0.0
  %75 = vmatpush1.xpose.msra.mxu0 0.0
  %76 = vmatprep.subr.mxu0 0.0
  %77 = vmatpush1.xpose.msra.mxu0 0.0
  %78 = vmatprep.subr.mxu0 0.0
  %79 = vmatpush1.xpose.msra.mxu0 0.0
  %80 = vmatprep.subr.mxu0 0.0
  %81 = vmatpush1.xpose.msra.mxu0 0.0
  %82 = vmatprep.subr.mxu0 0.0
  %83 = vmatpush1.xpose.msra.mxu0 0.0
  %84 = vmatprep.subr.mxu0 0.0
  %85 = vmatpush1.xpose.msra.mxu0 0.0
  %86 = vmatprep.subr.mxu0 0.0
  %87 = vmatpush1.xpose.msra.mxu0 0.0
  %88 = vmatprep.subr.mxu0 0.0
  %89 = vmatpush1.xpose.msra.mxu0 0.0
  %90 = vmatprep.mubr.f32.mxu0 0.0
  %91 = vmatmul.mubr.f32.gmra.mrb[0].mxu0 %v14
  %v92 = vpop.f32.mrb[0].mxu0
  %v93 = vadd.f32 0.0, %v92
  %v94 = vpop.f32.mrb[0].mxu0
  %95 = vdwg.mxu0
  %96 = vmatprep.subr.mxu0 0.0
  %97 = vmatpush1.xpose.msra.mxu0 %v19
  %98 = vmatprep.subr.mxu0 0.0
  %99 = vmatpush1.xpose.msra.mxu0 0.0
  %100 = vmatprep.subr.mxu0 0.0
  %101 = vmatpush1.xpose.msra.mxu0 0.0
  %102 = vmatprep.subr.mxu0 0.0
  %103 = vmatpush1.xpose.msra.mxu0 0.0
  %104 = vmatprep.subr.mxu0 0.0
  %105 = vmatpush1.xpose.msra.mxu0 0.0
  %106 = vmatprep.subr.mxu0 0.0
  %107 = vmatpush1.xpose.msra.mxu0 0.0
  %108 = vmatprep.subr.mxu0 0.0
  %109 = vmatpush1.xpose.msra.mxu0 0.0
  %110 = vmatprep.subr.mxu0 0.0
  %111 = vmatpush1.xpose.msra.mxu0 0.0
  %112 = vmatprep.subr.mxu0 0.0
  %113 = vmatpush1.xpose.msra.mxu0 0.0
  %114 = vmatprep.subr.mxu0 0.0
  %115 = vmatpush1.xpose.msra.mxu0 0.0
  %116 = vmatprep.subr.mxu0 0.0
  %117 = vmatpush1.xpose.msra.mxu0 0.0
  %118 = vmatprep.subr.mxu0 0.0
  %119 = vmatpush1.xpose.msra.mxu0 0.0
  %120 = vmatprep.subr.mxu0 0.0
  %121 = vmatpush1.xpose.msra.mxu0 0.0
  %122 = vmatprep.subr.mxu0 0.0
  %123 = vmatpush1.xpose.msra.mxu0 0.0
  %124 = vmatprep.subr.mxu0 0.0
  %125 = vmatpush1.xpose.msra.mxu0 0.0
  %126 = vmatprep.subr.mxu0 0.0
  %127 = vmatpush1.xpose.msra.mxu0 0.0
  %128 = vmatprep.subr.mxu0 0.0
  %129 = vmatpush1.xpose.msra.mxu0 0.0
  %130 = vmatprep.subr.mxu0 0.0
  %131 = vmatpush1.xpose.msra.mxu0 0.0
  %132 = vmatprep.subr.mxu0 0.0
  %133 = vmatpush1.xpose.msra.mxu0 0.0
  %134 = vmatprep.subr.mxu0 0.0
  %135 = vmatpush1.xpose.msra.mxu0 0.0
  %136 = vmatprep.subr.mxu0 0.0
  %137 = vmatpush1.xpose.msra.mxu0 0.0
  %138 = vmatprep.subr.mxu0 0.0
  %139 = vmatpush1.xpose.msra.mxu0 0.0
  %140 = vmatprep.subr.mxu0 0.0
  %141 = vmatpush1.xpose.msra.mxu0 0.0
  %142 = vmatprep.subr.mxu0 0.0
  %143 = vmatpush1.xpose.msra.mxu0 0.0
  %144 = vmatprep.subr.mxu0 0.0
  %145 = vmatpush1.xpose.msra.mxu0 0.0
  %146 = vmatprep.subr.mxu0 0.0
  %147 = vmatpush1.xpose.msra.mxu0 0.0
  %148 = vmatprep.subr.mxu0 0.0
  %149 = vmatpush1.xpose.msra.mxu0 0.0
  %150 = vmatprep.subr.mxu0 0.0
  %151 = vmatpush1.xpose.msra.mxu0 0.0
  %152 = vmatprep.subr.mxu0 0.0
  %153 = vmatpush1.xpose.msra.mxu0 0.0
  %154 = vmatprep.subr.mxu0 0.0
  %155 = vmatpush1.xpose.msra.mxu0 0.0
  %156 = vmatprep.subr.mxu0 0.0
  %157 = vmatpush1.xpose.msra.mxu0 0.0
  %158 = vmatprep.subr.mxu0 0.0
  %159 = vmatpush1.xpose.msra.mxu0 0.0
  %160 = vmatprep.mubr.f32.mxu0 0.0
  %161 = vmatmul.mubr.f32.gmra.mrb[0].mxu0 %v15
  %v162 = vpop.f32.mrb[0].mxu0
  %v163 = vadd.f32 0.0, %v162
  %v164 = vpop.f32.mrb[0].mxu0
  %165 = vdwg.mxu0
  %166 = vmatprep.subr.mxu0 0.0
  %167 = vmatpush1.xpose.msra.mxu0 %v20
  %168 = vmatprep.subr.mxu0 0.0
  %169 = vmatpush1.xpose.msra.mxu0 0.0
  %170 = vmatprep.subr.mxu0 0.0
  %171 = vmatpush1.xpose.msra.mxu0 0.0
  %172 = vmatprep.subr.mxu0 0.0
  %173 = vmatpush1.xpose.msra.mxu0 0.0
  %174 = vmatprep.subr.mxu0 0.0
  %175 = vmatpush1.xpose.msra.mxu0 0.0
  %176 = vmatprep.subr.mxu0 0.0
  %177 = vmatpush1.xpose.msra.mxu0 0.0
  %178 = vmatprep.subr.mxu0 0.0
  %179 = vmatpush1.xpose.msra.mxu0 0.0
  %180 = vmatprep.subr.mxu0 0.0
  %181 = vmatpush1.xpose.msra.mxu0 0.0
  %182 = vmatprep.subr.mxu0 0.0
  %183 = vmatpush1.xpose.msra.mxu0 0.0
  %184 = vmatprep.subr.mxu0 0.0
  %185 = vmatpush1.xpose.msra.mxu0 0.0
  %186 = vmatprep.subr.mxu0 0.0
  %187 = vmatpush1.xpose.msra.mxu0 0.0
  %188 = vmatprep.subr.mxu0 0.0
  %189 = vmatpush1.xpose.msra.mxu0 0.0
  %190 = vmatprep.subr.mxu0 0.0
  %191 = vmatpush1.xpose.msra.mxu0 0.0
  %192 = vmatprep.subr.mxu0 0.0
  %193 = vmatpush1.xpose.msra.mxu0 0.0
  %194 = vmatprep.subr.mxu0 0.0
  %195 = vmatpush1.xpose.msra.mxu0 0.0
  %196 = vmatprep.subr.mxu0 0.0
  %197 = vmatpush1.xpose.msra.mxu0 0.0
  %198 = vmatprep.subr.mxu0 0.0
  %199 = vmatpush1.xpose.msra.mxu0 0.0
  %200 = vmatprep.subr.mxu0 0.0
  %201 = vmatpush1.xpose.msra.mxu0 0.0
  %202 = vmatprep.subr.mxu0 0.0
  %203 = vmatpush1.xpose.msra.mxu0 0.0
  %204 = vmatprep.subr.mxu0 0.0
  %205 = vmatpush1.xpose.msra.mxu0 0.0
  %206 = vmatprep.subr.mxu0 0.0
  %207 = vmatpush1.xpose.msra.mxu0 0.0
  %208 = vmatprep.subr.mxu0 0.0
  %209 = vmatpush1.xpose.msra.mxu0 0.0
  %210 = vmatprep.subr.mxu0 0.0
  %211 = vmatpush1.xpose.msra.mxu0 0.0
  %212 = vmatprep.subr.mxu0 0.0
  %213 = vmatpush1.xpose.msra.mxu0 0.0
  %214 = vmatprep.subr.mxu0 0.0
  %215 = vmatpush1.xpose.msra.mxu0 0.0
  %216 = vmatprep.subr.mxu0 0.0
  %217 = vmatpush1.xpose.msra.mxu0 0.0
  %218 = vmatprep.subr.mxu0 0.0
  %219 = vmatpush1.xpose.msra.mxu0 0.0
  %220 = vmatprep.subr.mxu0 0.0
  %221 = vmatpush1.xpose.msra.mxu0 0.0
  %222 = vmatprep.subr.mxu0 0.0
  %223 = vmatpush1.xpose.msra.mxu0 0.0
  %224 = vmatprep.subr.mxu0 0.0
  %225 = vmatpush1.xpose.msra.mxu0 0.0
  %226 = vmatprep.subr.mxu0 0.0
  %227 = vmatpush1.xpose.msra.mxu0 0.0
  %228 = vmatprep.subr.mxu0 0.0
  %229 = vmatpush1.xpose.msra.mxu0 0.0
  %230 = vmatprep.mubr.f32.mxu0 0.0
  %231 = vmatmul.mubr.f32.gmra.mrb[0].mxu0 %v16
  %v232 = vpop.f32.mrb[0].mxu0
  %v233 = vadd.f32 0.0, %v232
  %v234 = vpop.f32.mrb[0].mxu0
  %235 = vdwg.mxu0
  %236 = vmatprep.subr.mxu0 0.0
  %237 = vmatpush1.xpose.msra.mxu0 %v21
  %238 = vmatprep.subr.mxu0 0.0
  %239 = vmatpush1.xpose.msra.mxu0 0.0
  %240 = vmatprep.subr.mxu0 0.0
  %241 = vmatpush1.xpose.msra.mxu0 0.0
  %242 = vmatprep.subr.mxu0 0.0
  %243 = vmatpush1.xpose.msra.mxu0 0.0
  %244 = vmatprep.subr.mxu0 0.0
  %245 = vmatpush1.xpose.msra.mxu0 0.0
  %246 = vmatprep.subr.mxu0 0.0
  %247 = vmatpush1.xpose.msra.mxu0 0.0
  %248 = vmatprep.subr.mxu0 0.0
  %249 = vmatpush1.xpose.msra.mxu0 0.0
  %250 = vmatprep.subr.mxu0 0.0
  %251 = vmatpush1.xpose.msra.mxu0 0.0
  %252 = vmatprep.subr.mxu0 0.0
  %253 = vmatpush1.xpose.msra.mxu0 0.0
  %254 = vmatprep.subr.mxu0 0.0
  %255 = vmatpush1.xpose.msra.mxu0 0.0
  %256 = vmatprep.subr.mxu0 0.0
  %257 = vmatpush1.xpose.msra.mxu0 0.0
  %258 = vmatprep.subr.mxu0 0.0
  %259 = vmatpush1.xpose.msra.mxu0 0.0
  %260 = vmatprep.subr.mxu0 0.0
  %261 = vmatpush1.xpose.msra.mxu0 0.0
  %262 = vmatprep.subr.mxu0 0.0
  %263 = vmatpush1.xpose.msra.mxu0 0.0
  %264 = vmatprep.subr.mxu0 0.0
  %265 = vmatpush1.xpose.msra.mxu0 0.0
  %266 = vmatprep.subr.mxu0 0.0
  %267 = vmatpush1.xpose.msra.mxu0 0.0
  %268 = vmatprep.subr.mxu0 0.0
  %269 = vmatpush1.xpose.msra.mxu0 0.0
  %270 = vmatprep.subr.mxu0 0.0
  %271 = vmatpush1.xpose.msra.mxu0 0.0
  %272 = vmatprep.subr.mxu0 0.0
  %273 = vmatpush1.xpose.msra.mxu0 0.0
  %274 = vmatprep.subr.mxu0 0.0
  %275 = vmatpush1.xpose.msra.mxu0 0.0
  %276 = vmatprep.subr.mxu0 0.0
  %277 = vmatpush1.xpose.msra.mxu0 0.0
  %278 = vmatprep.subr.mxu0 0.0
  %279 = vmatpush1.xpose.msra.mxu0 0.0
  %280 = vmatprep.subr.mxu0 0.0
  %281 = vmatpush1.xpose.msra.mxu0 0.0
  %282 = vmatprep.subr.mxu0 0.0
  %283 = vmatpush1.xpose.msra.mxu0 0.0
  %284 = vmatprep.subr.mxu0 0.0
  %285 = vmatpush1.xpose.msra.mxu0 0.0
  %286 = vmatprep.subr.mxu0 0.0
  %287 = vmatpush1.xpose.msra.mxu0 0.0
  %288 = vmatprep.subr.mxu0 0.0
  %289 = vmatpush1.xpose.msra.mxu0 0.0
  %290 = vmatprep.subr.mxu0 0.0
  %291 = vmatpush1.xpose.msra.mxu0 0.0
  %292 = vmatprep.subr.mxu0 0.0
  %293 = vmatpush1.xpose.msra.mxu0 0.0
  %294 = vmatprep.subr.mxu0 0.0
  %295 = vmatpush1.xpose.msra.mxu0 0.0
  %296 = vmatprep.subr.mxu0 0.0
  %297 = vmatpush1.xpose.msra.mxu0 0.0
  %298 = vmatprep.subr.mxu0 0.0
  %299 = vmatpush1.xpose.msra.mxu0 0.0
  %300 = vmatprep.mubr.f32.mxu0 0.0
  %301 = vmatmul.mubr.f32.gmra.mrb[0].mxu0 %v17
  %v302 = vpop.f32.mrb[0].mxu0
  %v303 = vadd.f32 0.0, %v302
  %v304 = vpop.f32.mrb[0].mxu0
  %305 = vdwg.mxu0
  %v306 = vmul.f32 %v93, 0.25
  %v307 = vmul.f32 %v163, 0.25
  %v308 = vmul.f32 %v233, 0.25
  %v309 = vmul.f32 %v303, 0.25
  %vm310 = vcmask 63488
  %v311 = vsel %vm310, %v306, -inf
  %312 = vmax.xlane.f32.xlu0 %v311
  %v313 = vpop.xlane.xlu0 %312
  %v314 = vsel %vm310, %v307, -inf
  %315 = vmax.xlane.f32.xlu0 %v314
  %v316 = vpop.xlane.xlu0 %315
  %v317 = vsel %vm310, %v308, -inf
  %318 = vmax.xlane.f32.xlu0 %v317
  %v319 = vpop.xlane.xlu0 %318
  %v320 = vsel %vm310, %v309, -inf
  %321 = vmax.xlane.f32.xlu0 %v320
  %v322 = vpop.xlane.xlu0 %321
  %v323 = vsub.f32 %v306, %v313
  %v324 = vsub.f32 %v307, %v316
  %v325 = vsub.f32 %v308, %v319
  %v326 = vsub.f32 %v309, %v322
  %v327 = vmul.f32 %v323, 1.442695
  %v328 = vpow.pop %v327
  %v329 = vmul.f32 %v324, 1.442695
  %v330 = vpow.pop %v329
  %v331 = vmul.f32 %v325, 1.442695
  %v332 = vpow.pop %v331
  %v333 = vmul.f32 %v326, 1.442695
  %v334 = vpow.pop %v333
  %v335 = vsel %vm310, %v328, 0.0
  %336 = vadd.xlane.f32.xlu0 %v335
  %v337 = vpop.xlane.xlu0 %336
  %v338 = vsel %vm310, %v330, 0.0
  %339 = vadd.xlane.f32.xlu0 %v338
  %v340 = vpop.xlane.xlu0 %339
  %v341 = vsel %vm310, %v332, 0.0
  %342 = vadd.xlane.f32.xlu0 %v341
  %v343 = vpop.xlane.xlu0 %342
  %v344 = vsel %vm310, %v334, 0.0
  %345 = vadd.xlane.f32.xlu0 %v344
  %v346 = vpop.xlane.xlu0 %345
  %vm347 = vcmask 64512
  %v349 = vsel %vm347, %v328, 0
  %351 = vmatprep.subr.mxu0 0.0
  %352 = vmatpush1.msra.mxu0 %v22
  %353 = vmatprep.subr.mxu0 0.0
  %354 = vmatpush1.msra.mxu0 0.0
  %355 = vmatprep.subr.mxu0 0.0
  %356 = vmatpush1.msra.mxu0 0.0
  %357 = vmatprep.subr.mxu0 0.0
  %358 = vmatpush1.msra.mxu0 0.0
  %359 = vmatprep.subr.mxu0 0.0
  %360 = vmatpush1.msra.mxu0 0.0
  %361 = vmatprep.subr.mxu0 0.0
  %362 = vmatpush1.msra.mxu0 0.0
  %363 = vmatprep.subr.mxu0 0.0
  %364 = vmatpush1.msra.mxu0 0.0
  %365 = vmatprep.subr.mxu0 0.0
  %366 = vmatpush1.msra.mxu0 0.0
  %367 = vmatprep.subr.mxu0 0.0
  %368 = vmatpush1.msra.mxu0 0.0
  %369 = vmatprep.subr.mxu0 0.0
  %370 = vmatpush1.msra.mxu0 0.0
  %371 = vmatprep.subr.mxu0 0.0
  %372 = vmatpush1.msra.mxu0 0.0
  %373 = vmatprep.subr.mxu0 0.0
  %374 = vmatpush1.msra.mxu0 0.0
  %375 = vmatprep.subr.mxu0 0.0
  %376 = vmatpush1.msra.mxu0 0.0
  %377 = vmatprep.subr.mxu0 0.0
  %378 = vmatpush1.msra.mxu0 0.0
  %379 = vmatprep.subr.mxu0 0.0
  %380 = vmatpush1.msra.mxu0 0.0
  %381 = vmatprep.subr.mxu0 0.0
  %382 = vmatpush1.msra.mxu0 0.0
  %383 = vmatprep.subr.mxu0 0.0
  %384 = vmatpush1.msra.mxu0 0.0
  %385 = vmatprep.subr.mxu0 0.0
  %386 = vmatpush1.msra.mxu0 0.0
  %387 = vmatprep.subr.mxu0 0.0
  %388 = vmatpush1.msra.mxu0 0.0
  %389 = vmatprep.subr.mxu0 0.0
  %390 = vmatpush1.msra.mxu0 0.0
  %391 = vmatprep.subr.mxu0 0.0
  %392 = vmatpush1.msra.mxu0 0.0
  %393 = vmatprep.subr.mxu0 0.0
  %394 = vmatpush1.msra.mxu0 0.0
  %395 = vmatprep.subr.mxu0 0.0
  %396 = vmatpush1.msra.mxu0 0.0
  %397 = vmatprep.subr.mxu0 0.0
  %398 = vmatpush1.msra.mxu0 0.0
  %399 = vmatprep.subr.mxu0 0.0
  %400 = vmatpush1.msra.mxu0 0.0
  %401 = vmatprep.subr.mxu0 0.0
  %402 = vmatpush1.msra.mxu0 0.0
  %403 = vmatprep.subr.mxu0 0.0
  %404 = vmatpush1.msra.mxu0 0.0
  %405 = vmatprep.subr.mxu0 0.0
  %406 = vmatpush1.msra.mxu0 0.0
  %407 = vmatprep.subr.mxu0 0.0
  %408 = vmatpush1.msra.mxu0 0.0
  %409 = vmatprep.subr.mxu0 0.0
  %410 = vmatpush1.msra.mxu0 0.0
  %411 = vmatprep.subr.mxu0 0.0
  %412 = vmatpush1.msra.mxu0 0.0
  %413 = vmatprep.subr.mxu0 0.0
  %414 = vmatpush1.msra.mxu0 0.0
  %415 = vmatprep.mubr.f32.mxu0 0.0
  %416 = vmatmul.mubr.f32.gmra.mrb[0].mxu0 %v349
  %v417 = vpop.f32.mrb[0].mxu0
  %v418 = vadd.f32 0.0, %v417
  %v419 = vpop.f32.mrb[0].mxu0
  %420 = vdwg.mxu0
  %v422 = vsel %vm347, %v330, 0
  %424 = vmatprep.subr.mxu0 0.0
  %425 = vmatpush1.msra.mxu0 %v23
  %426 = vmatprep.subr.mxu0 0.0
  %427 = vmatpush1.msra.mxu0 0.0
  %428 = vmatprep.subr.mxu0 0.0
  %429 = vmatpush1.msra.mxu0 0.0
  %430 = vmatprep.subr.mxu0 0.0
  %431 = vmatpush1.msra.mxu0 0.0
  %432 = vmatprep.subr.mxu0 0.0
  %433 = vmatpush1.msra.mxu0 0.0
  %434 = vmatprep.subr.mxu0 0.0
  %435 = vmatpush1.msra.mxu0 0.0
  %436 = vmatprep.subr.mxu0 0.0
  %437 = vmatpush1.msra.mxu0 0.0
  %438 = vmatprep.subr.mxu0 0.0
  %439 = vmatpush1.msra.mxu0 0.0
  %440 = vmatprep.subr.mxu0 0.0
  %441 = vmatpush1.msra.mxu0 0.0
  %442 = vmatprep.subr.mxu0 0.0
  %443 = vmatpush1.msra.mxu0 0.0
  %444 = vmatprep.subr.mxu0 0.0
  %445 = vmatpush1.msra.mxu0 0.0
  %446 = vmatprep.subr.mxu0 0.0
  %447 = vmatpush1.msra.mxu0 0.0
  %448 = vmatprep.subr.mxu0 0.0
  %449 = vmatpush1.msra.mxu0 0.0
  %450 = vmatprep.subr.mxu0 0.0
  %451 = vmatpush1.msra.mxu0 0.0
  %452 = vmatprep.subr.mxu0 0.0
  %453 = vmatpush1.msra.mxu0 0.0
  %454 = vmatprep.subr.mxu0 0.0
  %455 = vmatpush1.msra.mxu0 0.0
  %456 = vmatprep.subr.mxu0 0.0
  %457 = vmatpush1.msra.mxu0 0.0
  %458 = vmatprep.subr.mxu0 0.0
  %459 = vmatpush1.msra.mxu0 0.0
  %460 = vmatprep.subr.mxu0 0.0
  %461 = vmatpush1.msra.mxu0 0.0
  %462 = vmatprep.subr.mxu0 0.0
  %463 = vmatpush1.msra.mxu0 0.0
  %464 = vmatprep.subr.mxu0 0.0
  %465 = vmatpush1.msra.mxu0 0.0
  %466 = vmatprep.subr.mxu0 0.0
  %467 = vmatpush1.msra.mxu0 0.0
  %468 = vmatprep.subr.mxu0 0.0
  %469 = vmatpush1.msra.mxu0 0.0
  %470 = vmatprep.subr.mxu0 0.0
  %471 = vmatpush1.msra.mxu0 0.0
  %472 = vmatprep.subr.mxu0 0.0
  %473 = vmatpush1.msra.mxu0 0.0
  %474 = vmatprep.subr.mxu0 0.0
  %475 = vmatpush1.msra.mxu0 0.0
  %476 = vmatprep.subr.mxu0 0.0
  %477 = vmatpush1.msra.mxu0 0.0
  %478 = vmatprep.subr.mxu0 0.0
  %479 = vmatpush1.msra.mxu0 0.0
  %480 = vmatprep.subr.mxu0 0.0
  %481 = vmatpush1.msra.mxu0 0.0
  %482 = vmatprep.subr.mxu0 0.0
  %483 = vmatpush1.msra.mxu0 0.0
  %484 = vmatprep.subr.mxu0 0.0
  %485 = vmatpush1.msra.mxu0 0.0
  %486 = vmatprep.subr.mxu0 0.0
  %487 = vmatpush1.msra.mxu0 0.0
  %488 = vmatprep.mubr.f32.mxu0 0.0
  %489 = vmatmul.mubr.f32.gmra.mrb[0].mxu0 %v422
  %v490 = vpop.f32.mrb[0].mxu0
  %v491 = vadd.f32 0.0, %v490
  %v492 = vpop.f32.mrb[0].mxu0
  %493 = vdwg.mxu0
  %v495 = vsel %vm347, %v332, 0
  %497 = vmatprep.subr.mxu0 0.0
  %498 = vmatpush1.msra.mxu0 %v24
  %499 = vmatprep.subr.mxu0 0.0
  %500 = vmatpush1.msra.mxu0 0.0
  %501 = vmatprep.subr.mxu0 0.0
  %502 = vmatpush1.msra.mxu0 0.0
  %503 = vmatprep.subr.mxu0 0.0
  %504 = vmatpush1.msra.mxu0 0.0
  %505 = vmatprep.subr.mxu0 0.0
  %506 = vmatpush1.msra.mxu0 0.0
  %507 = vmatprep.subr.mxu0 0.0
  %508 = vmatpush1.msra.mxu0 0.0
  %509 = vmatprep.subr.mxu0 0.0
  %510 = vmatpush1.msra.mxu0 0.0
  %511 = vmatprep.subr.mxu0 0.0
  %512 = vmatpush1.msra.mxu0 0.0
  %513 = vmatprep.subr.mxu0 0.0
  %514 = vmatpush1.msra.mxu0 0.0
  %515 = vmatprep.subr.mxu0 0.0
  %516 = vmatpush1.msra.mxu0 0.0
  %517 = vmatprep.subr.mxu0 0.0
  %518 = vmatpush1.msra.mxu0 0.0
  %519 = vmatprep.subr.mxu0 0.0
  %520 = vmatpush1.msra.mxu0 0.0
  %521 = vmatprep.subr.mxu0 0.0
  %522 = vmatpush1.msra.mxu0 0.0
  %523 = vmatprep.subr.mxu0 0.0
  %524 = vmatpush1.msra.mxu0 0.0
  %525 = vmatprep.subr.mxu0 0.0
  %526 = vmatpush1.msra.mxu0 0.0
  %527 = vmatprep.subr.mxu0 0.0
  %528 = vmatpush1.msra.mxu0 0.0
  %529 = vmatprep.subr.mxu0 0.0
  %530 = vmatpush1.msra.mxu0 0.0
  %531 = vmatprep.subr.mxu0 0.0
  %532 = vmatpush1.msra.mxu0 0.0
  %533 = vmatprep.subr.mxu0 0.0
  %534 = vmatpush1.msra.mxu0 0.0
  %535 = vmatprep.subr.mxu0 0.0
  %536 = vmatpush1.msra.mxu0 0.0
  %537 = vmatprep.subr.mxu0 0.0
  %538 = vmatpush1.msra.mxu0 0.0
  %539 = vmatprep.subr.mxu0 0.0
  %540 = vmatpush1.msra.mxu0 0.0
  %541 = vmatprep.subr.mxu0 0.0
  %542 = vmatpush1.msra.mxu0 0.0
  %543 = vmatprep.subr.mxu0 0.0
  %544 = vmatpush1.msra.mxu0 0.0
  %545 = vmatprep.subr.mxu0 0.0
  %546 = vmatpush1.msra.mxu0 0.0
  %547 = vmatprep.subr.mxu0 0.0
  %548 = vmatpush1.msra.mxu0 0.0
  %549 = vmatprep.subr.mxu0 0.0
  %550 = vmatpush1.msra.mxu0 0.0
  %551 = vmatprep.subr.mxu0 0.0
  %552 = vmatpush1.msra.mxu0 0.0
  %553 = vmatprep.subr.mxu0 0.0
  %554 = vmatpush1.msra.mxu0 0.0
  %555 = vmatprep.subr.mxu0 0.0
  %556 = vmatpush1.msra.mxu0 0.0
  %557 = vmatprep.subr.mxu0 0.0
  %558 = vmatpush1.msra.mxu0 0.0
  %559 = vmatprep.subr.mxu0 0.0
  %560 = vmatpush1.msra.mxu0 0.0
  %561 = vmatprep.mubr.f32.mxu0 0.0
  %562 = vmatmul.mubr.f32.gmra.mrb[0].mxu0 %v495
  %v563 = vpop.f32.mrb[0].mxu0
  %v564 = vadd.f32 0.0, %v563
  %v565 = vpop.f32.mrb[0].mxu0
  %566 = vdwg.mxu0
  %v568 = vsel %vm347, %v334, 0
  %570 = vmatprep.subr.mxu0 0.0
  %571 = vmatpush1.msra.mxu0 %v25
  %572 = vmatprep.subr.mxu0 0.0
  %573 = vmatpush1.msra.mxu0 0.0
  %574 = vmatprep.subr.mxu0 0.0
  %575 = vmatpush1.msra.mxu0 0.0
  %576 = vmatprep.subr.mxu0 0.0
  %577 = vmatpush1.msra.mxu0 0.0
  %578 = vmatprep.subr.mxu0 0.0
  %579 = vmatpush1.msra.mxu0 0.0
  %580 = vmatprep.subr.mxu0 0.0
  %581 = vmatpush1.msra.mxu0 0.0
  %582 = vmatprep.subr.mxu0 0.0
  %583 = vmatpush1.msra.mxu0 0.0
  %584 = vmatprep.subr.mxu0 0.0
  %585 = vmatpush1.msra.mxu0 0.0
  %586 = vmatprep.subr.mxu0 0.0
  %587 = vmatpush1.msra.mxu0 0.0
  %588 = vmatprep.subr.mxu0 0.0
  %589 = vmatpush1.msra.mxu0 0.0
  %590 = vmatprep.subr.mxu0 0.0
  %591 = vmatpush1.msra.mxu0 0.0
  %592 = vmatprep.subr.mxu0 0.0
  %593 = vmatpush1.msra.mxu0 0.0
  %594 = vmatprep.subr.mxu0 0.0
  %595 = vmatpush1.msra.mxu0 0.0
  %596 = vmatprep.subr.mxu0 0.0
  %597 = vmatpush1.msra.mxu0 0.0
  %598 = vmatprep.subr.mxu0 0.0
  %599 = vmatpush1.msra.mxu0 0.0
  %600 = vmatprep.subr.mxu0 0.0
  %601 = vmatpush1.msra.mxu0 0.0
  %602 = vmatprep.subr.mxu0 0.0
  %603 = vmatpush1.msra.mxu0 0.0
  %604 = vmatprep.subr.mxu0 0.0
  %605 = vmatpush1.msra.mxu0 0.0
  %606 = vmatprep.subr.mxu0 0.0
  %607 = vmatpush1.msra.mxu0 0.0
  %608 = vmatprep.subr.mxu0 0.0
  %609 = vmatpush1.msra.mxu0 0.0
  %610 = vmatprep.subr.mxu0 0.0
  %611 = vmatpush1.msra.mxu0 0.0
  %612 = vmatprep.subr.mxu0 0.0
  %613 = vmatpush1.msra.mxu0 0.0
  %614 = vmatprep.subr.mxu0 0.0
  %615 = vmatpush1.msra.mxu0 0.0
  %616 = vmatprep.subr.mxu0 0.0
  %617 = vmatpush1.msra.mxu0 0.0
  %618 = vmatprep.subr.mxu0 0.0
  %619 = vmatpush1.msra.mxu0 0.0
  %620 = vmatprep.subr.mxu0 0.0
  %621 = vmatpush1.msra.mxu0 0.0
  %622 = vmatprep.subr.mxu0 0.0
  %623 = vmatpush1.msra.mxu0 0.0
  %624 = vmatprep.subr.mxu0 0.0
  %625 = vmatpush1.msra.mxu0 0.0
  %626 = vmatprep.subr.mxu0 0.0
  %627 = vmatpush1.msra.mxu0 0.0
  %628 = vmatprep.subr.mxu0 0.0
  %629 = vmatpush1.msra.mxu0 0.0
  %630 = vmatprep.subr.mxu0 0.0
  %631 = vmatpush1.msra.mxu0 0.0
  %632 = vmatprep.subr.mxu0 0.0
  %633 = vmatpush1.msra.mxu0 0.0
  %634 = vmatprep.mubr.f32.mxu0 0.0
  %635 = vmatmul.mubr.f32.gmra.mrb[0].mxu0 %v568
  %v636 = vpop.f32.mrb[0].mxu0
  %v637 = vadd.f32 0.0, %v636
  %v638 = vpop.f32.mrb[0].mxu0
  %639 = vdwg.mxu0
  %v640 = vrcp.pop %v337
  %v641 = vrcp.pop %v340
  %v642 = vrcp.pop %v343
  %v643 = vrcp.pop %v346
  %v644 = vmul.f32 %v418, %v640
  %v645 = vmul.f32 %v491, %v641
  %v646 = vmul.f32 %v564, %v642
  %v647 = vmul.f32 %v637, %v643
  %648 = vst [vmem:[%s3] sm:$0x7f] %v644
  %649 = vst [vmem:[%s3 + $0x8] sm:$0x7f] %v645
  %650 = vst [vmem:[%s3 + $0x10] sm:$0x7f] %v646
  %651 = vst [vmem:[%s3 + $0x18] sm:$0x7f] %v647
  // Predicated region
  $region14: #{translation_transformer_forward.47} parent=0 // pred_check
    _
  $region15: #{translation_transformer_forward.47} parent=0 // pred_check_branch
    %653 = sbr.rel (0) target = $region17
  $region16: #{translation_transformer_forward.47} parent=0 // pred_region
    _
  $region17: #{translation_transformer_forward.47} parent=0 // pred_fallthru
    _
  // Predicated region
  $region18: #{translation_transformer_forward.47} parent=0 // pred_check
    _
  $region19: #{translation_transformer_forward.47} parent=0 // pred_check_branch
    %655 = sbr.rel (0) target = $region21
  $region20: #{translation_transformer_forward.47} parent=0 // pred_region
    _
  $region21: #{translation_transformer_forward.47} parent=0 // pred_fallthru
    _

</llo_original>
